<compile_context>
chip_gen: v6e
topology: v6e:2x2x1
jax: 0.10.0
libtpu: 0.0.40
codegen_flags: <defaults>
</compile_context>

<pallas_src>
import math
from functools import partial

import jax
import jax.numpy as jnp
from jax.experimental import pallas as pl
from jax.experimental.pallas import tpu as pltpu

_GELU_C = math.sqrt(2.0 / math.pi)
_VMEM_LIMIT = 48 * 1024 * 1024          # stay well under v7x's 64 MiB physical VMEM

_ROW_PREFS = (512, 256, 128, 64, 32, 16, 8)
_ROW_PREFS_BIG = (1024, 512, 256, 128, 64, 32, 16, 8)   # lm_head: fewer wte re-streams
_COL_PREFS = (512, 256, 128)            # 256-wide-MXU friendly (v6e/v7x)


# ----------------------------- helpers -----------------------------

def _tile(dim, prefs, cap=None):
    """Largest preferred tile that divides `dim` and is <= cap.  The full-dim
    fallback only fires for small dims (big dims — vocab — are padded)."""
    cap = dim if cap is None else max(8, min(cap, dim))
    for p in prefs:
        if p <= cap and dim % p == 0:
            return p
    for p in range(cap, 7, -1):          # any multiple-of-8 divisor
        if dim % p == 0 and p % 8 == 0:
            return p
    return dim


def _row_tile(M, prefs=_ROW_PREFS):
    # >= 2 grid steps so both of v7x's TensorCores get work and the DMA
    # pipeline has depth.
    return _tile(M, prefs, cap=max(8, M // 2))


def _layernorm_f32(x, g, b):
    mu = jnp.mean(x, axis=-1, keepdims=True)
    var = jnp.mean(jnp.square(x - mu), axis=-1, keepdims=True)
    return (x - mu) * jax.lax.rsqrt(var + 1e-5) * g + b


# ----------------------------- Pallas kernels -----------------------------

def _ln_linear_kernel(x_ref, g_ref, b_ref, w_ref, bias_ref, o_ref):
    """out = LayerNorm(x) @ W + bias  (LN in f32, matmul bf16 -> f32 acc)."""
    x = x_ref[...].astype(jnp.float32)
    h = _layernorm_f32(x, g_ref[...], b_ref[...])
    acc = jnp.dot(h.astype(jnp.bfloat16), w_ref[...],
                  preferred_element_type=jnp.float32)
    o_ref[...] = (acc + bias_ref[...]).astype(o_ref.dtype)


def _linear_res_kernel(x_ref, w_ref, bias_ref, res_ref, o_ref):
    """out = x @ W + bias + residual   (bf16 operands, f32 accumulation)."""
    acc = jnp.dot(x_ref[...].astype(jnp.bfloat16), w_ref[...],
                  preferred_element_type=jnp.float32)
    o_ref[...] = (acc + bias_ref[...] + res_ref[...].astype(jnp.float32)
                  ).astype(o_ref.dtype)


def _ln_mlp_kernel(x_ref, g_ref, b_ref, w1_ref, b1_ref, w2_ref, b2_ref,
                   o_ref, hn_ref, acc_ref):
    """out = x + GELU_tanh(LN(x) @ W1 + b1) @ W2 + b2, with the hidden dim H
    tiled on a reduction grid axis and accumulated in f32 VMEM scratch."""
    k = pl.program_id(1)

    @pl.when(k == 0)
    def _():
        x = x_ref[...].astype(jnp.float32)
        hn_ref[...] = _layernorm_f32(x, g_ref[...], b_ref[...]).astype(jnp.bfloat16)
        acc_ref[...] = jnp.zeros(acc_ref.shape, jnp.float32)

    h = jnp.dot(hn_ref[...], w1_ref[...],
                preferred_element_type=jnp.float32) + b1_ref[...]
    h = 0.5 * h * (1.0 + jnp.tanh(_GELU_C * (h + 0.044715 * h * h * h)))
    acc_ref[...] += jnp.dot(h.astype(jnp.bfloat16), w2_ref[...],
                            preferred_element_type=jnp.float32)

    @pl.when(k == pl.num_programs(1) - 1)
    def _():
        o_ref[...] = (x_ref[...].astype(jnp.float32) + acc_ref[...]
                      + b2_ref[...]).astype(o_ref.dtype)


def _flash_attn_kernel(q_ref, k_ref, v_ref, o_ref, m_ref, l_ref, acc_ref, *, scale):
    """Causal flash attention for one (batch, head) over KV tiles with
    online-softmax m/l/acc scratch; q/k/v tiles are bf16, math is f32."""
    kv = pl.program_id(2)

    @pl.when(kv == 0)
    def _():
        m_ref[...] = jnp.full(m_ref.shape, -jnp.inf, jnp.float32)
        l_ref[...] = jnp.zeros(l_ref.shape, jnp.float32)
        acc_ref[...] = jnp.zeros(acc_ref.shape, jnp.float32)

    q = q_ref[0, 0]                                 # (T, hd)  bf16
    k = k_ref[0, 0]                                 # (tkv, hd) bf16
    v = v_ref[0, 0]                                 # (tkv, hd) bf16
    T, tkv = q.shape[0], k.shape[0]

    # contract last dims directly: no explicit k transpose (no XLU pass)
    s = jax.lax.dot_general(q, k, (((1,), (1,)), ((), ())),
                            preferred_element_type=jnp.float32) * scale
    row = jax.lax.broadcasted_iota(jnp.int32, (T, tkv), 0)
    col = jax.lax.broadcasted_iota(jnp.int32, (T, tkv), 1) + kv * tkv
    s = jnp.where(col <= row, s, -1e30)

    m_prev = m_ref[...]
    m_new = jnp.maximum(m_prev, jnp.max(s, axis=-1, keepdims=True))
    alpha = jnp.exp(m_prev - m_new)
    p = jnp.exp(s - m_new)
    l_ref[...] = alpha * l_ref[...] + jnp.sum(p, axis=-1, keepdims=True)
    acc_ref[...] = alpha * acc_ref[...] + jnp.dot(
        p.astype(jnp.bfloat16), v, preferred_element_type=jnp.float32)
    m_ref[...] = m_new

    @pl.when(kv == pl.num_programs(2) - 1)
    def _():
        inv = pl.reciprocal(l_ref[...], approx=True)     # EUP reciprocal
        o_ref[0, 0] = (acc_ref[...] * inv).astype(o_ref.dtype)


def _ln_lm_head_kernel(x_ref, g_ref, b_ref, w_ref, o_ref):
    """logits = LayerNorm(x) @ wte_t  (wte pre-transposed to (E, V_pad), so
    this is a plain non-transposed MXU matmul with no bias)."""
    x = x_ref[...].astype(jnp.float32)
    h = _layernorm_f32(x, g_ref[...], b_ref[...])
    o_ref[...] = jnp.dot(h.astype(jnp.bfloat16), w_ref[...],
                         preferred_element_type=jnp.float32).astype(o_ref.dtype)


# ----------------------------- wrappers -----------------------------

def ln_linear(x2d, gamma, beta, w_bf16, bias, out_dtype=jnp.float32):
    M, E = x2d.shape
    N = w_bf16.shape[1]
    tm = _row_tile(M)
    # Constant weight block index => weight is DMA'd from HBM exactly once and
    # stays VMEM-resident for the whole grid.
    # TODO(synk): add an N-streaming variant if E*N bf16 ever outgrows VMEM.
    return pl.pallas_call(
        _ln_linear_kernel,
        out_shape=jax.ShapeDtypeStruct((M, N), out_dtype),
        grid=(M // tm,),
        in_specs=[pl.BlockSpec((tm, E), lambda i: (i, 0)),
                  pl.BlockSpec((1, E), lambda i: (0, 0)),
                  pl.BlockSpec((1, E), lambda i: (0, 0)),
                  pl.BlockSpec((E, N), lambda i: (0, 0)),
                  pl.BlockSpec((1, N), lambda i: (0, 0))],
        out_specs=pl.BlockSpec((tm, N), lambda i: (i, 0)),
        compiler_params=pltpu.CompilerParams(
            dimension_semantics=("parallel",),
            vmem_limit_bytes=_VMEM_LIMIT),
    )(x2d, gamma, beta, w_bf16, bias)


def linear_residual(x2d, w_bf16, bias, res2d):
    M, K = x2d.shape
    N = w_bf16.shape[1]
    tm = _row_tile(M)
    return pl.pallas_call(
        _linear_res_kernel,
        out_shape=jax.ShapeDtypeStruct((M, N), jnp.float32),
        grid=(M // tm,),
        in_specs=[pl.BlockSpec((tm, K), lambda i: (i, 0)),
                  pl.BlockSpec((K, N), lambda i: (0, 0)),
                  pl.BlockSpec((1, N), lambda i: (0, 0)),
                  pl.BlockSpec((tm, N), lambda i: (i, 0))],
        out_specs=pl.BlockSpec((tm, N), lambda i: (i, 0)),
        compiler_params=pltpu.CompilerParams(
            dimension_semantics=("parallel",),
            vmem_limit_bytes=_VMEM_LIMIT),
    )(x2d, w_bf16, bias, res2d)


def ln_mlp_residual(x2d, gamma, beta, w1_bf16, b1, w2_bf16, b2):
    M, E = x2d.shape
    H = w1_bf16.shape[1]
    tm = _row_tile(M)
    th = _tile(H, _COL_PREFS, cap=max(128, H // 2))     # >= 2 reduction steps
    return pl.pallas_call(
        _ln_mlp_kernel,
        out_shape=jax.ShapeDtypeStruct((M, E), jnp.float32),
        grid=(M // tm, H // th),
        in_specs=[pl.BlockSpec((tm, E), lambda i, k: (i, 0)),
                  pl.BlockSpec((1, E), lambda i, k: (0, 0)),
                  pl.BlockSpec((1, E), lambda i, k: (0, 0)),
                  pl.BlockSpec((E, th), lambda i, k: (0, k)),
                  pl.BlockSpec((1, th), lambda i, k: (0, k)),
                  pl.BlockSpec((th, E), lambda i, k: (k, 0)),
                  pl.BlockSpec((1, E), lambda i, k: (0, 0))],
        out_specs=pl.BlockSpec((tm, E), lambda i, k: (i, 0)),
        scratch_shapes=[pltpu.VMEM((tm, E), jnp.bfloat16),     # LN(x) cache
                        pltpu.VMEM((tm, E), jnp.float32)],     # f32 accumulator
        compiler_params=pltpu.CompilerParams(
            dimension_semantics=("parallel", "arbitrary"),
            vmem_limit_bytes=_VMEM_LIMIT),
    )(x2d, gamma, beta, w1_bf16, b1, w2_bf16, b2)


def flash_attention(q, k, v):
    """q, k, v: (B, n_head, T, hd) bf16 -> (B, n_head, T, hd) bf16."""
    B, nh, T, hd = q.shape
    scale = 1.0 / math.sqrt(hd)
    tkv = _tile(T, _ROW_PREFS, cap=max(8, T // 2))
    kern = partial(_flash_attn_kernel, scale=scale)
    # TODO(synk): also tile the query axis for very long sequences (T >> 1024).
    return pl.pallas_call(
        kern,
        out_shape=jax.ShapeDtypeStruct((B, nh, T, hd), jnp.bfloat16),
        grid=(B, nh, T // tkv),
        in_specs=[pl.BlockSpec((1, 1, T, hd), lambda b, h, kv: (b, h, 0, 0)),
                  pl.BlockSpec((1, 1, tkv, hd), lambda b, h, kv: (b, h, kv, 0)),
                  pl.BlockSpec((1, 1, tkv, hd), lambda b, h, kv: (b, h, kv, 0))],
        out_specs=pl.BlockSpec((1, 1, T, hd), lambda b, h, kv: (b, h, 0, 0)),
        scratch_shapes=[pltpu.VMEM((T, 1), jnp.float32),       # running max
                        pltpu.VMEM((T, 1), jnp.float32),       # running sum
                        pltpu.VMEM((T, hd), jnp.float32)],     # running output
        compiler_params=pltpu.CompilerParams(
            dimension_semantics=("parallel", "parallel", "arbitrary"),
            vmem_limit_bytes=_VMEM_LIMIT),
    )(q, k, v)


def final_ln_lm_head(x2d, gamma, beta, wte_t_bf16):
    M, E = x2d.shape
    Vp = wte_t_bf16.shape[1]                 # already padded to a multiple of 128
    tm = _row_tile(M, _ROW_PREFS_BIG)        # big row tiles -> fewer wte re-streams
    tn = _tile(Vp, _COL_PREFS)
    return pl.pallas_call(
        _ln_lm_head_kernel,
        out_shape=jax.ShapeDtypeStruct((M, Vp), jnp.float32),
        grid=(M // tm, Vp // tn),
        in_specs=[pl.BlockSpec((tm, E), lambda i, j: (i, 0)),
                  pl.BlockSpec((1, E), lambda i, j: (0, 0)),
                  pl.BlockSpec((1, E), lambda i, j: (0, 0)),
                  pl.BlockSpec((E, tn), lambda i, j: (0, j))],
        out_specs=pl.BlockSpec((tm, tn), lambda i, j: (i, j)),
        compiler_params=pltpu.CompilerParams(
            dimension_semantics=("parallel", "parallel"),
            vmem_limit_bytes=_VMEM_LIMIT),
    )(x2d, gamma, beta, wte_t_bf16)


# ----------------------------- param prep & forward -----------------------------

def prepare_params(params):
    """One-time prep (outside jit): bf16 weight casts, (1,N) bias/LN reshapes,
    and a lane-padded, pre-transposed (E, V_pad) bf16 copy of wte for lm_head."""
    V, E = params["wte"].shape
    V_pad = ((V + 127) // 128) * 128
    wte_t = params["wte"].T.astype(jnp.bfloat16)
    if V_pad != V:
        wte_t = jnp.pad(wte_t, ((0, 0), (0, V_pad - V)))

    def prep_block(blk):
        return {
            "ln1_g": blk["ln1_g"].reshape(1, E),
            "ln1_b": blk["ln1_b"].reshape(1, E),
            "w_attn": blk["w_attn"].astype(jnp.bfloat16),
            "b_attn": blk["b_attn"].reshape(1, -1),
            "w_proj": blk["w_proj"].astype(jnp.bfloat16),
            "b_proj": blk["b_proj"].reshape(1, -1),
            "ln2_g": blk["ln2_g"].reshape(1, E),
            "ln2_b": blk["ln2_b"].reshape(1, E),
            "w_fc": blk["w_fc"].astype(jnp.bfloat16),
            "b_fc": blk["b_fc"].reshape(1, -1),
            "w_fc_proj": blk["w_fc_proj"].astype(jnp.bfloat16),
            "b_fc_proj": blk["b_fc_proj"].reshape(1, -1),
        }

    return {
        "wte": params["wte"],                        # f32, for the embedding gather
        "wpe": params["wpe"],
        "lnf_g": params["lnf_g"].reshape(1, E),
        "lnf_b": params["lnf_b"].reshape(1, E),
        "wte_t": wte_t,
        "blocks": [prep_block(b) for b in params["blocks"]],
    }


def gpt_forward(idx, p, cfg):
    B, T = idx.shape
    E, nh, V = cfg["n_embd"], cfg["n_head"], cfg["vocab_size"]
    hd = E // nh

    # Embedding gathers / head split-merge transposes are plain XLA glue.
    tok_emb = jnp.take(p["wte"], idx, axis=0)                 # (B, T, E)
    pos_emb = p["wpe"][:T]
    x = (tok_emb + pos_emb[None]).reshape(B * T, E).astype(jnp.float32)
    # TODO(synk): consider carrying the residual stream in bf16 between kernels
    # (halves residual HBM traffic); kept f32 here for tight numerics.

    for blk in p["blocks"]:
        # ---- attention sub-block: LN1+QKV | flash attention | proj+residual ----
        qkv = ln_linear(x, blk["ln1_g"], blk["ln1_b"],
                        blk["w_attn"], blk["b_attn"],
                        out_dtype=jnp.bfloat16)               # (B*T, 3E) bf16
        qkv = qkv.reshape(B, T, 3, nh, hd)
        q = jnp.transpose(qkv[:, :, 0], (0, 2, 1, 3))         # (B, nh, T, hd)
        k = jnp.transpose(qkv[:, :, 1], (0, 2, 1, 3))
        v = jnp.transpose(qkv[:, :, 2], (0, 2, 1, 3))
        y = flash_attention(q, k, v)                          # (B, nh, T, hd) bf16
        y = jnp.transpose(y, (0, 2, 1, 3)).reshape(B * T, E)
        x = linear_residual(y, blk["w_proj"], blk["b_proj"], x)

        # ---- MLP sub-block: LN2 + fc + GELU + proj + residual (H tiled) ----
        x = ln_mlp_residual(x, blk["ln2_g"], blk["ln2_b"],
                            blk["w_fc"], blk["b_fc"],
                            blk["w_fc_proj"], blk["b_fc_proj"])

    # final LN + tied lm_head against the pre-transposed, padded wte
    logits = final_ln_lm_head(x, p["lnf_g"], p["lnf_b"], p["wte_t"])  # (B*T, V_pad)
    return logits[:, :V].reshape(B, T, V)


# ----------------------------- pure-JAX reference -----------------------------

def _ref_ln(x, g, b):
    mu = jnp.mean(x, axis=-1, keepdims=True)
    var = jnp.mean(jnp.square(x - mu), axis=-1, keepdims=True)
    return (x - mu) * jax.lax.rsqrt(var + 1e-5) * g + b


def _ref_gelu(x):
    return 0.5 * x * (1.0 + jnp.tanh(_GELU_C * (x + 0.044715 * x ** 3)))


def ref_forward(idx, params, cfg):
    B, T = idx.shape
    E, nh = cfg["n_embd"], cfg["n_head"]
    hd = E // nh
    x = (jnp.take(params["wte"], idx, axis=0)
         + jnp.take(params["wpe"], jnp.arange(T), axis=0)[None])
    for blk in params["blocks"]:
        h = _ref_ln(x, blk["ln1_g"], blk["ln1_b"])
        qkv = h @ blk["w_attn"] + blk["b_attn"]
        q, k, v = jnp.split(qkv, 3, axis=-1)
        q = q.reshape(B, T, nh, hd).transpose(0, 2, 1, 3)
        k = k.reshape(B, T, nh, hd).transpose(0, 2, 1, 3)
        v = v.reshape(B, T, nh, hd).transpose(0, 2, 1, 3)
        s = jnp.einsum("bhqd,bhkd->bhqk", q, k) / math.sqrt(hd)
        mask = jnp.tril(jnp.ones((T, T), bool))
        s = jnp.where(mask, s, -1e30)
        p = jax.nn.softmax(s, axis=-1)
        y = jnp.einsum("bhqk,bhkd->bhqd", p, v).transpose(0, 2, 1, 3).reshape(B, T, E)
        x = x + (y @ blk["w_proj"] + blk["b_proj"])
        h = _ref_ln(x, blk["ln2_g"], blk["ln2_b"])
        hh = _ref_gelu(h @ blk["w_fc"] + blk["b_fc"])
        x = x + (hh @ blk["w_fc_proj"] + blk["b_fc_proj"])
    x = _ref_ln(x, params["lnf_g"], params["lnf_b"])
    return x @ params["wte"].T


# ----------------------------- param init -----------------------------

def init_params(key, cfg):
    E, V, L, BS = cfg["n_embd"], cfg["vocab_size"], cfg["n_layer"], cfg["block_size"]
    std = 0.02
    proj_std = 0.02 * (2 * L) ** -0.5
    keys = iter(jax.random.split(key, 4 + 8 * L))

    params = {
        "wte": std * jax.random.normal(next(keys), (V, E), jnp.float32),
        "wpe": std * jax.random.normal(next(keys), (BS, E), jnp.float32),
        "lnf_g": jnp.ones((E,), jnp.float32),
        "lnf_b": jnp.zeros((E,), jnp.float32),
        "blocks": [],
    }
    for _ in range(L):
        blk = {
            "ln1_g": jnp.ones((E,), jnp.float32),
            "ln1_b": jnp.zeros((E,), jnp.float32),
            "w_attn": std * jax.random.normal(next(keys), (E, 3 * E), jnp.float32),
            "b_attn": jnp.zeros((3 * E,), jnp.float32),
            "w_proj": proj_std * jax.random.normal(next(keys), (E, E), jnp.float32),
            "b_proj": jnp.zeros((E,), jnp.float32),
            "ln2_g": jnp.ones((E,), jnp.float32),
            "ln2_b": jnp.zeros((E,), jnp.float32),
            "w_fc": std * jax.random.normal(next(keys), (E, 4 * E), jnp.float32),
            "b_fc": jnp.zeros((4 * E,), jnp.float32),
            "w_fc_proj": proj_std * jax.random.normal(next(keys), (4 * E, E), jnp.float32),
            "b_fc_proj": jnp.zeros((E,), jnp.float32),
        }
        params["blocks"].append(blk)
    return params


# ----------------------------- main -----------------------------

if __name__ == "__main__":
    cfg = dict(block_size=64, vocab_size=384, n_layer=2, n_head=4, n_embd=128)
    B, T = 2, 64

    key = jax.random.PRNGKey(0)
    kp, ki = jax.random.split(key)
    params = init_params(kp, cfg)
    prepped = prepare_params(params)           # one-time bf16 casts / transposes
    idx = jax.random.randint(ki, (B, T), 0, cfg["vocab_size"], dtype=jnp.int32)

    forward = jax.jit(lambda i, p: gpt_forward(i, p, cfg))
    logits = jax.block_until_ready(forward(idx, prepped))
    assert logits.shape == (B, T, cfg["vocab_size"])

    ref = jax.block_until_ready(ref_forward(idx, params, cfg))
    max_err = float(jnp.max(jnp.abs(logits - ref)))
    # bf16 matmul operands (f32 accumulation) + online softmax -> loose tolerance
    assert max_err < 4e-2, f"mismatch vs f32 reference: {max_err}"

    print("KERNEL_OK")
</pallas_src>

<mosaic_0001>
module attributes {stable_mosaic.version = 11 : i64} {
  func.func @_ln_linear_kernel(%arg0: i32, %arg1: memref<64x128xf32, #tpu.memory_space<vmem>>, %arg2: memref<1x128xf32, #tpu.memory_space<vmem>>, %arg3: memref<1x128xf32, #tpu.memory_space<vmem>>, %arg4: memref<128x384xbf16, #tpu.memory_space<vmem>>, %arg5: memref<1x384xf32, #tpu.memory_space<vmem>>, %arg6: memref<64x384xbf16, #tpu.memory_space<vmem>>) attributes {dimension_semantics = [#tpu.dimension_semantics<parallel>], iteration_bounds = array<i64: 2>, scalar_prefetch = 0 : i64, scratch_operands = 0 : i64, tpu.core_type = #tpu.core_type<tc>, window_params = [{transform_indices = @transform_0, window_bounds = array<i64: 64, 128>}, {pipeline_mode = #tpu.pipeline_mode<synchronous>, transform_indices = @transform_1, window_bounds = array<i64: 1, 128>}, {pipeline_mode = #tpu.pipeline_mode<synchronous>, transform_indices = @transform_2, window_bounds = array<i64: 1, 128>}, {pipeline_mode = #tpu.pipeline_mode<synchronous>, transform_indices = @transform_3, window_bounds = array<i64: 128, 384>}, {pipeline_mode = #tpu.pipeline_mode<synchronous>, transform_indices = @transform_4, window_bounds = array<i64: 1, 384>}, {transform_indices = @transform_5, window_bounds = array<i64: 64, 384>}]} {
    %c0 = arith.constant 0 : index
    %c0_0 = arith.constant 0 : index
    %0 = vector.load %arg1[%c0, %c0_0] : memref<64x128xf32, #tpu.memory_space<vmem>>, vector<64x128xf32>
    %c0_1 = arith.constant 0 : index
    %c0_2 = arith.constant 0 : index
    %1 = vector.load %arg2[%c0_1, %c0_2] : memref<1x128xf32, #tpu.memory_space<vmem>>, vector<1x128xf32>
    %c0_3 = arith.constant 0 : index
    %c0_4 = arith.constant 0 : index
    %2 = vector.load %arg3[%c0_3, %c0_4] : memref<1x128xf32, #tpu.memory_space<vmem>>, vector<1x128xf32>
    %cst = arith.constant dense<0.000000e+00> : vector<64xf32>
    %3 = vector.multi_reduction <add>, %0, %cst [1] : vector<64x128xf32> to vector<64xf32>
    %4 = vector.shape_cast %3 : vector<64xf32> to vector<64x1xf32>
    %cst_5 = arith.constant 1.280000e+02 : f32
    %5 = vector.broadcast %cst_5 : f32 to vector<64x1xf32>
    %6 = arith.divf %4, %5 : vector<64x1xf32>
    %7 = vector.broadcast %6 : vector<64x1xf32> to vector<64x128xf32>
    %8 = arith.subf %0, %7 : vector<64x128xf32>
    %9 = arith.mulf %8, %8 : vector<64x128xf32>
    %cst_6 = arith.constant dense<0.000000e+00> : vector<64xf32>
    %10 = vector.multi_reduction <add>, %9, %cst_6 [1] : vector<64x128xf32> to vector<64xf32>
    %11 = vector.shape_cast %10 : vector<64xf32> to vector<64x1xf32>
    %cst_7 = arith.constant 1.280000e+02 : f32
    %12 = vector.broadcast %cst_7 : f32 to vector<64x1xf32>
    %13 = arith.divf %11, %12 : vector<64x1xf32>
    %14 = vector.broadcast %6 : vector<64x1xf32> to vector<64x128xf32>
    %15 = arith.subf %0, %14 : vector<64x128xf32>
    %cst_8 = arith.constant 9.99999974E-6 : f32
    %16 = vector.broadcast %cst_8 : f32 to vector<64x1xf32>
    %17 = arith.addf %13, %16 : vector<64x1xf32>
    %18 = math.rsqrt %17 : vector<64x1xf32>
    %19 = vector.broadcast %18 : vector<64x1xf32> to vector<64x128xf32>
    %20 = arith.mulf %15, %19 : vector<64x128xf32>
    %21 = vector.broadcast %1 : vector<1x128xf32> to vector<64x128xf32>
    %22 = arith.mulf %20, %21 : vector<64x128xf32>
    %23 = vector.broadcast %2 : vector<1x128xf32> to vector<64x128xf32>
    %24 = arith.addf %22, %23 : vector<64x128xf32>
    %25 = arith.truncf %24 : vector<64x128xf32> to vector<64x128xbf16>
    %c0_9 = arith.constant 0 : index
    %c0_10 = arith.constant 0 : index
    %26 = vector.load %arg4[%c0_9, %c0_10] : memref<128x384xbf16, #tpu.memory_space<vmem>>, vector<128x384xbf16>
    %cst_11 = arith.constant dense<0.000000e+00> : vector<64x384xf32>
    %27 = tpu.matmul %25, %26, %cst_11 {dimension_numbers = #tpu.dot_dimension_numbers<[1], [0], [0], [1], [0, 0, 1, 1], [], []>} : vector<64x128xbf16>, vector<128x384xbf16>, vector<64x384xf32> -> vector<64x384xf32>
    %c0_12 = arith.constant 0 : index
    %c0_13 = arith.constant 0 : index
    %28 = vector.load %arg5[%c0_12, %c0_13] : memref<1x384xf32, #tpu.memory_space<vmem>>, vector<1x384xf32>
    %29 = vector.broadcast %28 : vector<1x384xf32> to vector<64x384xf32>
    %30 = arith.addf %27, %29 : vector<64x384xf32>
    %31 = arith.truncf %30 : vector<64x384xf32> to vector<64x384xbf16>
    %c0_14 = arith.constant 0 : index
    %c0_15 = arith.constant 0 : index
    %32 = vector.load %arg6[%c0_14, %c0_15] : memref<64x384xbf16, #tpu.memory_space<vmem>>, vector<64x384xbf16>
    tpu.vector_store %arg6[%c0_14, %c0_15], %31 {strides = array<i32>} : memref<64x384xbf16, #tpu.memory_space<vmem>>, vector<64x384xbf16>,
    return
  }
  func.func @transform_0(%arg0: i32) -> (i32, i32) {
    %c0_i32 = arith.constant 0 : i32
    %c0_i32_0 = arith.constant 0 : i32
    return %arg0, %c0_i32 : i32, i32
  }
  func.func @transform_1(%arg0: i32) -> (i32, i32) {
    %c0_i32 = arith.constant 0 : i32
    %c0_i32_0 = arith.constant 0 : i32
    %c0_i32_1 = arith.constant 0 : i32
    return %c0_i32, %c0_i32_0 : i32, i32
  }
  func.func @transform_2(%arg0: i32) -> (i32, i32) {
    %c0_i32 = arith.constant 0 : i32
    %c0_i32_0 = arith.constant 0 : i32
    %c0_i32_1 = arith.constant 0 : i32
    return %c0_i32, %c0_i32_0 : i32, i32
  }
  func.func @transform_3(%arg0: i32) -> (i32, i32) {
    %c0_i32 = arith.constant 0 : i32
    %c0_i32_0 = arith.constant 0 : i32
    %c0_i32_1 = arith.constant 0 : i32
    return %c0_i32, %c0_i32_0 : i32, i32
  }
  func.func @transform_4(%arg0: i32) -> (i32, i32) {
    %c0_i32 = arith.constant 0 : i32
    %c0_i32_0 = arith.constant 0 : i32
    %c0_i32_1 = arith.constant 0 : i32
    return %c0_i32, %c0_i32_0 : i32, i32
  }
  func.func @transform_5(%arg0: i32) -> (i32, i32) {
    %c0_i32 = arith.constant 0 : i32
    %c0_i32_0 = arith.constant 0 : i32
    return %arg0, %c0_i32 : i32, i32
  }
}

module attributes {stable_mosaic.version = 11 : i64} {
  func.func @_flash_attn_kernel(%arg0: i32, %arg1: i32, %arg2: i32, %arg3: memref<1x1x64x32xbf16, #tpu.memory_space<vmem>>, %arg4: memref<1x1x32x32xbf16, #tpu.memory_space<vmem>>, %arg5: memref<1x1x32x32xbf16, #tpu.memory_space<vmem>>, %arg6: memref<1x1x64x32xbf16, #tpu.memory_space<vmem>>, %arg7: memref<64x1xf32, #tpu.memory_space<vmem>>, %arg8: memref<64x1xf32, #tpu.memory_space<vmem>>, %arg9: memref<64x32xf32, #tpu.memory_space<vmem>>) attributes {dimension_semantics = [#tpu.dimension_semantics<parallel>, #tpu.dimension_semantics<parallel>, #tpu.dimension_semantics<arbitrary>], iteration_bounds = array<i64: 2, 4, 2>, scalar_prefetch = 0 : i64, scratch_operands = 3 : i64, tpu.core_type = #tpu.core_type<tc>, window_params = [{transform_indices = @transform_0, window_bounds = array<i64: 1, 1, 64, 32>}, {transform_indices = @transform_1, window_bounds = array<i64: 1, 1, 32, 32>}, {transform_indices = @transform_2, window_bounds = array<i64: 1, 1, 32, 32>}, {transform_indices = @transform_3, window_bounds = array<i64: 1, 1, 64, 32>}]} {
    %c0_i32 = arith.constant 0 : i32
    %0 = arith.cmpi eq, %arg2, %c0_i32 : i32
    %1 = arith.extui %0 : i1 to i32
    %c0_i32_0 = arith.constant 0 : i32
    %2 = arith.cmpi ne, %1, %c0_i32_0 : i32
    scf.if %2 {
      %cst_30 = arith.constant 0xFF800000 : f32
      %46 = vector.broadcast %cst_30 : f32 to vector<64x1xf32>
      %c0_31 = arith.constant 0 : index
      %c0_32 = arith.constant 0 : index
      %47 = vector.load %arg7[%c0_31, %c0_32] : memref<64x1xf32, #tpu.memory_space<vmem>>, vector<64x1xf32>
      tpu.vector_store %arg7[%c0_31, %c0_32], %46 {strides = array<i32>} : memref<64x1xf32, #tpu.memory_space<vmem>>, vector<64x1xf32>,
      %cst_33 = arith.constant 0.000000e+00 : f32
      %48 = vector.broadcast %cst_33 : f32 to vector<64x1xf32>
      %c0_34 = arith.constant 0 : index
      %c0_35 = arith.constant 0 : index
      %49 = vector.load %arg8[%c0_34, %c0_35] : memref<64x1xf32, #tpu.memory_space<vmem>>, vector<64x1xf32>
      tpu.vector_store %arg8[%c0_34, %c0_35], %48 {strides = array<i32>} : memref<64x1xf32, #tpu.memory_space<vmem>>, vector<64x1xf32>,
      %cst_36 = arith.constant 0.000000e+00 : f32
      %50 = vector.broadcast %cst_36 : f32 to vector<64x32xf32>
      %c0_37 = arith.constant 0 : index
      %c0_38 = arith.constant 0 : index
      %51 = vector.load %arg9[%c0_37, %c0_38] : memref<64x32xf32, #tpu.memory_space<vmem>>, vector<64x32xf32>
      tpu.vector_store %arg9[%c0_37, %c0_38], %50 {strides = array<i32>} : memref<64x32xf32, #tpu.memory_space<vmem>>, vector<64x32xf32>,
    } else {
    }
    %c0 = arith.constant 0 : index
    %c0_1 = arith.constant 0 : index
    %c0_2 = arith.constant 0 : index
    %c0_3 = arith.constant 0 : index
    %3 = vector.load %arg3[%c0, %c0_1, %c0_2, %c0_3] : memref<1x1x64x32xbf16, #tpu.memory_space<vmem>>, vector<1x1x64x32xbf16>
    %4 = vector.shape_cast %3 : vector<1x1x64x32xbf16> to vector<64x32xbf16>
    %c0_4 = arith.constant 0 : index
    %c0_5 = arith.constant 0 : index
    %c0_6 = arith.constant 0 : index
    %c0_7 = arith.constant 0 : index
    %5 = vector.load %arg4[%c0_4, %c0_5, %c0_6, %c0_7] : memref<1x1x32x32xbf16, #tpu.memory_space<vmem>>, vector<1x1x32x32xbf16>
    %6 = vector.shape_cast %5 : vector<1x1x32x32xbf16> to vector<32x32xbf16>
    %c0_8 = arith.constant 0 : index
    %c0_9 = arith.constant 0 : index
    %c0_10 = arith.constant 0 : index
    %c0_11 = arith.constant 0 : index
    %7 = vector.load %arg5[%c0_8, %c0_9, %c0_10, %c0_11] : memref<1x1x32x32xbf16, #tpu.memory_space<vmem>>, vector<1x1x32x32xbf16>
    %8 = vector.shape_cast %7 : vector<1x1x32x32xbf16> to vector<32x32xbf16>
    %cst = arith.constant dense<0.000000e+00> : vector<64x32xf32>
    %9 = tpu.matmul %4, %6, %cst {dimension_numbers = #tpu.dot_dimension_numbers<[1], [1], [0], [0], [0, 0, 1, 0], [], []>} : vector<64x32xbf16>, vector<32x32xbf16>, vector<64x32xf32> -> vector<64x32xf32>
    %cst_12 = arith.constant 0.176776692 : f32
    %10 = vector.broadcast %cst_12 : f32 to vector<64x32xf32>
    %11 = arith.mulf %9, %10 : vector<64x32xf32>
    %12 = tpu.iota {dimensions = array<i32: 0>} : vector<64x32xi32>
    %13 = tpu.iota {dimensions = array<i32: 1>} : vector<64x32xi32>
    %c32_i32 = arith.constant 32 : i32
    %14 = arith.muli %arg2, %c32_i32 : i32
    %15 = vector.broadcast %14 : i32 to vector<64x32xi32>
    %16 = arith.addi %13, %15 : vector<64x32xi32>
    %17 = arith.cmpi sle, %16, %12 : vector<64x32xi32>
    %cst_13 = arith.constant -1.000000e+30 : f32
    %18 = vector.broadcast %cst_13 : f32 to vector<64x32xf32>
    %19 = arith.select %17, %11, %18 : vector<64x32xi1>, vector<64x32xf32>
    %c0_14 = arith.constant 0 : index
    %c0_15 = arith.constant 0 : index
    %20 = vector.load %arg7[%c0_14, %c0_15] : memref<64x1xf32, #tpu.memory_space<vmem>>, vector<64x1xf32>
    %cst_16 = arith.constant dense<0xFF800000> : vector<64xf32>
    %21 = vector.multi_reduction <maximumf>, %19, %cst_16 [1] : vector<64x32xf32> to vector<64xf32>
    %22 = vector.shape_cast %21 : vector<64xf32> to vector<64x1xf32>
    %23 = arith.maximumf %20, %22 : vector<64x1xf32>
    %24 = arith.subf %20, %23 : vector<64x1xf32>
    %25 = math.exp %24 : vector<64x1xf32>
    %26 = vector.broadcast %23 : vector<64x1xf32> to vector<64x32xf32>
    %27 = arith.subf %19, %26 : vector<64x32xf32>
    %28 = math.exp %27 : vector<64x32xf32>
    %c0_17 = arith.constant 0 : index
    %c0_18 = arith.constant 0 : index
    %29 = vector.load %arg8[%c0_17, %c0_18] : memref<64x1xf32, #tpu.memory_space<vmem>>, vector<64x1xf32>
    %30 = arith.mulf %25, %29 : vector<64x1xf32>
    %cst_19 = arith.constant dense<0.000000e+00> : vector<64xf32>
    %31 = vector.multi_reduction <add>, %28, %cst_19 [1] : vector<64x32xf32> to vector<64xf32>
    %32 = vector.shape_cast %31 : vector<64xf32> to vector<64x1xf32>
    %33 = arith.addf %30, %32 : vector<64x1xf32>
    %c0_20 = arith.constant 0 : index
    %c0_21 = arith.constant 0 : index
    %34 = vector.load %arg8[%c0_20, %c0_21] : memref<64x1xf32, #tpu.memory_space<vmem>>, vector<64x1xf32>
    tpu.vector_store %arg8[%c0_20, %c0_21], %33 {strides = array<i32>} : memref<64x1xf32, #tpu.memory_space<vmem>>, vector<64x1xf32>,
    %c0_22 = arith.constant 0 : index
    %c0_23 = arith.constant 0 : index
    %35 = vector.load %arg9[%c0_22, %c0_23] : memref<64x32xf32, #tpu.memory_space<vmem>>, vector<64x32xf32>
    %36 = vector.broadcast %25 : vector<64x1xf32> to vector<64x32xf32>
    %37 = arith.mulf %36, %35 : vector<64x32xf32>
    %38 = arith.truncf %28 : vector<64x32xf32> to vector<64x32xbf16>
    %cst_24 = arith.constant dense<0.000000e+00> : vector<64x32xf32>
    %39 = tpu.matmul %38, %8, %cst_24 {dimension_numbers = #tpu.dot_dimension_numbers<[1], [0], [0], [1], [0, 0, 1, 1], [], []>} : vector<64x32xbf16>, vector<32x32xbf16>, vector<64x32xf32> -> vector<64x32xf32>
    %40 = arith.addf %37, %39 : vector<64x32xf32>
    %c0_25 = arith.constant 0 : index
    %c0_26 = arith.constant 0 : index
    %41 = vector.load %arg9[%c0_25, %c0_26] : memref<64x32xf32, #tpu.memory_space<vmem>>, vector<64x32xf32>
    tpu.vector_store %arg9[%c0_25, %c0_26], %40 {strides = array<i32>} : memref<64x32xf32, #tpu.memory_space<vmem>>, vector<64x32xf32>,
    %c0_27 = arith.constant 0 : index
    %c0_28 = arith.constant 0 : index
    %42 = vector.load %arg7[%c0_27, %c0_28] : memref<64x1xf32, #tpu.memory_space<vmem>>, vector<64x1xf32>
    tpu.vector_store %arg7[%c0_27, %c0_28], %23 {strides = array<i32>} : memref<64x1xf32, #tpu.memory_space<vmem>>, vector<64x1xf32>,
    %c1_i32 = arith.constant 1 : i32
    %43 = arith.cmpi eq, %arg2, %c1_i32 : i32
    %44 = arith.extui %43 : i1 to i32
    %c0_i32_29 = arith.constant 0 : i32
    %45 = arith.cmpi ne, %44, %c0_i32_29 : i32
    scf.if %45 {
      %c0_30 = arith.constant 0 : index
      %c0_31 = arith.constant 0 : index
      %46 = vector.load %arg8[%c0_30, %c0_31] : memref<64x1xf32, #tpu.memory_space<vmem>>, vector<64x1xf32>
      %47 = tpu.reciprocal %46 {approx = true} : vector<64x1xf32> -> vector<64x1xf32>
      %c0_32 = arith.constant 0 : index
      %c0_33 = arith.constant 0 : index
      %48 = vector.load %arg9[%c0_32, %c0_33] : memref<64x32xf32, #tpu.memory_space<vmem>>, vector<64x32xf32>
      %49 = vector.broadcast %47 : vector<64x1xf32> to vector<64x32xf32>
      %50 = arith.mulf %48, %49 : vector<64x32xf32>
      %51 = arith.truncf %50 : vector<64x32xf32> to vector<64x32xbf16>
      %c0_34 = arith.constant 0 : index
      %c0_35 = arith.constant 0 : index
      %c0_36 = arith.constant 0 : index
      %c0_37 = arith.constant 0 : index
      %52 = vector.load %arg6[%c0_34, %c0_35, %c0_36, %c0_37] : memref<1x1x64x32xbf16, #tpu.memory_space<vmem>>, vector<1x1x64x32xbf16>
      %53 = vector.shape_cast %52 : vector<1x1x64x32xbf16> to vector<64x32xbf16>
      %54 = vector.shape_cast %51 : vector<64x32xbf16> to vector<1x1x64x32xbf16>
      tpu.vector_store %arg6[%c0_34, %c0_35, %c0_36, %c0_37], %54 {strides = array<i32>} : memref<1x1x64x32xbf16, #tpu.memory_space<vmem>>, vector<1x1x64x32xbf16>,
    } else {
    }
    return
  }
  func.func @transform_0(%arg0: i32, %arg1: i32, %arg2: i32) -> (i32, i32, i32, i32) {
    %c0_i32 = arith.constant 0 : i32
    %c0_i32_0 = arith.constant 0 : i32
    %c0_i32_1 = arith.constant 0 : i32
    return %arg0, %arg1, %c0_i32, %c0_i32_0 : i32, i32, i32, i32
  }
  func.func @transform_1(%arg0: i32, %arg1: i32, %arg2: i32) -> (i32, i32, i32, i32) {
    %c0_i32 = arith.constant 0 : i32
    %c0_i32_0 = arith.constant 0 : i32
    return %arg0, %arg1, %arg2, %c0_i32 : i32, i32, i32, i32
  }
  func.func @transform_2(%arg0: i32, %arg1: i32, %arg2: i32) -> (i32, i32, i32, i32) {
    %c0_i32 = arith.constant 0 : i32
    %c0_i32_0 = arith.constant 0 : i32
    return %arg0, %arg1, %arg2, %c0_i32 : i32, i32, i32, i32
  }
  func.func @transform_3(%arg0: i32, %arg1: i32, %arg2: i32) -> (i32, i32, i32, i32) {
    %c0_i32 = arith.constant 0 : i32
    %c0_i32_0 = arith.constant 0 : i32
    %c0_i32_1 = arith.constant 0 : i32
    return %arg0, %arg1, %c0_i32, %c0_i32_0 : i32, i32, i32, i32
  }
}

module attributes {stable_mosaic.version = 11 : i64} {
  func.func @_linear_res_kernel(%arg0: i32, %arg1: memref<64x128xbf16, #tpu.memory_space<vmem>>, %arg2: memref<128x128xbf16, #tpu.memory_space<vmem>>, %arg3: memref<1x128xf32, #tpu.memory_space<vmem>>, %arg4: memref<64x128xf32, #tpu.memory_space<vmem>>, %arg5: memref<64x128xf32, #tpu.memory_space<vmem>>) attributes {dimension_semantics = [#tpu.dimension_semantics<parallel>], iteration_bounds = array<i64: 2>, scalar_prefetch = 0 : i64, scratch_operands = 0 : i64, tpu.core_type = #tpu.core_type<tc>, window_params = [{transform_indices = @transform_0, window_bounds = array<i64: 64, 128>}, {pipeline_mode = #tpu.pipeline_mode<synchronous>, transform_indices = @transform_1, window_bounds = array<i64: 128, 128>}, {pipeline_mode = #tpu.pipeline_mode<synchronous>, transform_indices = @transform_2, window_bounds = array<i64: 1, 128>}, {transform_indices = @transform_3, window_bounds = array<i64: 64, 128>}, {transform_indices = @transform_4, window_bounds = array<i64: 64, 128>}]} {
    %c0 = arith.constant 0 : index
    %c0_0 = arith.constant 0 : index
    %0 = vector.load %arg1[%c0, %c0_0] : memref<64x128xbf16, #tpu.memory_space<vmem>>, vector<64x128xbf16>
    %c0_1 = arith.constant 0 : index
    %c0_2 = arith.constant 0 : index
    %1 = vector.load %arg2[%c0_1, %c0_2] : memref<128x128xbf16, #tpu.memory_space<vmem>>, vector<128x128xbf16>
    %cst = arith.constant dense<0.000000e+00> : vector<64x128xf32>
    %2 = tpu.matmul %0, %1, %cst {dimension_numbers = #tpu.dot_dimension_numbers<[1], [0], [0], [1], [0, 0, 1, 1], [], []>} : vector<64x128xbf16>, vector<128x128xbf16>, vector<64x128xf32> -> vector<64x128xf32>
    %c0_3 = arith.constant 0 : index
    %c0_4 = arith.constant 0 : index
    %3 = vector.load %arg3[%c0_3, %c0_4] : memref<1x128xf32, #tpu.memory_space<vmem>>, vector<1x128xf32>
    %4 = vector.broadcast %3 : vector<1x128xf32> to vector<64x128xf32>
    %5 = arith.addf %2, %4 : vector<64x128xf32>
    %c0_5 = arith.constant 0 : index
    %c0_6 = arith.constant 0 : index
    %6 = vector.load %arg4[%c0_5, %c0_6] : memref<64x128xf32, #tpu.memory_space<vmem>>, vector<64x128xf32>
    %7 = arith.addf %5, %6 : vector<64x128xf32>
    %c0_7 = arith.constant 0 : index
    %c0_8 = arith.constant 0 : index
    %8 = vector.load %arg5[%c0_7, %c0_8] : memref<64x128xf32, #tpu.memory_space<vmem>>, vector<64x128xf32>
    tpu.vector_store %arg5[%c0_7, %c0_8], %7 {strides = array<i32>} : memref<64x128xf32, #tpu.memory_space<vmem>>, vector<64x128xf32>,
    return
  }
  func.func @transform_0(%arg0: i32) -> (i32, i32) {
    %c0_i32 = arith.constant 0 : i32
    %c0_i32_0 = arith.constant 0 : i32
    return %arg0, %c0_i32 : i32, i32
  }
  func.func @transform_1(%arg0: i32) -> (i32, i32) {
    %c0_i32 = arith.constant 0 : i32
    %c0_i32_0 = arith.constant 0 : i32
    %c0_i32_1 = arith.constant 0 : i32
    return %c0_i32, %c0_i32_0 : i32, i32
  }
  func.func @transform_2(%arg0: i32) -> (i32, i32) {
    %c0_i32 = arith.constant 0 : i32
    %c0_i32_0 = arith.constant 0 : i32
    %c0_i32_1 = arith.constant 0 : i32
    return %c0_i32, %c0_i32_0 : i32, i32
  }
  func.func @transform_3(%arg0: i32) -> (i32, i32) {
    %c0_i32 = arith.constant 0 : i32
    %c0_i32_0 = arith.constant 0 : i32
    return %arg0, %c0_i32 : i32, i32
  }
  func.func @transform_4(%arg0: i32) -> (i32, i32) {
    %c0_i32 = arith.constant 0 : i32
    %c0_i32_0 = arith.constant 0 : i32
    return %arg0, %c0_i32 : i32, i32
  }
}

module attributes {stable_mosaic.version = 11 : i64} {
  func.func @_ln_mlp_kernel(%arg0: i32, %arg1: i32, %arg2: memref<64x128xf32, #tpu.memory_space<vmem>>, %arg3: memref<1x128xf32, #tpu.memory_space<vmem>>, %arg4: memref<1x128xf32, #tpu.memory_space<vmem>>, %arg5: memref<128x256xbf16, #tpu.memory_space<vmem>>, %arg6: memref<1x256xf32, #tpu.memory_space<vmem>>, %arg7: memref<256x128xbf16, #tpu.memory_space<vmem>>, %arg8: memref<1x128xf32, #tpu.memory_space<vmem>>, %arg9: memref<64x128xf32, #tpu.memory_space<vmem>>, %arg10: memref<64x128xbf16, #tpu.memory_space<vmem>>, %arg11: memref<64x128xf32, #tpu.memory_space<vmem>>) attributes {dimension_semantics = [#tpu.dimension_semantics<parallel>, #tpu.dimension_semantics<arbitrary>], iteration_bounds = array<i64: 2, 2>, scalar_prefetch = 0 : i64, scratch_operands = 2 : i64, tpu.core_type = #tpu.core_type<tc>, window_params = [{transform_indices = @transform_0, window_bounds = array<i64: 64, 128>}, {pipeline_mode = #tpu.pipeline_mode<synchronous>, transform_indices = @transform_1, window_bounds = array<i64: 1, 128>}, {pipeline_mode = #tpu.pipeline_mode<synchronous>, transform_indices = @transform_2, window_bounds = array<i64: 1, 128>}, {transform_indices = @transform_3, window_bounds = array<i64: 128, 256>}, {transform_indices = @transform_4, window_bounds = array<i64: 1, 256>}, {transform_indices = @transform_5, window_bounds = array<i64: 256, 128>}, {pipeline_mode = #tpu.pipeline_mode<synchronous>, transform_indices = @transform_6, window_bounds = array<i64: 1, 128>}, {transform_indices = @transform_7, window_bounds = array<i64: 64, 128>}]} {
    %c0_i32 = arith.constant 0 : i32
    %0 = arith.cmpi eq, %arg1, %c0_i32 : i32
    %1 = arith.extui %0 : i1 to i32
    %c0_i32_0 = arith.constant 0 : i32
    %2 = arith.cmpi ne, %1, %c0_i32_0 : i32
    scf.if %2 {
      %c0_18 = arith.constant 0 : index
      %c0_19 = arith.constant 0 : index
      %31 = vector.load %arg2[%c0_18, %c0_19] : memref<64x128xf32, #tpu.memory_space<vmem>>, vector<64x128xf32>
      %c0_20 = arith.constant 0 : index
      %c0_21 = arith.constant 0 : index
      %32 = vector.load %arg3[%c0_20, %c0_21] : memref<1x128xf32, #tpu.memory_space<vmem>>, vector<1x128xf32>
      %c0_22 = arith.constant 0 : index
      %c0_23 = arith.constant 0 : index
      %33 = vector.load %arg4[%c0_22, %c0_23] : memref<1x128xf32, #tpu.memory_space<vmem>>, vector<1x128xf32>
      %cst_24 = arith.constant dense<0.000000e+00> : vector<64xf32>
      %34 = vector.multi_reduction <add>, %31, %cst_24 [1] : vector<64x128xf32> to vector<64xf32>
      %35 = vector.shape_cast %34 : vector<64xf32> to vector<64x1xf32>
      %cst_25 = arith.constant 1.280000e+02 : f32
      %36 = vector.broadcast %cst_25 : f32 to vector<64x1xf32>
      %37 = arith.divf %35, %36 : vector<64x1xf32>
      %38 = vector.broadcast %37 : vector<64x1xf32> to vector<64x128xf32>
      %39 = arith.subf %31, %38 : vector<64x128xf32>
      %40 = arith.mulf %39, %39 : vector<64x128xf32>
      %cst_26 = arith.constant dense<0.000000e+00> : vector<64xf32>
      %41 = vector.multi_reduction <add>, %40, %cst_26 [1] : vector<64x128xf32> to vector<64xf32>
      %42 = vector.shape_cast %41 : vector<64xf32> to vector<64x1xf32>
      %cst_27 = arith.constant 1.280000e+02 : f32
      %43 = vector.broadcast %cst_27 : f32 to vector<64x1xf32>
      %44 = arith.divf %42, %43 : vector<64x1xf32>
      %45 = vector.broadcast %37 : vector<64x1xf32> to vector<64x128xf32>
      %46 = arith.subf %31, %45 : vector<64x128xf32>
      %cst_28 = arith.constant 9.99999974E-6 : f32
      %47 = vector.broadcast %cst_28 : f32 to vector<64x1xf32>
      %48 = arith.addf %44, %47 : vector<64x1xf32>
      %49 = math.rsqrt %48 : vector<64x1xf32>
      %50 = vector.broadcast %49 : vector<64x1xf32> to vector<64x128xf32>
      %51 = arith.mulf %46, %50 : vector<64x128xf32>
      %52 = vector.broadcast %32 : vector<1x128xf32> to vector<64x128xf32>
      %53 = arith.mulf %51, %52 : vector<64x128xf32>
      %54 = vector.broadcast %33 : vector<1x128xf32> to vector<64x128xf32>
      %55 = arith.addf %53, %54 : vector<64x128xf32>
      %56 = arith.truncf %55 : vector<64x128xf32> to vector<64x128xbf16>
      %c0_29 = arith.constant 0 : index
      %c0_30 = arith.constant 0 : index
      %57 = vector.load %arg10[%c0_29, %c0_30] : memref<64x128xbf16, #tpu.memory_space<vmem>>, vector<64x128xbf16>
      tpu.vector_store %arg10[%c0_29, %c0_30], %56 {strides = array<i32>} : memref<64x128xbf16, #tpu.memory_space<vmem>>, vector<64x128xbf16>,
      %cst_31 = arith.constant 0.000000e+00 : f32
      %58 = vector.broadcast %cst_31 : f32 to vector<64x128xf32>
      %c0_32 = arith.constant 0 : index
      %c0_33 = arith.constant 0 : index
      %59 = vector.load %arg11[%c0_32, %c0_33] : memref<64x128xf32, #tpu.memory_space<vmem>>, vector<64x128xf32>
      tpu.vector_store %arg11[%c0_32, %c0_33], %58 {strides = array<i32>} : memref<64x128xf32, #tpu.memory_space<vmem>>, vector<64x128xf32>,
    } else {
    }
    %c0 = arith.constant 0 : index
    %c0_1 = arith.constant 0 : index
    %3 = vector.load %arg10[%c0, %c0_1] : memref<64x128xbf16, #tpu.memory_space<vmem>>, vector<64x128xbf16>
    %c0_2 = arith.constant 0 : index
    %c0_3 = arith.constant 0 : index
    %4 = vector.load %arg5[%c0_2, %c0_3] : memref<128x256xbf16, #tpu.memory_space<vmem>>, vector<128x256xbf16>
    %cst = arith.constant dense<0.000000e+00> : vector<64x256xf32>
    %5 = tpu.matmul %3, %4, %cst {dimension_numbers = #tpu.dot_dimension_numbers<[1], [0], [0], [1], [0, 0, 1, 1], [], []>} : vector<64x128xbf16>, vector<128x256xbf16>, vector<64x256xf32> -> vector<64x256xf32>
    %c0_4 = arith.constant 0 : index
    %c0_5 = arith.constant 0 : index
    %6 = vector.load %arg6[%c0_4, %c0_5] : memref<1x256xf32, #tpu.memory_space<vmem>>, vector<1x256xf32>
    %7 = vector.broadcast %6 : vector<1x256xf32> to vector<64x256xf32>
    %8 = arith.addf %5, %7 : vector<64x256xf32>
    %cst_6 = arith.constant 5.000000e-01 : f32
    %9 = vector.broadcast %cst_6 : f32 to vector<64x256xf32>
    %10 = arith.mulf %9, %8 : vector<64x256xf32>
    %cst_7 = arith.constant 4.471500e-02 : f32
    %11 = vector.broadcast %cst_7 : f32 to vector<64x256xf32>
    %12 = arith.mulf %11, %8 : vector<64x256xf32>
    %13 = arith.mulf %12, %8 : vector<64x256xf32>
    %14 = arith.mulf %13, %8 : vector<64x256xf32>
    %15 = arith.addf %8, %14 : vector<64x256xf32>
    %cst_8 = arith.constant 0.797884583 : f32
    %16 = vector.broadcast %cst_8 : f32 to vector<64x256xf32>
    %17 = arith.mulf %16, %15 : vector<64x256xf32>
    %18 = math.tanh %17 : vector<64x256xf32>
    %cst_9 = arith.constant 1.000000e+00 : f32
    %19 = vector.broadcast %cst_9 : f32 to vector<64x256xf32>
    %20 = arith.addf %19, %18 : vector<64x256xf32>
    %21 = arith.mulf %10, %20 : vector<64x256xf32>
    %c0_10 = arith.constant 0 : index
    %c0_11 = arith.constant 0 : index
    %22 = vector.load %arg11[%c0_10, %c0_11] : memref<64x128xf32, #tpu.memory_space<vmem>>, vector<64x128xf32>
    %23 = arith.truncf %21 : vector<64x256xf32> to vector<64x256xbf16>
    %c0_12 = arith.constant 0 : index
    %c0_13 = arith.constant 0 : index
    %24 = vector.load %arg7[%c0_12, %c0_13] : memref<256x128xbf16, #tpu.memory_space<vmem>>, vector<256x128xbf16>
    %cst_14 = arith.constant dense<0.000000e+00> : vector<64x128xf32>
    %25 = tpu.matmul %23, %24, %cst_14 {dimension_numbers = #tpu.dot_dimension_numbers<[1], [0], [0], [1], [0, 0, 1, 1], [], []>} : vector<64x256xbf16>, vector<256x128xbf16>, vector<64x128xf32> -> vector<64x128xf32>
    %26 = arith.addf %22, %25 : vector<64x128xf32>
    %c0_15 = arith.constant 0 : index
    %c0_16 = arith.constant 0 : index
    %27 = vector.load %arg11[%c0_15, %c0_16] : memref<64x128xf32, #tpu.memory_space<vmem>>, vector<64x128xf32>
    tpu.vector_store %arg11[%c0_15, %c0_16], %26 {strides = array<i32>} : memref<64x128xf32, #tpu.memory_space<vmem>>, vector<64x128xf32>,
    %c1_i32 = arith.constant 1 : i32
    %28 = arith.cmpi eq, %arg1, %c1_i32 : i32
    %29 = arith.extui %28 : i1 to i32
    %c0_i32_17 = arith.constant 0 : i32
    %30 = arith.cmpi ne, %29, %c0_i32_17 : i32
    scf.if %30 {
      %c0_18 = arith.constant 0 : index
      %c0_19 = arith.constant 0 : index
      %31 = vector.load %arg2[%c0_18, %c0_19] : memref<64x128xf32, #tpu.memory_space<vmem>>, vector<64x128xf32>
      %c0_20 = arith.constant 0 : index
      %c0_21 = arith.constant 0 : index
      %32 = vector.load %arg11[%c0_20, %c0_21] : memref<64x128xf32, #tpu.memory_space<vmem>>, vector<64x128xf32>
      %33 = arith.addf %31, %32 : vector<64x128xf32>
      %c0_22 = arith.constant 0 : index
      %c0_23 = arith.constant 0 : index
      %34 = vector.load %arg8[%c0_22, %c0_23] : memref<1x128xf32, #tpu.memory_space<vmem>>, vector<1x128xf32>
      %35 = vector.broadcast %34 : vector<1x128xf32> to vector<64x128xf32>
      %36 = arith.addf %33, %35 : vector<64x128xf32>
      %c0_24 = arith.constant 0 : index
      %c0_25 = arith.constant 0 : index
      %37 = vector.load %arg9[%c0_24, %c0_25] : memref<64x128xf32, #tpu.memory_space<vmem>>, vector<64x128xf32>
      tpu.vector_store %arg9[%c0_24, %c0_25], %36 {strides = array<i32>} : memref<64x128xf32, #tpu.memory_space<vmem>>, vector<64x128xf32>,
    } else {
    }
    return
  }
  func.func @transform_0(%arg0: i32, %arg1: i32) -> (i32, i32) {
    %c0_i32 = arith.constant 0 : i32
    %c0_i32_0 = arith.constant 0 : i32
    return %arg0, %c0_i32 : i32, i32
  }
  func.func @transform_1(%arg0: i32, %arg1: i32) -> (i32, i32) {
    %c0_i32 = arith.constant 0 : i32
    %c0_i32_0 = arith.constant 0 : i32
    %c0_i32_1 = arith.constant 0 : i32
    return %c0_i32, %c0_i32_0 : i32, i32
  }
  func.func @transform_2(%arg0: i32, %arg1: i32) -> (i32, i32) {
    %c0_i32 = arith.constant 0 : i32
    %c0_i32_0 = arith.constant 0 : i32
    %c0_i32_1 = arith.constant 0 : i32
    return %c0_i32, %c0_i32_0 : i32, i32
  }
  func.func @transform_3(%arg0: i32, %arg1: i32) -> (i32, i32) {
    %c0_i32 = arith.constant 0 : i32
    %c0_i32_0 = arith.constant 0 : i32
    return %c0_i32, %arg1 : i32, i32
  }
  func.func @transform_4(%arg0: i32, %arg1: i32) -> (i32, i32) {
    %c0_i32 = arith.constant 0 : i32
    %c0_i32_0 = arith.constant 0 : i32
    return %c0_i32, %arg1 : i32, i32
  }
  func.func @transform_5(%arg0: i32, %arg1: i32) -> (i32, i32) {
    %c0_i32 = arith.constant 0 : i32
    %c0_i32_0 = arith.constant 0 : i32
    return %arg1, %c0_i32 : i32, i32
  }
  func.func @transform_6(%arg0: i32, %arg1: i32) -> (i32, i32) {
    %c0_i32 = arith.constant 0 : i32
    %c0_i32_0 = arith.constant 0 : i32
    %c0_i32_1 = arith.constant 0 : i32
    return %c0_i32, %c0_i32_0 : i32, i32
  }
  func.func @transform_7(%arg0: i32, %arg1: i32) -> (i32, i32) {
    %c0_i32 = arith.constant 0 : i32
    %c0_i32_0 = arith.constant 0 : i32
    return %arg0, %c0_i32 : i32, i32
  }
}

module attributes {stable_mosaic.version = 11 : i64} {
  func.func @_ln_lm_head_kernel(%arg0: i32, %arg1: i32, %arg2: memref<64x128xf32, #tpu.memory_space<vmem>>, %arg3: memref<1x128xf32, #tpu.memory_space<vmem>>, %arg4: memref<1x128xf32, #tpu.memory_space<vmem>>, %arg5: memref<128x128xbf16, #tpu.memory_space<vmem>>, %arg6: memref<64x128xf32, #tpu.memory_space<vmem>>) attributes {dimension_semantics = [#tpu.dimension_semantics<parallel>, #tpu.dimension_semantics<parallel>], iteration_bounds = array<i64: 2, 3>, scalar_prefetch = 0 : i64, scratch_operands = 0 : i64, tpu.core_type = #tpu.core_type<tc>, window_params = [{transform_indices = @transform_0, window_bounds = array<i64: 64, 128>}, {pipeline_mode = #tpu.pipeline_mode<synchronous>, transform_indices = @transform_1, window_bounds = array<i64: 1, 128>}, {pipeline_mode = #tpu.pipeline_mode<synchronous>, transform_indices = @transform_2, window_bounds = array<i64: 1, 128>}, {transform_indices = @transform_3, window_bounds = array<i64: 128, 128>}, {transform_indices = @transform_4, window_bounds = array<i64: 64, 128>}]} {
    %c0 = arith.constant 0 : index
    %c0_0 = arith.constant 0 : index
    %0 = vector.load %arg2[%c0, %c0_0] : memref<64x128xf32, #tpu.memory_space<vmem>>, vector<64x128xf32>
    %c0_1 = arith.constant 0 : index
    %c0_2 = arith.constant 0 : index
    %1 = vector.load %arg3[%c0_1, %c0_2] : memref<1x128xf32, #tpu.memory_space<vmem>>, vector<1x128xf32>
    %c0_3 = arith.constant 0 : index
    %c0_4 = arith.constant 0 : index
    %2 = vector.load %arg4[%c0_3, %c0_4] : memref<1x128xf32, #tpu.memory_space<vmem>>, vector<1x128xf32>
    %cst = arith.constant dense<0.000000e+00> : vector<64xf32>
    %3 = vector.multi_reduction <add>, %0, %cst [1] : vector<64x128xf32> to vector<64xf32>
    %4 = vector.shape_cast %3 : vector<64xf32> to vector<64x1xf32>
    %cst_5 = arith.constant 1.280000e+02 : f32
    %5 = vector.broadcast %cst_5 : f32 to vector<64x1xf32>
    %6 = arith.divf %4, %5 : vector<64x1xf32>
    %7 = vector.broadcast %6 : vector<64x1xf32> to vector<64x128xf32>
    %8 = arith.subf %0, %7 : vector<64x128xf32>
    %9 = arith.mulf %8, %8 : vector<64x128xf32>
    %cst_6 = arith.constant dense<0.000000e+00> : vector<64xf32>
    %10 = vector.multi_reduction <add>, %9, %cst_6 [1] : vector<64x128xf32> to vector<64xf32>
    %11 = vector.shape_cast %10 : vector<64xf32> to vector<64x1xf32>
    %cst_7 = arith.constant 1.280000e+02 : f32
    %12 = vector.broadcast %cst_7 : f32 to vector<64x1xf32>
    %13 = arith.divf %11, %12 : vector<64x1xf32>
    %14 = vector.broadcast %6 : vector<64x1xf32> to vector<64x128xf32>
    %15 = arith.subf %0, %14 : vector<64x128xf32>
    %cst_8 = arith.constant 9.99999974E-6 : f32
    %16 = vector.broadcast %cst_8 : f32 to vector<64x1xf32>
    %17 = arith.addf %13, %16 : vector<64x1xf32>
    %18 = math.rsqrt %17 : vector<64x1xf32>
    %19 = vector.broadcast %18 : vector<64x1xf32> to vector<64x128xf32>
    %20 = arith.mulf %15, %19 : vector<64x128xf32>
    %21 = vector.broadcast %1 : vector<1x128xf32> to vector<64x128xf32>
    %22 = arith.mulf %20, %21 : vector<64x128xf32>
    %23 = vector.broadcast %2 : vector<1x128xf32> to vector<64x128xf32>
    %24 = arith.addf %22, %23 : vector<64x128xf32>
    %25 = arith.truncf %24 : vector<64x128xf32> to vector<64x128xbf16>
    %c0_9 = arith.constant 0 : index
    %c0_10 = arith.constant 0 : index
    %26 = vector.load %arg5[%c0_9, %c0_10] : memref<128x128xbf16, #tpu.memory_space<vmem>>, vector<128x128xbf16>
    %cst_11 = arith.constant dense<0.000000e+00> : vector<64x128xf32>
    %27 = tpu.matmul %25, %26, %cst_11 {dimension_numbers = #tpu.dot_dimension_numbers<[1], [0], [0], [1], [0, 0, 1, 1], [], []>} : vector<64x128xbf16>, vector<128x128xbf16>, vector<64x128xf32> -> vector<64x128xf32>
    %c0_12 = arith.constant 0 : index
    %c0_13 = arith.constant 0 : index
    %28 = vector.load %arg6[%c0_12, %c0_13] : memref<64x128xf32, #tpu.memory_space<vmem>>, vector<64x128xf32>
    tpu.vector_store %arg6[%c0_12, %c0_13], %27 {strides = array<i32>} : memref<64x128xf32, #tpu.memory_space<vmem>>, vector<64x128xf32>,
    return
  }
  func.func @transform_0(%arg0: i32, %arg1: i32) -> (i32, i32) {
    %c0_i32 = arith.constant 0 : i32
    %c0_i32_0 = arith.constant 0 : i32
    return %arg0, %c0_i32 : i32, i32
  }
  func.func @transform_1(%arg0: i32, %arg1: i32) -> (i32, i32) {
    %c0_i32 = arith.constant 0 : i32
    %c0_i32_0 = arith.constant 0 : i32
    %c0_i32_1 = arith.constant 0 : i32
    return %c0_i32, %c0_i32_0 : i32, i32
  }
  func.func @transform_2(%arg0: i32, %arg1: i32) -> (i32, i32) {
    %c0_i32 = arith.constant 0 : i32
    %c0_i32_0 = arith.constant 0 : i32
    %c0_i32_1 = arith.constant 0 : i32
    return %c0_i32, %c0_i32_0 : i32, i32
  }
  func.func @transform_3(%arg0: i32, %arg1: i32) -> (i32, i32) {
    %c0_i32 = arith.constant 0 : i32
    %c0_i32_0 = arith.constant 0 : i32
    return %c0_i32, %arg1 : i32, i32
  }
  func.func @transform_4(%arg0: i32, %arg1: i32) -> (i32, i32) {
    %c0_i32 = arith.constant 0 : i32
    return %arg0, %arg1 : i32, i32
  }
}

</mosaic_0001>

<llo_original>
// kernel: _lambda_.9
$region0: #{_lambda_.9}
  #allocation0 [shape = 'u32[]', space=smem, size = 0x4, offset = 0x4, fixed_abs, tag = 'smem constant byte address 0x4 - core index']
  #allocation1 [shape = 'u32[144,128]{1,0:T(1,128)}', space=vmem, size = 0x12000, scoped, tag = 'internal scratch']
  %s0 = inlined_call_operand.vmem [shape: f32[128,128], index: 0, kind: input, shape index: {}]
  %s1 = inlined_call_operand.vmem [shape: f32[1,128], index: 1, kind: input, shape index: {}]
  %s2 = inlined_call_operand.vmem [shape: f32[1,128], index: 2, kind: input, shape index: {}]
  %s3 = inlined_call_operand.vmem [shape: bf16[128,384], index: 3, kind: input, shape index: {}]
  %s4 = inlined_call_operand.vmem [shape: f32[1,384], index: 4, kind: input, shape index: {}]
  %s5 = inlined_call_operand.vmem [shape: bf16[128,384], index: 5, kind: output, shape index: {}]
  %s6 = sld [smem:[#allocation0]]
  $region53: #{_lambda_.9} parent=0
    _
  %s8 = ssub.s32 1, %s6
  %s9 = scalar_select 0, %s8, %s6
  loop: start=0, step=1, limit=4
  $region2: #{_lambda_.9} parent=0 // loop_pre_header
    _
  $region3: #{_lambda_.9} parent=0 // loop_header
    %s11 = sphi 0, %s15
    %p12 = scmp.ge.s32.totalorder %s11, 4
    %s21 = sphi 0, %s23
    %s24 = sphi 0, %s21
    %s25 = sphi 0, %s24
    %s41 = sphi 0, %s25
    %s45 = sphi 0, %s45
    %s47 = sphi 0, %s45
    %s48 = sphi 0, %s47
    %s62 = sphi 0, %s48
    %s66 = sphi 0, %s66
    %s68 = sphi 0, %s66
    %s69 = sphi 0, %s68
    %s83 = sphi 0, %s69
    %s87 = sphi 0, %s87
    %s89 = sphi 0, %s87
    %s90 = sphi 0, %s89
    %s104 = sphi 0, %s90
    %s108 = sphi 0, %s108
    %s110 = sphi 0, %s108
    %s111 = sphi 0, %s110
    %s125 = sphi 0, %s111
    %s131 = sphi 0, %s133
    %s134 = sphi 0, %s131
    %s135 = sphi 0, %s134
    %s151 = sphi 0, %s135
  $region4: #{_lambda_.9} parent=0 // loop_header_branch
    %14 = sbr.rel (%p12) target = $region8
  $region5: #{_lambda_.9} parent=0 // loop_body
    %s16 = ssub.s32 %s11, 1
    %s17 = ssub.s32 %s11, 2
    %s18 = sadd.s32 %s11, 1
    %s19 = ssub.s32 %s11, %s18
    %p20 = scmp.eq.s32.totalorder %s19, 0
    %s22 = sadd.s32 %s21, 1
    %s23 = scalar_select %p20, %s21, %s22
    %p26 = pneg %p20
    %p27 = scmp.eq.s32.totalorder %s11, 1
    %p28 = por %p26, %p27
    %p29 = scmp.ne.s32.totalorder %s21, %s24
    %p30 = scmp.eq.s32.totalorder %s11, 0
    %p31 = por %p29, %p30
    %p32 = scmp.ne.s32.totalorder %s21, %s24
    %p33 = scmp.eq.s32.totalorder %s16, 1
    %p34 = por %p32, %p33
    %p35 = scmp.ne.s32.totalorder %s24, %s25
    %p36 = scmp.eq.s32.totalorder %s16, 0
    %p37 = por %p35, %p36
    %p38 = scmp.ne.s32.totalorder %s24, %s25
    %p39 = scmp.eq.s32.totalorder %s17, 1
    %p40 = por %p38, %p39
    %p42 = scmp.ne.s32.totalorder %s25, %s41
    %p43 = scmp.eq.s32.totalorder %s17, 0
    %p44 = por %p42, %p43
    %s46 = sadd.s32 %s45, 1
    %p49 = scmp.eq.s32.totalorder %s11, 1
    %p50 = scmp.ne.s32.totalorder %s45, %s47
    %p51 = scmp.eq.s32.totalorder %s11, 0
    %p52 = por %p50, %p51
    %p53 = scmp.ne.s32.totalorder %s45, %s47
    %p54 = scmp.eq.s32.totalorder %s16, 1
    %p55 = por %p53, %p54
    %p56 = scmp.ne.s32.totalorder %s47, %s48
    %p57 = scmp.eq.s32.totalorder %s16, 0
    %p58 = por %p56, %p57
    %p59 = scmp.ne.s32.totalorder %s47, %s48
    %p60 = scmp.eq.s32.totalorder %s17, 1
    %p61 = por %p59, %p60
    %p63 = scmp.ne.s32.totalorder %s48, %s62
    %p64 = scmp.eq.s32.totalorder %s17, 0
    %p65 = por %p63, %p64
    %s67 = sadd.s32 %s66, 1
    %p70 = scmp.eq.s32.totalorder %s11, 1
    %p71 = scmp.ne.s32.totalorder %s66, %s68
    %p72 = scmp.eq.s32.totalorder %s11, 0
    %p73 = por %p71, %p72
    %p74 = scmp.ne.s32.totalorder %s66, %s68
    %p75 = scmp.eq.s32.totalorder %s16, 1
    %p76 = por %p74, %p75
    %p77 = scmp.ne.s32.totalorder %s68, %s69
    %p78 = scmp.eq.s32.totalorder %s16, 0
    %p79 = por %p77, %p78
    %p80 = scmp.ne.s32.totalorder %s68, %s69
    %p81 = scmp.eq.s32.totalorder %s17, 1
    %p82 = por %p80, %p81
    %p84 = scmp.ne.s32.totalorder %s69, %s83
    %p85 = scmp.eq.s32.totalorder %s17, 0
    %p86 = por %p84, %p85
    %s88 = sadd.s32 %s87, 1
    %p91 = scmp.eq.s32.totalorder %s11, 1
    %p92 = scmp.ne.s32.totalorder %s87, %s89
    %p93 = scmp.eq.s32.totalorder %s11, 0
    %p94 = por %p92, %p93
    %p95 = scmp.ne.s32.totalorder %s87, %s89
    %p96 = scmp.eq.s32.totalorder %s16, 1
    %p97 = por %p95, %p96
    %p98 = scmp.ne.s32.totalorder %s89, %s90
    %p99 = scmp.eq.s32.totalorder %s16, 0
    %p100 = por %p98, %p99
    %p101 = scmp.ne.s32.totalorder %s89, %s90
    %p102 = scmp.eq.s32.totalorder %s17, 1
    %p103 = por %p101, %p102
    %p105 = scmp.ne.s32.totalorder %s90, %s104
    %p106 = scmp.eq.s32.totalorder %s17, 0
    %p107 = por %p105, %p106
    %s109 = sadd.s32 %s108, 1
    %p112 = scmp.eq.s32.totalorder %s11, 1
    %p113 = scmp.ne.s32.totalorder %s108, %s110
    %p114 = scmp.eq.s32.totalorder %s11, 0
    %p115 = por %p113, %p114
    %p116 = scmp.ne.s32.totalorder %s108, %s110
    %p117 = scmp.eq.s32.totalorder %s16, 1
    %p118 = por %p116, %p117
    %p119 = scmp.ne.s32.totalorder %s110, %s111
    %p120 = scmp.eq.s32.totalorder %s16, 0
    %p121 = por %p119, %p120
    %p122 = scmp.ne.s32.totalorder %s110, %s111
    %p123 = scmp.eq.s32.totalorder %s17, 1
    %p124 = por %p122, %p123
    %p126 = scmp.ne.s32.totalorder %s111, %s125
    %p127 = scmp.eq.s32.totalorder %s17, 0
    %p128 = por %p126, %p127
    %s129 = ssub.s32 %s11, %s18
    %p130 = scmp.eq.s32.totalorder %s129, 0
    %s132 = sadd.s32 %s131, 1
    %s133 = scalar_select %p130, %s131, %s132
    %p136 = pneg %p130
    %p137 = scmp.eq.s32.totalorder %s11, 1
    %p138 = por %p136, %p137
    %p139 = scmp.ne.s32.totalorder %s131, %s134
    %p140 = scmp.eq.s32.totalorder %s11, 0
    %p141 = por %p139, %p140
    %p142 = scmp.ne.s32.totalorder %s131, %s134
    %p143 = scmp.eq.s32.totalorder %s16, 1
    %p144 = por %p142, %p143
    %p145 = scmp.ne.s32.totalorder %s134, %s135
    %p146 = scmp.eq.s32.totalorder %s16, 0
    %p147 = por %p145, %p146
    %p148 = scmp.ne.s32.totalorder %s134, %s135
    %p149 = scmp.eq.s32.totalorder %s17, 1
    %p150 = por %p148, %p149
    %p152 = scmp.ne.s32.totalorder %s135, %s151
    %p153 = scmp.eq.s32.totalorder %s17, 0
    %p154 = por %p152, %p153
    %p155 = scmp.le.s32.totalorder 1, %s11
    %p156 = scmp.lt.s32.totalorder %s11, 3
    %p157 = pnand %p155, %p156
    %p158 = pneg %p157
    // Predicated region
    $region9: #{_lambda_.9} parent=5 // pred_check
      _
    $region10: #{_lambda_.9} parent=5 // pred_check_branch
      %160 = sbr.rel (%p157) target = $region12
    $region11: #{_lambda_.9} parent=5 // pred_region
      %s161 = ssub.s32 %s11, 1
      // Predicated region
      $region13: #{_lambda_.9} parent=11 // pred_check
        %p162 = pneg %p58
      $region14: #{_lambda_.9} parent=11 // pred_check_branch
        %164 = sbr.rel (%p162) target = $region16
      $region15: #{_lambda_.9} parent=11 // pred_region
        _
      $region16: #{_lambda_.9} parent=11 // pred_fallthru
        _
      // Predicated region
      $region17: #{_lambda_.9} parent=11 // pred_check
        %p165 = pneg %p79
      $region18: #{_lambda_.9} parent=11 // pred_check_branch
        %167 = sbr.rel (%p165) target = $region20
      $region19: #{_lambda_.9} parent=11 // pred_region
        _
      $region20: #{_lambda_.9} parent=11 // pred_fallthru
        _
      // Predicated region
      $region21: #{_lambda_.9} parent=11 // pred_check
        %p168 = pneg %p100
      $region22: #{_lambda_.9} parent=11 // pred_check_branch
        %170 = sbr.rel (%p168) target = $region24
      $region23: #{_lambda_.9} parent=11 // pred_region
        _
      $region24: #{_lambda_.9} parent=11 // pred_fallthru
        _
      // Predicated region
      $region25: #{_lambda_.9} parent=11 // pred_check
        %p171 = pneg %p121
      $region26: #{_lambda_.9} parent=11 // pred_check_branch
        %173 = sbr.rel (%p171) target = $region28
      $region27: #{_lambda_.9} parent=11 // pred_region
        _
      $region28: #{_lambda_.9} parent=11 // pred_fallthru
        _
    $region12: #{_lambda_.9} parent=5 // pred_fallthru
      _
    %p174 = scmp.lt.s32.totalorder %s11, 2
    // Predicated region
    $region29: #{_lambda_.9} parent=5 // pred_check
      %p175 = pneg %p174
    $region30: #{_lambda_.9} parent=5 // pred_check_branch
      %177 = sbr.rel (%p175) target = $region32
    $region31: #{_lambda_.9} parent=5 // pred_region
      // Predicated region
      $region33: #{_lambda_.9} parent=31 // pred_check
        %p178 = pneg %p31
      $region34: #{_lambda_.9} parent=31 // pred_check_branch
        %180 = sbr.rel (%p178) target = $region36
      $region35: #{_lambda_.9} parent=31 // pred_region
        %s181 = smul.u32 8, %s11
        %p182 = scmp.lt.s32.totalorder %s181, 15
        %s183 = scalar_select %p182, %s181, 15
        %s184 = smul.addr %s183, 8
        %s185 = scalar_lea.vmem %s0, %s184
        %s186 = smul.u32 8, %s11
      $region36: #{_lambda_.9} parent=31 // pred_fallthru
        _
    $region32: #{_lambda_.9} parent=5 // pred_fallthru
      _
    %p187 = scmp.le.s32.totalorder 1, %s11
    %p188 = scmp.lt.s32.totalorder %s11, 3
    %p189 = pnand %p187, %p188
    %p190 = pneg %p189
    // Predicated region
    $region37: #{_lambda_.9} parent=5 // pred_check
      _
    $region38: #{_lambda_.9} parent=5 // pred_check_branch
      %192 = sbr.rel (%p189) target = $region40
    $region39: #{_lambda_.9} parent=5 // pred_region
      %s193 = ssub.s32 %s11, 1
      %s194 = smul.u32 8, %s16
      %p195 = scmp.lt.s32.totalorder %s194, 15
      %s196 = scalar_select %p195, %s194, 15
      %s197 = smul.addr %s196, 8
      %s198 = scalar_lea.vmem %s0, %s197
      %p199 = pneg %p37
      %p200 = pneg %p34
      %p201 = pneg %p58
      %p202 = pneg %p55
      %p203 = pneg %p79
      %p204 = pneg %p76
      %p205 = pneg %p100
      %p206 = pneg %p97
      %p207 = pneg %p121
      %p208 = pneg %p118
      %p209 = pneg %p147
      %p210 = pneg %p144
      %s211 = smul.u32 8, %s16
      %p212 = scmp.lt.s32.totalorder %s211, 15
      %s213 = scalar_select %p212, %s211, 15
      %s214 = smul.addr %s213, 3
      %s215 = smul.addr %s214, 4
      %s216 = scalar_lea.vmem %s5, %s215
      %s217 = smul.u32 8, %s16
      %p218 = scmp.lt.s32.totalorder %s217, 15
      %s219 = scalar_select %p218, %s217, 15
      %s220 = smul.addr %s219, 8
      %s221 = scalar_lea.vmem %s0, %s220
      %s222 = smul.u32 8, %s16
      %s223 = smul.u32 8, %s16
      %p224 = scmp.lt.s32.totalorder %s223, 15
      %s225 = scalar_select %p224, %s223, 15
      %s226 = smul.addr %s225, 3
      %s227 = smul.addr %s226, 4
      %s228 = scalar_lea.vmem %s5, %s227
      %s229 = smul.u32 8, %s16
      %v231 = vld [vmem:[%s221] sm:$0xff]
      %v232 = vld [vmem:[%s221 + $0x8] sm:$0xff]
      %v233 = vld [vmem:[%s221 + $0x10] sm:$0xff]
      %v234 = vld [vmem:[%s221 + $0x18] sm:$0xff]
      %v235 = vld [vmem:[%s221 + $0x20] sm:$0xff]
      %v236 = vld [vmem:[%s221 + $0x28] sm:$0xff]
      %v237 = vld [vmem:[%s221 + $0x30] sm:$0xff]
      %v238 = vld [vmem:[%s221 + $0x38] sm:$0xff]
      %v239 = vld [vmem:[%s1] sm:$0x1]
      %v240 = vld [vmem:[%s2] sm:$0x1]
      %241 = vadd.xlane.f32.xlu0 %v231
      %v242 = vpop.xlane.xlu0 %241
      %243 = vadd.xlane.f32.xlu0 %v232
      %v244 = vpop.xlane.xlu0 %243
      %245 = vadd.xlane.f32.xlu0 %v233
      %v246 = vpop.xlane.xlu0 %245
      %247 = vadd.xlane.f32.xlu0 %v234
      %v248 = vpop.xlane.xlu0 %247
      %249 = vadd.xlane.f32.xlu0 %v235
      %v250 = vpop.xlane.xlu0 %249
      %251 = vadd.xlane.f32.xlu0 %v236
      %v252 = vpop.xlane.xlu0 %251
      %253 = vadd.xlane.f32.xlu0 %v237
      %v254 = vpop.xlane.xlu0 %253
      %255 = vadd.xlane.f32.xlu0 %v238
      %v256 = vpop.xlane.xlu0 %255
      %v257 = vrcp.pop 128.0
      %v258 = vmul.f32 %v242, %v257
      %v259 = vmul.f32 %v244, %v257
      %v260 = vmul.f32 %v246, %v257
      %v261 = vmul.f32 %v248, %v257
      %v262 = vmul.f32 %v250, %v257
      %v263 = vmul.f32 %v252, %v257
      %v264 = vmul.f32 %v254, %v257
      %v265 = vmul.f32 %v256, %v257
      %v266 = vsub.f32 %v231, %v258
      %v267 = vsub.f32 %v232, %v259
      %v268 = vsub.f32 %v233, %v260
      %v269 = vsub.f32 %v234, %v261
      %v270 = vsub.f32 %v235, %v262
      %v271 = vsub.f32 %v236, %v263
      %v272 = vsub.f32 %v237, %v264
      %v273 = vsub.f32 %v238, %v265
      %v274 = vmul.f32 %v266, %v266
      %v275 = vmul.f32 %v267, %v267
      %v276 = vmul.f32 %v268, %v268
      %v277 = vmul.f32 %v269, %v269
      %v278 = vmul.f32 %v270, %v270
      %v279 = vmul.f32 %v271, %v271
      %v280 = vmul.f32 %v272, %v272
      %v281 = vmul.f32 %v273, %v273
      %282 = vadd.xlane.f32.xlu0 %v274
      %v283 = vpop.xlane.xlu0 %282
      %284 = vadd.xlane.f32.xlu0 %v275
      %v285 = vpop.xlane.xlu0 %284
      %286 = vadd.xlane.f32.xlu0 %v276
      %v287 = vpop.xlane.xlu0 %286
      %288 = vadd.xlane.f32.xlu0 %v277
      %v289 = vpop.xlane.xlu0 %288
      %290 = vadd.xlane.f32.xlu0 %v278
      %v291 = vpop.xlane.xlu0 %290
      %292 = vadd.xlane.f32.xlu0 %v279
      %v293 = vpop.xlane.xlu0 %292
      %294 = vadd.xlane.f32.xlu0 %v280
      %v295 = vpop.xlane.xlu0 %294
      %296 = vadd.xlane.f32.xlu0 %v281
      %v297 = vpop.xlane.xlu0 %296
      %v298 = vmul.f32 %v283, %v257
      %v299 = vmul.f32 %v285, %v257
      %v300 = vmul.f32 %v287, %v257
      %v301 = vmul.f32 %v289, %v257
      %v302 = vmul.f32 %v291, %v257
      %v303 = vmul.f32 %v293, %v257
      %v304 = vmul.f32 %v295, %v257
      %v305 = vmul.f32 %v297, %v257
      %v306 = vadd.f32 %v298, 1e-05
      %v307 = vadd.f32 %v299, 1e-05
      %v308 = vadd.f32 %v300, 1e-05
      %v309 = vadd.f32 %v301, 1e-05
      %v310 = vadd.f32 %v302, 1e-05
      %v311 = vadd.f32 %v303, 1e-05
      %v312 = vadd.f32 %v304, 1e-05
      %v313 = vadd.f32 %v305, 1e-05
      %v314 = vrsqrt.pop %v306
      %v315 = vrsqrt.pop %v307
      %v316 = vrsqrt.pop %v308
      %v317 = vrsqrt.pop %v309
      %v318 = vrsqrt.pop %v310
      %v319 = vrsqrt.pop %v311
      %v320 = vrsqrt.pop %v312
      %v321 = vrsqrt.pop %v313
      %v322 = vmul.f32 %v266, %v314
      %v323 = vmul.f32 %v267, %v315
      %v324 = vmul.f32 %v268, %v316
      %v325 = vmul.f32 %v269, %v317
      %v326 = vmul.f32 %v270, %v318
      %v327 = vmul.f32 %v271, %v319
      %v328 = vmul.f32 %v272, %v320
      %v329 = vmul.f32 %v273, %v321
      %v331 = vlaneseq
      %v332 = vshrl.u32 %v331, 7
      %v333 = vsub.s32 0, %v332
      %v334 = vrot.slane %v239, %v333
      %v336 = vmul.f32 %v322, %v334
      %v337 = vmul.f32 %v323, %v334
      %v338 = vmul.f32 %v324, %v334
      %v339 = vmul.f32 %v325, %v334
      %v340 = vmul.f32 %v326, %v334
      %v341 = vmul.f32 %v327, %v334
      %v342 = vmul.f32 %v328, %v334
      %v343 = vmul.f32 %v329, %v334
      %v345 = vlaneseq
      %v346 = vshrl.u32 %v345, 7
      %v347 = vsub.s32 0, %v346
      %v348 = vrot.slane %v240, %v347
      %v350 = vadd.f32 %v336, %v348
      %v351 = vadd.f32 %v337, %v348
      %v352 = vadd.f32 %v338, %v348
      %v353 = vadd.f32 %v339, %v348
      %v354 = vadd.f32 %v340, %v348
      %v355 = vadd.f32 %v341, %v348
      %v356 = vadd.f32 %v342, %v348
      %v357 = vadd.f32 %v343, %v348
      %v358 = vpack.c.bf16 %v351, %v350
      %v359 = vpack.c.bf16 %v353, %v352
      %v360 = vpack.c.bf16 %v355, %v354
      %v361 = vpack.c.bf16 %v357, %v356
      %v362 = vld [vmem:[%s3] sm:$0xff]
      %v363 = vld [vmem:[%s3 + $0x8] sm:$0xf]
      %v364 = vld [vmem:[%s3 + $0xc] sm:$0xff]
      %v365 = vld [vmem:[%s3 + $0x14] sm:$0xf]
      %v366 = vld [vmem:[%s3 + $0x18] sm:$0xff]
      %v367 = vld [vmem:[%s3 + $0x20] sm:$0xf]
      %v368 = vld [vmem:[%s3 + $0x24] sm:$0xff]
      %v369 = vld [vmem:[%s3 + $0x2c] sm:$0xf]
      %v370 = vld [vmem:[%s3 + $0x30] sm:$0xff]
      %v371 = vld [vmem:[%s3 + $0x38] sm:$0xf]
      %v372 = vld [vmem:[%s3 + $0x3c] sm:$0xff]
      %v373 = vld [vmem:[%s3 + $0x44] sm:$0xf]
      %v374 = vld [vmem:[%s3 + $0x48] sm:$0xff]
      %v375 = vld [vmem:[%s3 + $0x50] sm:$0xf]
      %v376 = vld [vmem:[%s3 + $0x54] sm:$0xff]
      %v377 = vld [vmem:[%s3 + $0x5c] sm:$0xf]
      %v378 = vld [vmem:[%s3 + $0x60] sm:$0xff]
      %v379 = vld [vmem:[%s3 + $0x68] sm:$0xf]
      %v380 = vld [vmem:[%s3 + $0x6c] sm:$0xff]
      %v381 = vld [vmem:[%s3 + $0x74] sm:$0xf]
      %v382 = vld [vmem:[%s3 + $0x78] sm:$0xff]
      %v383 = vld [vmem:[%s3 + $0x80] sm:$0xf]
      %v384 = vld [vmem:[%s3 + $0x84] sm:$0xff]
      %v385 = vld [vmem:[%s3 + $0x8c] sm:$0xf]
      %v386 = vld [vmem:[%s3 + $0x90] sm:$0xff]
      %v387 = vld [vmem:[%s3 + $0x98] sm:$0xf]
      %v388 = vld [vmem:[%s3 + $0x9c] sm:$0xff]
      %v389 = vld [vmem:[%s3 + $0xa4] sm:$0xf]
      %v390 = vld [vmem:[%s3 + $0xa8] sm:$0xff]
      %v391 = vld [vmem:[%s3 + $0xb0] sm:$0xf]
      %v392 = vld [vmem:[%s3 + $0xb4] sm:$0xff]
      %v393 = vld [vmem:[%s3 + $0xbc] sm:$0xf]
      %v394 = vld [vmem:[%s4] sm:$0x7]
      %v396 = vlaneseq
      %v397 = vshrl.u32 %v396, 7
      %v398 = vsub.s32 0, %v397
      %v399 = vrot.slane %v394, %v398
      %v400 = vlaneseq
      %v401 = vshrl.u32 %v400, 7
      %v402 = vsub.s32 1, %v401
      %v403 = vrot.slane %v394, %v402
      %v404 = vlaneseq
      %v405 = vshrl.u32 %v404, 7
      %v406 = vsub.s32 2, %v405
      %v407 = vrot.slane %v394, %v406
      %v443 = vunpack.c.l.b16 %v362
      %v444 = vunpack.c.h.b16 %v362
      %v445 = vunpack.c.l.b16 %v363
      %v446 = vunpack.c.l.b16 %v364
      %v447 = vunpack.c.h.b16 %v364
      %v448 = vunpack.c.l.b16 %v365
      %v449 = vunpack.c.l.b16 %v366
      %v450 = vunpack.c.h.b16 %v366
      %v451 = vunpack.c.l.b16 %v367
      %v452 = vunpack.c.l.b16 %v368
      %v453 = vunpack.c.h.b16 %v368
      %v454 = vunpack.c.l.b16 %v369
      %v455 = vunpack.c.l.b16 %v370
      %v456 = vunpack.c.h.b16 %v370
      %v457 = vunpack.c.l.b16 %v371
      %v458 = vunpack.c.l.b16 %v372
      %v459 = vunpack.c.h.b16 %v372
      %v460 = vunpack.c.l.b16 %v373
      %v461 = vunpack.c.l.b16 %v374
      %v462 = vunpack.c.h.b16 %v374
      %v463 = vunpack.c.l.b16 %v375
      %v464 = vunpack.c.l.b16 %v376
      %v465 = vunpack.c.h.b16 %v376
      %v466 = vunpack.c.l.b16 %v377
      %v467 = vunpack.c.l.b16 %v378
      %v468 = vunpack.c.h.b16 %v378
      %v469 = vunpack.c.l.b16 %v379
      %v470 = vunpack.c.l.b16 %v380
      %v471 = vunpack.c.h.b16 %v380
      %v472 = vunpack.c.l.b16 %v381
      %v473 = vunpack.c.l.b16 %v382
      %v474 = vunpack.c.h.b16 %v382
      %v475 = vunpack.c.l.b16 %v383
      %v476 = vunpack.c.l.b16 %v384
      %v477 = vunpack.c.h.b16 %v384
      %v478 = vunpack.c.l.b16 %v385
      %v479 = vunpack.c.l.b16 %v386
      %v480 = vunpack.c.h.b16 %v386
      %v481 = vunpack.c.l.b16 %v387
      %v482 = vunpack.c.l.b16 %v388
      %v483 = vunpack.c.h.b16 %v388
      %v484 = vunpack.c.l.b16 %v389
      %v485 = vunpack.c.l.b16 %v390
      %v486 = vunpack.c.h.b16 %v390
      %v487 = vunpack.c.l.b16 %v391
      %v488 = vunpack.c.l.b16 %v392
      %v489 = vunpack.c.h.b16 %v392
      %v490 = vunpack.c.l.b16 %v393
      %v491 = vpack.c.b16 %v446, %v443
      %v492 = vpack.c.b16 %v447, %v444
      %v493 = vpack.c.b16 %v448, %v445
      %v494 = vpack.c.b16 %v452, %v449
      %v495 = vpack.c.b16 %v453, %v450
      %v496 = vpack.c.b16 %v454, %v451
      %v497 = vpack.c.b16 %v458, %v455
      %v498 = vpack.c.b16 %v459, %v456
      %v499 = vpack.c.b16 %v460, %v457
      %v500 = vpack.c.b16 %v464, %v461
      %v501 = vpack.c.b16 %v465, %v462
      %v502 = vpack.c.b16 %v466, %v463
      %v503 = vpack.c.b16 %v470, %v467
      %v504 = vpack.c.b16 %v471, %v468
      %v505 = vpack.c.b16 %v472, %v469
      %v506 = vpack.c.b16 %v476, %v473
      %v507 = vpack.c.b16 %v477, %v474
      %v508 = vpack.c.b16 %v478, %v475
      %v509 = vpack.c.b16 %v482, %v479
      %v510 = vpack.c.b16 %v483, %v480
      %v511 = vpack.c.b16 %v484, %v481
      %v512 = vpack.c.b16 %v488, %v485
      %v513 = vpack.c.b16 %v489, %v486
      %v514 = vpack.c.b16 %v490, %v487
      %539 = vmatprep.subr.bf16.mxu0 %v513
      %540 = vmatpush1.bf16.msra.mxu0 %v512
      %541 = vmatprep.subr.bf16.mxu0 %v510
      %542 = vmatpush1.bf16.msra.mxu0 %v509
      %543 = vmatprep.subr.bf16.mxu0 %v507
      %544 = vmatpush1.bf16.msra.mxu0 %v506
      %545 = vmatprep.subr.bf16.mxu0 %v504
      %546 = vmatpush1.bf16.msra.mxu0 %v503
      %547 = vmatprep.subr.bf16.mxu0 %v501
      %548 = vmatpush1.bf16.msra.mxu0 %v500
      %549 = vmatprep.subr.bf16.mxu0 %v498
      %550 = vmatpush1.bf16.msra.mxu0 %v497
      %551 = vmatprep.subr.bf16.mxu0 %v495
      %552 = vmatpush1.bf16.msra.mxu0 %v494
      %553 = vmatprep.subr.bf16.mxu0 %v492
      %554 = vmatpush1.bf16.msra.mxu0 %v491
      %555 = vmatprep.subr.bf16.mxu0 0
      %556 = vmatpush2.bf16.msra.mxu0 0
      %557 = vmatprep.subr.bf16.mxu0 0
      %558 = vmatpush2.bf16.msra.mxu0 0
      %559 = vmatprep.subr.bf16.mxu0 0
      %560 = vmatpush2.bf16.msra.mxu0 0
      %561 = vmatprep.subr.bf16.mxu0 0
      %562 = vmatpush2.bf16.msra.mxu0 0
      %563 = vmatprep.subr.bf16.mxu0 0
      %564 = vmatpush2.bf16.msra.mxu0 0
      %565 = vmatprep.subr.bf16.mxu0 0
      %566 = vmatpush2.bf16.msra.mxu0 0
      %567 = vmatprep.subr.bf16.mxu0 0
      %568 = vmatpush2.bf16.msra.mxu0 0
      %569 = vmatprep.subr.bf16.mxu0 0
      %570 = vmatpush2.bf16.msra.mxu0 0
      %571 = vmatprep.mubr.bf16.mxu0 0
      %572 = vmatmul.mubr.bf16.gmra.mxu0 %v358
      %v573 = vpop.f32.mrf.mxu0
      %v574 = vadd.f32 %v399, %v573
      %v575 = vpop.f32.mrf.mxu0
      %v576 = vadd.f32 %v403, %v575
      %v577 = vpop.f32.mrf.mxu0
      %v578 = vadd.f32 %v399, %v577
      %v579 = vpop.f32.mrf.mxu0
      %v580 = vadd.f32 %v403, %v579
      %581 = vmatprep.mubr.bf16.mxu0 0
      %582 = vmatmul.mubr.bf16.gmra.mxu0 %v359
      %v583 = vpop.f32.mrf.mxu0
      %v584 = vadd.f32 %v399, %v583
      %v585 = vpop.f32.mrf.mxu0
      %v586 = vadd.f32 %v403, %v585
      %v587 = vpop.f32.mrf.mxu0
      %v588 = vadd.f32 %v399, %v587
      %v589 = vpop.f32.mrf.mxu0
      %v590 = vadd.f32 %v403, %v589
      %591 = vmatprep.mubr.bf16.mxu0 0
      %592 = vmatmul.mubr.bf16.gmra.mxu0 %v360
      %v593 = vpop.f32.mrf.mxu0
      %v594 = vadd.f32 %v399, %v593
      %v595 = vpop.f32.mrf.mxu0
      %v596 = vadd.f32 %v403, %v595
      %v597 = vpop.f32.mrf.mxu0
      %v598 = vadd.f32 %v399, %v597
      %v599 = vpop.f32.mrf.mxu0
      %v600 = vadd.f32 %v403, %v599
      %601 = vmatprep.mubr.bf16.mxu0 0
      %602 = vmatmul.mubr.bf16.gmra.mxu0 %v361
      %v603 = vpop.f32.mrf.mxu0
      %v604 = vadd.f32 %v399, %v603
      %v605 = vpop.f32.mrf.mxu0
      %v606 = vadd.f32 %v403, %v605
      %v607 = vpop.f32.mrf.mxu0
      %v608 = vadd.f32 %v399, %v607
      %v609 = vpop.f32.mrf.mxu0
      %v610 = vadd.f32 %v403, %v609
      %611 = vdwg.mxu0
      %612 = vmatprep.subr.bf16.mxu0 0
      %613 = vmatpush1.bf16.msra.mxu0 %v514
      %614 = vmatprep.subr.bf16.mxu0 0
      %615 = vmatpush1.bf16.msra.mxu0 %v511
      %616 = vmatprep.subr.bf16.mxu0 0
      %617 = vmatpush1.bf16.msra.mxu0 %v508
      %618 = vmatprep.subr.bf16.mxu0 0
      %619 = vmatpush1.bf16.msra.mxu0 %v505
      %620 = vmatprep.subr.bf16.mxu0 0
      %621 = vmatpush1.bf16.msra.mxu0 %v502
      %622 = vmatprep.subr.bf16.mxu0 0
      %623 = vmatpush1.bf16.msra.mxu0 %v499
      %624 = vmatprep.subr.bf16.mxu0 0
      %625 = vmatpush1.bf16.msra.mxu0 %v496
      %626 = vmatprep.subr.bf16.mxu0 0
      %627 = vmatpush1.bf16.msra.mxu0 %v493
      %628 = vmatprep.subr.bf16.mxu0 0
      %629 = vmatpush2.bf16.msra.mxu0 0
      %630 = vmatprep.subr.bf16.mxu0 0
      %631 = vmatpush2.bf16.msra.mxu0 0
      %632 = vmatprep.subr.bf16.mxu0 0
      %633 = vmatpush2.bf16.msra.mxu0 0
      %634 = vmatprep.subr.bf16.mxu0 0
      %635 = vmatpush2.bf16.msra.mxu0 0
      %636 = vmatprep.subr.bf16.mxu0 0
      %637 = vmatpush2.bf16.msra.mxu0 0
      %638 = vmatprep.subr.bf16.mxu0 0
      %639 = vmatpush2.bf16.msra.mxu0 0
      %640 = vmatprep.subr.bf16.mxu0 0
      %641 = vmatpush2.bf16.msra.mxu0 0
      %642 = vmatprep.subr.bf16.mxu0 0
      %643 = vmatpush2.bf16.msra.mxu0 0
      %644 = vmatprep.mubr.bf16.mxu0 0
      %645 = vmatmul.mubr.bf16.gmra.mxu0 %v358
      %v646 = vpop.f32.mrf.mxu0
      %v647 = vadd.f32 %v407, %v646
      %v648 = vpop.f32.mrf.mxu0
      %v649 = vpop.f32.mrf.mxu0
      %v650 = vadd.f32 %v407, %v649
      %v651 = vpop.f32.mrf.mxu0
      %652 = vmatprep.mubr.bf16.mxu0 0
      %653 = vmatmul.mubr.bf16.gmra.mxu0 %v359
      %v654 = vpop.f32.mrf.mxu0
      %v655 = vadd.f32 %v407, %v654
      %v656 = vpop.f32.mrf.mxu0
      %v657 = vpop.f32.mrf.mxu0
      %v658 = vadd.f32 %v407, %v657
      %v659 = vpop.f32.mrf.mxu0
      %660 = vmatprep.mubr.bf16.mxu0 0
      %661 = vmatmul.mubr.bf16.gmra.mxu0 %v360
      %v662 = vpop.f32.mrf.mxu0
      %v663 = vadd.f32 %v407, %v662
      %v664 = vpop.f32.mrf.mxu0
      %v665 = vpop.f32.mrf.mxu0
      %v666 = vadd.f32 %v407, %v665
      %v667 = vpop.f32.mrf.mxu0
      %668 = vmatprep.mubr.bf16.mxu0 0
      %669 = vmatmul.mubr.bf16.gmra.mxu0 %v361
      %v670 = vpop.f32.mrf.mxu0
      %v671 = vadd.f32 %v407, %v670
      %v672 = vpop.f32.mrf.mxu0
      %v673 = vpop.f32.mrf.mxu0
      %v674 = vadd.f32 %v407, %v673
      %v675 = vpop.f32.mrf.mxu0
      %676 = vdwg.mxu0
      %v677 = vpack.c.bf16 %v578, %v574
      %v678 = vpack.c.bf16 %v580, %v576
      %v679 = vpack.c.bf16 %v650, %v647
      %v680 = vpack.c.bf16 %v588, %v584
      %v681 = vpack.c.bf16 %v590, %v586
      %v682 = vpack.c.bf16 %v658, %v655
      %v683 = vpack.c.bf16 %v598, %v594
      %v684 = vpack.c.bf16 %v600, %v596
      %v685 = vpack.c.bf16 %v666, %v663
      %v686 = vpack.c.bf16 %v608, %v604
      %v687 = vpack.c.bf16 %v610, %v606
      %v688 = vpack.c.bf16 %v674, %v671
      %v701 = vunpack.c.l.b16 %v677
      %v702 = vunpack.c.l.b16 %v678
      %v703 = vunpack.c.l.b16 %v679
      %v704 = vunpack.c.h.b16 %v677
      %v705 = vunpack.c.h.b16 %v678
      %v706 = vunpack.c.h.b16 %v679
      %v707 = vunpack.c.l.b16 %v680
      %v708 = vunpack.c.l.b16 %v681
      %v709 = vunpack.c.l.b16 %v682
      %v710 = vunpack.c.h.b16 %v680
      %v711 = vunpack.c.h.b16 %v681
      %v712 = vunpack.c.h.b16 %v682
      %v713 = vunpack.c.l.b16 %v683
      %v714 = vunpack.c.l.b16 %v684
      %v715 = vunpack.c.l.b16 %v685
      %v716 = vunpack.c.h.b16 %v683
      %v717 = vunpack.c.h.b16 %v684
      %v718 = vunpack.c.h.b16 %v685
      %v719 = vunpack.c.l.b16 %v686
      %v720 = vunpack.c.l.b16 %v687
      %v721 = vunpack.c.l.b16 %v688
      %v722 = vunpack.c.h.b16 %v686
      %v723 = vunpack.c.h.b16 %v687
      %v724 = vunpack.c.h.b16 %v688
      %v725 = vpack.c.b16 %v702, %v701
      %v726 = vpack.c.b16 %v703, %v703
      %v727 = vpack.c.b16 %v705, %v704
      %v728 = vpack.c.b16 %v706, %v706
      %v729 = vpack.c.b16 %v708, %v707
      %v730 = vpack.c.b16 %v709, %v709
      %v731 = vpack.c.b16 %v711, %v710
      %v732 = vpack.c.b16 %v712, %v712
      %v733 = vpack.c.b16 %v714, %v713
      %v734 = vpack.c.b16 %v715, %v715
      %v735 = vpack.c.b16 %v717, %v716
      %v736 = vpack.c.b16 %v718, %v718
      %v737 = vpack.c.b16 %v720, %v719
      %v738 = vpack.c.b16 %v721, %v721
      %v739 = vpack.c.b16 %v723, %v722
      %v740 = vpack.c.b16 %v724, %v724
      %757 = vst [vmem:[%s228] sm:$0xff] %v725
      %758 = vst [vmem:[%s228 + $0x8] sm:$0xf] %v726
      %759 = vst [vmem:[%s228 + $0xc] sm:$0xff] %v727
      %760 = vst [vmem:[%s228 + $0x14] sm:$0xf] %v728
      %761 = vst [vmem:[%s228 + $0x18] sm:$0xff] %v729
      %762 = vst [vmem:[%s228 + $0x20] sm:$0xf] %v730
      %763 = vst [vmem:[%s228 + $0x24] sm:$0xff] %v731
      %764 = vst [vmem:[%s228 + $0x2c] sm:$0xf] %v732
      %765 = vst [vmem:[%s228 + $0x30] sm:$0xff] %v733
      %766 = vst [vmem:[%s228 + $0x38] sm:$0xf] %v734
      %767 = vst [vmem:[%s228 + $0x3c] sm:$0xff] %v735
      %768 = vst [vmem:[%s228 + $0x44] sm:$0xf] %v736
      %769 = vst [vmem:[%s228 + $0x48] sm:$0xff] %v737
      %770 = vst [vmem:[%s228 + $0x50] sm:$0xf] %v738
      %771 = vst [vmem:[%s228 + $0x54] sm:$0xff] %v739
      %772 = vst [vmem:[%s228 + $0x5c] sm:$0xf] %v740
      %s773 = smul.u32 8, %s16
      %p774 = scmp.lt.s32.totalorder %s773, 15
      %s775 = scalar_select %p774, %s773, 15
      %s776 = smul.addr %s775, 3
      %s777 = smul.addr %s776, 4
      %s778 = scalar_lea.vmem %s5, %s777
      // Predicated region
      $region41: #{_lambda_.9} parent=39 // pred_check
        %p779 = pneg %p144
      $region42: #{_lambda_.9} parent=39 // pred_check_branch
        %781 = sbr.rel (%p779) target = $region44
      $region43: #{_lambda_.9} parent=39 // pred_region
        %s782 = smul.u32 8, %s16
      $region44: #{_lambda_.9} parent=39 // pred_fallthru
        _
    $region40: #{_lambda_.9} parent=5 // pred_fallthru
      _
    %p783 = scmp.le.s32.totalorder 2, %s11
    // Predicated region
    $region45: #{_lambda_.9} parent=5 // pred_check
      %p784 = pneg %p783
    $region46: #{_lambda_.9} parent=5 // pred_check_branch
      %786 = sbr.rel (%p784) target = $region48
    $region47: #{_lambda_.9} parent=5 // pred_region
      %s787 = ssub.s32 %s11, 2
      // Predicated region
      $region49: #{_lambda_.9} parent=47 // pred_check
        %p788 = pneg %p150
      $region50: #{_lambda_.9} parent=47 // pred_check_branch
        %790 = sbr.rel (%p788) target = $region52
      $region51: #{_lambda_.9} parent=47 // pred_region
        %s791 = smul.u32 8, %s17
        %p792 = scmp.lt.s32.totalorder %s791, 15
        %s793 = scalar_select %p792, %s791, 15
        %s794 = smul.addr %s793, 3
        %s795 = smul.addr %s794, 4
        %s796 = scalar_lea.vmem %s5, %s795
      $region52: #{_lambda_.9} parent=47 // pred_fallthru
        _
    $region48: #{_lambda_.9} parent=5 // pred_fallthru
      _
  $region6: #{_lambda_.9} parent=0 // loop_footer
    %s15 = sadd.s32 1, %s11
  $region7: #{_lambda_.9} parent=0 // loop_footer_branch
    %10 = sbr.rel target = $region3
  $region8: #{_lambda_.9} parent=0 // loop_exit
    _

// kernel: _lambda_.10
$region0: #{_lambda_.10}
  #allocation0 [shape = 'u32[]', space=smem, size = 0x4, offset = 0x4, fixed_abs, tag = 'smem constant byte address 0x4 - core index']
  #allocation1 [shape = 'u32[144,128]{1,0:T(1,128)}', space=vmem, size = 0x12000, scoped, tag = 'internal scratch']
  #allocation2 [shape = 'f32[64,1]{1,0:T(8,128)}', space=vmem, size = 0x8000, scoped, tag = 'scratch operand']
  #allocation3 [shape = 'f32[64,1]{1,0:T(8,128)}', space=vmem, size = 0x8000, scoped, tag = 'scratch operand']
  #allocation4 [shape = 'f32[64,32]{1,0:T(8,128)}', space=vmem, size = 0x8000, scoped, tag = 'scratch operand']
  %s0 = inlined_call_operand.vmem [shape: bf16[2,4,64,32], index: 0, kind: input, shape index: {}]
  %s1 = inlined_call_operand.vmem [shape: bf16[2,4,64,32], index: 1, kind: input, shape index: {}]
  %s2 = inlined_call_operand.vmem [shape: bf16[2,4,64,32], index: 2, kind: input, shape index: {}]
  %s3 = inlined_call_operand.vmem [shape: bf16[2,4,64,32], index: 3, kind: output, shape index: {}]
  %s4 = sld [smem:[#allocation0]]
  $region53: #{_lambda_.10} parent=0
    _
  %s6 = ssub.s32 1, %s4
  %s7 = scalar_select 0, %s6, %s4
  loop: start=0, step=1, limit=18
  $region2: #{_lambda_.10} parent=0 // loop_pre_header
    _
  $region3: #{_lambda_.10} parent=0 // loop_header
    %s9 = sphi 0, %s13
    %p10 = scmp.ge.s32.totalorder %s9, 18
    %s16 = sphi 0, %s35
    %s17 = sphi 0, %s31
    %s18 = sphi 0, %s27
    %s19 = sphi 0, %s16
    %s20 = sphi 0, %s17
    %s21 = sphi 0, %s18
    %s22 = sphi 0, %s19
    %s23 = sphi 0, %s20
    %s24 = sphi 0, %s21
    %s40 = sphi 0, %s42
    %s43 = sphi 0, %s40
    %s44 = sphi 0, %s43
    %s60 = sphi 0, %s44
    %s70 = sphi 0, %s72
    %s73 = sphi 0, %s70
    %s74 = sphi 0, %s73
    %s90 = sphi 0, %s74
    %s100 = sphi 0, %s102
    %s103 = sphi 0, %s100
    %s104 = sphi 0, %s103
    %s120 = sphi 0, %s104
    %s128 = sphi 0, %s130
    %s131 = sphi 0, %s128
    %s132 = sphi 0, %s131
    %s148 = sphi 0, %s132
  $region4: #{_lambda_.10} parent=0 // loop_header_branch
    %12 = sbr.rel (%p10) target = $region8
  $region5: #{_lambda_.10} parent=0 // loop_body
    %s14 = ssub.s32 %s9, 1
    %s15 = ssub.s32 %s9, 2
    %s25 = sadd.s32 1, %s18
    %p26 = scmp.ge.s32.totalorder %s25, 2
    %s27 = scalar_select %p26, 0, %s25
    %s28 = sadd.s32 1, %s17
    %s29 = scalar_select %p26, %s28, %s17
    %p30 = scmp.ge.s32.totalorder %s29, 4
    %s31 = scalar_select %p30, 0, %s29
    %s32 = sadd.s32 1, %s16
    %s33 = scalar_select %p30, %s32, %s16
    %p34 = scmp.ge.s32.totalorder %s33, 2
    %s35 = scalar_select %p34, 0, %s33
    %s36 = ssub.s32 %s16, %s35
    %s37 = ssub.s32 %s17, %s31
    %s38 = sor.u32 %s36, %s37
    %p39 = scmp.eq.s32.totalorder %s38, 0
    %s41 = sadd.s32 %s40, 1
    %s42 = scalar_select %p39, %s40, %s41
    %p45 = pneg %p39
    %p46 = scmp.eq.s32.totalorder %s9, 15
    %p47 = por %p45, %p46
    %p48 = scmp.ne.s32.totalorder %s40, %s43
    %p49 = scmp.eq.s32.totalorder %s9, 0
    %p50 = por %p48, %p49
    %p51 = scmp.ne.s32.totalorder %s40, %s43
    %p52 = scmp.eq.s32.totalorder %s14, 15
    %p53 = por %p51, %p52
    %p54 = scmp.ne.s32.totalorder %s43, %s44
    %p55 = scmp.eq.s32.totalorder %s14, 0
    %p56 = por %p54, %p55
    %p57 = scmp.ne.s32.totalorder %s43, %s44
    %p58 = scmp.eq.s32.totalorder %s15, 15
    %p59 = por %p57, %p58
    %p61 = scmp.ne.s32.totalorder %s44, %s60
    %p62 = scmp.eq.s32.totalorder %s15, 0
    %p63 = por %p61, %p62
    %s64 = ssub.s32 %s16, %s35
    %s65 = ssub.s32 %s17, %s31
    %s66 = sor.u32 %s64, %s65
    %s67 = ssub.s32 %s18, %s27
    %s68 = sor.u32 %s66, %s67
    %p69 = scmp.eq.s32.totalorder %s68, 0
    %s71 = sadd.s32 %s70, 1
    %s72 = scalar_select %p69, %s70, %s71
    %p75 = pneg %p69
    %p76 = scmp.eq.s32.totalorder %s9, 15
    %p77 = por %p75, %p76
    %p78 = scmp.ne.s32.totalorder %s70, %s73
    %p79 = scmp.eq.s32.totalorder %s9, 0
    %p80 = por %p78, %p79
    %p81 = scmp.ne.s32.totalorder %s70, %s73
    %p82 = scmp.eq.s32.totalorder %s14, 15
    %p83 = por %p81, %p82
    %p84 = scmp.ne.s32.totalorder %s73, %s74
    %p85 = scmp.eq.s32.totalorder %s14, 0
    %p86 = por %p84, %p85
    %p87 = scmp.ne.s32.totalorder %s73, %s74
    %p88 = scmp.eq.s32.totalorder %s15, 15
    %p89 = por %p87, %p88
    %p91 = scmp.ne.s32.totalorder %s74, %s90
    %p92 = scmp.eq.s32.totalorder %s15, 0
    %p93 = por %p91, %p92
    %s94 = ssub.s32 %s16, %s35
    %s95 = ssub.s32 %s17, %s31
    %s96 = sor.u32 %s94, %s95
    %s97 = ssub.s32 %s18, %s27
    %s98 = sor.u32 %s96, %s97
    %p99 = scmp.eq.s32.totalorder %s98, 0
    %s101 = sadd.s32 %s100, 1
    %s102 = scalar_select %p99, %s100, %s101
    %p105 = pneg %p99
    %p106 = scmp.eq.s32.totalorder %s9, 15
    %p107 = por %p105, %p106
    %p108 = scmp.ne.s32.totalorder %s100, %s103
    %p109 = scmp.eq.s32.totalorder %s9, 0
    %p110 = por %p108, %p109
    %p111 = scmp.ne.s32.totalorder %s100, %s103
    %p112 = scmp.eq.s32.totalorder %s14, 15
    %p113 = por %p111, %p112
    %p114 = scmp.ne.s32.totalorder %s103, %s104
    %p115 = scmp.eq.s32.totalorder %s14, 0
    %p116 = por %p114, %p115
    %p117 = scmp.ne.s32.totalorder %s103, %s104
    %p118 = scmp.eq.s32.totalorder %s15, 15
    %p119 = por %p117, %p118
    %p121 = scmp.ne.s32.totalorder %s104, %s120
    %p122 = scmp.eq.s32.totalorder %s15, 0
    %p123 = por %p121, %p122
    %s124 = ssub.s32 %s16, %s35
    %s125 = ssub.s32 %s17, %s31
    %s126 = sor.u32 %s124, %s125
    %p127 = scmp.eq.s32.totalorder %s126, 0
    %s129 = sadd.s32 %s128, 1
    %s130 = scalar_select %p127, %s128, %s129
    %p133 = pneg %p127
    %p134 = scmp.eq.s32.totalorder %s9, 15
    %p135 = por %p133, %p134
    %p136 = scmp.ne.s32.totalorder %s128, %s131
    %p137 = scmp.eq.s32.totalorder %s9, 0
    %p138 = por %p136, %p137
    %p139 = scmp.ne.s32.totalorder %s128, %s131
    %p140 = scmp.eq.s32.totalorder %s14, 15
    %p141 = por %p139, %p140
    %p142 = scmp.ne.s32.totalorder %s131, %s132
    %p143 = scmp.eq.s32.totalorder %s14, 0
    %p144 = por %p142, %p143
    %p145 = scmp.ne.s32.totalorder %s131, %s132
    %p146 = scmp.eq.s32.totalorder %s15, 15
    %p147 = por %p145, %p146
    %p149 = scmp.ne.s32.totalorder %s132, %s148
    %p150 = scmp.eq.s32.totalorder %s15, 0
    %p151 = por %p149, %p150
    %p152 = scmp.le.s32.totalorder 1, %s9
    %p153 = scmp.lt.s32.totalorder %s9, 17
    %p154 = pnand %p152, %p153
    %p155 = pneg %p154
    // Predicated region
    $region9: #{_lambda_.10} parent=5 // pred_check
      _
    $region10: #{_lambda_.10} parent=5 // pred_check_branch
      %157 = sbr.rel (%p154) target = $region12
    $region11: #{_lambda_.10} parent=5 // pred_region
      %s158 = ssub.s32 %s9, 1
    $region12: #{_lambda_.10} parent=5 // pred_fallthru
      _
    %p159 = scmp.lt.s32.totalorder %s9, 16
    // Predicated region
    $region13: #{_lambda_.10} parent=5 // pred_check
      %p160 = pneg %p159
    $region14: #{_lambda_.10} parent=5 // pred_check_branch
      %162 = sbr.rel (%p160) target = $region16
    $region15: #{_lambda_.10} parent=5 // pred_region
      // Predicated region
      $region17: #{_lambda_.10} parent=15 // pred_check
        %p163 = pneg %p50
      $region18: #{_lambda_.10} parent=15 // pred_check_branch
        %165 = sbr.rel (%p163) target = $region20
      $region19: #{_lambda_.10} parent=15 // pred_region
        %p166 = scmp.lt.s32.totalorder %s16, 1
        %s167 = scalar_select %p166, %s16, 1
        %p168 = scmp.lt.s32.totalorder %s17, 3
        %s169 = scalar_select %p168, %s17, 3
        %s170 = smul.addr %s169, 8
        %s171 = smul.addr %s167, 32
        %s172 = sadd.s32 %s170, %s171
        %s173 = smul.addr %s172, 4
        %s174 = scalar_lea.vmem %s0, %s173
      $region20: #{_lambda_.10} parent=15 // pred_fallthru
        _
      // Predicated region
      $region21: #{_lambda_.10} parent=15 // pred_check
        %p175 = pneg %p80
      $region22: #{_lambda_.10} parent=15 // pred_check_branch
        %177 = sbr.rel (%p175) target = $region24
      $region23: #{_lambda_.10} parent=15 // pred_region
        %s178 = smul.u32 4, %s18
        %p179 = scmp.lt.s32.totalorder %s16, 1
        %s180 = scalar_select %p179, %s16, 1
        %p181 = scmp.lt.s32.totalorder %s17, 3
        %s182 = scalar_select %p181, %s17, 3
        %p183 = scmp.lt.s32.totalorder %s178, 7
        %s184 = scalar_select %p183, %s178, 7
        %s185 = smul.addr %s182, 8
        %s186 = sadd.s32 %s184, %s185
        %s187 = smul.addr %s180, 32
        %s188 = sadd.s32 %s186, %s187
        %s189 = smul.addr %s188, 4
        %s190 = scalar_lea.vmem %s1, %s189
        %s191 = smul.u32 4, %s18
      $region24: #{_lambda_.10} parent=15 // pred_fallthru
        _
      // Predicated region
      $region25: #{_lambda_.10} parent=15 // pred_check
        %p192 = pneg %p110
      $region26: #{_lambda_.10} parent=15 // pred_check_branch
        %194 = sbr.rel (%p192) target = $region28
      $region27: #{_lambda_.10} parent=15 // pred_region
        %s195 = smul.u32 4, %s18
        %p196 = scmp.lt.s32.totalorder %s16, 1
        %s197 = scalar_select %p196, %s16, 1
        %p198 = scmp.lt.s32.totalorder %s17, 3
        %s199 = scalar_select %p198, %s17, 3
        %p200 = scmp.lt.s32.totalorder %s195, 7
        %s201 = scalar_select %p200, %s195, 7
        %s202 = smul.addr %s199, 8
        %s203 = sadd.s32 %s201, %s202
        %s204 = smul.addr %s197, 32
        %s205 = sadd.s32 %s203, %s204
        %s206 = smul.addr %s205, 4
        %s207 = scalar_lea.vmem %s2, %s206
        %s208 = smul.u32 4, %s18
      $region28: #{_lambda_.10} parent=15 // pred_fallthru
        _
    $region16: #{_lambda_.10} parent=5 // pred_fallthru
      _
    %p209 = scmp.le.s32.totalorder 1, %s9
    %p210 = scmp.lt.s32.totalorder %s9, 17
    %p211 = pnand %p209, %p210
    %p212 = pneg %p211
    // Predicated region
    $region29: #{_lambda_.10} parent=5 // pred_check
      _
    $region30: #{_lambda_.10} parent=5 // pred_check_branch
      %214 = sbr.rel (%p211) target = $region32
    $region31: #{_lambda_.10} parent=5 // pred_region
      %s215 = ssub.s32 %s9, 1
      %p216 = scmp.lt.s32.totalorder %s19, 1
      %s217 = scalar_select %p216, %s19, 1
      %p218 = scmp.lt.s32.totalorder %s20, 3
      %s219 = scalar_select %p218, %s20, 3
      %s220 = smul.addr %s219, 8
      %s221 = smul.addr %s217, 32
      %s222 = sadd.s32 %s220, %s221
      %s223 = smul.addr %s222, 4
      %s224 = scalar_lea.vmem %s0, %s223
      %p225 = pneg %p56
      %p226 = pneg %p53
      %s227 = smul.u32 4, %s21
      %p228 = scmp.lt.s32.totalorder %s19, 1
      %s229 = scalar_select %p228, %s19, 1
      %p230 = scmp.lt.s32.totalorder %s20, 3
      %s231 = scalar_select %p230, %s20, 3
      %p232 = scmp.lt.s32.totalorder %s227, 7
      %s233 = scalar_select %p232, %s227, 7
      %s234 = smul.addr %s231, 8
      %s235 = sadd.s32 %s233, %s234
      %s236 = smul.addr %s229, 32
      %s237 = sadd.s32 %s235, %s236
      %s238 = smul.addr %s237, 4
      %s239 = scalar_lea.vmem %s1, %s238
      %p240 = pneg %p86
      %p241 = pneg %p83
      %s242 = smul.u32 4, %s21
      %p243 = scmp.lt.s32.totalorder %s19, 1
      %s244 = scalar_select %p243, %s19, 1
      %p245 = scmp.lt.s32.totalorder %s20, 3
      %s246 = scalar_select %p245, %s20, 3
      %p247 = scmp.lt.s32.totalorder %s242, 7
      %s248 = scalar_select %p247, %s242, 7
      %s249 = smul.addr %s246, 8
      %s250 = sadd.s32 %s248, %s249
      %s251 = smul.addr %s244, 32
      %s252 = sadd.s32 %s250, %s251
      %s253 = smul.addr %s252, 4
      %s254 = scalar_lea.vmem %s2, %s253
      %p255 = pneg %p116
      %p256 = pneg %p113
      %p257 = pneg %p144
      %p258 = pneg %p141
      %p259 = scmp.lt.s32.totalorder %s19, 1
      %s260 = scalar_select %p259, %s19, 1
      %p261 = scmp.lt.s32.totalorder %s20, 3
      %s262 = scalar_select %p261, %s20, 3
      %s263 = smul.addr %s262, 8
      %s264 = smul.addr %s260, 32
      %s265 = sadd.s32 %s263, %s264
      %s266 = smul.addr %s265, 4
      %s267 = scalar_lea.vmem %s3, %s266
      %p268 = scmp.lt.s32.totalorder %s19, 1
      %s269 = scalar_select %p268, %s19, 1
      %p270 = scmp.lt.s32.totalorder %s20, 3
      %s271 = scalar_select %p270, %s20, 3
      %s272 = smul.addr %s271, 8
      %s273 = smul.addr %s269, 32
      %s274 = sadd.s32 %s272, %s273
      %s275 = smul.addr %s274, 4
      %s276 = scalar_lea.vmem %s0, %s275
      %s277 = smul.u32 4, %s21
      %p278 = scmp.lt.s32.totalorder %s19, 1
      %s279 = scalar_select %p278, %s19, 1
      %p280 = scmp.lt.s32.totalorder %s20, 3
      %s281 = scalar_select %p280, %s20, 3
      %p282 = scmp.lt.s32.totalorder %s277, 7
      %s283 = scalar_select %p282, %s277, 7
      %s284 = smul.addr %s281, 8
      %s285 = sadd.s32 %s283, %s284
      %s286 = smul.addr %s279, 32
      %s287 = sadd.s32 %s285, %s286
      %s288 = smul.addr %s287, 4
      %s289 = scalar_lea.vmem %s1, %s288
      %s290 = smul.u32 4, %s21
      %s291 = smul.u32 4, %s21
      %p292 = scmp.lt.s32.totalorder %s19, 1
      %s293 = scalar_select %p292, %s19, 1
      %p294 = scmp.lt.s32.totalorder %s20, 3
      %s295 = scalar_select %p294, %s20, 3
      %p296 = scmp.lt.s32.totalorder %s291, 7
      %s297 = scalar_select %p296, %s291, 7
      %s298 = smul.addr %s295, 8
      %s299 = sadd.s32 %s297, %s298
      %s300 = smul.addr %s293, 32
      %s301 = sadd.s32 %s299, %s300
      %s302 = smul.addr %s301, 4
      %s303 = scalar_lea.vmem %s2, %s302
      %s304 = smul.u32 4, %s21
      %p305 = scmp.lt.s32.totalorder %s19, 1
      %s306 = scalar_select %p305, %s19, 1
      %p307 = scmp.lt.s32.totalorder %s20, 3
      %s308 = scalar_select %p307, %s20, 3
      %s309 = smul.addr %s308, 8
      %s310 = smul.addr %s306, 32
      %s311 = sadd.s32 %s309, %s310
      %s312 = smul.addr %s311, 4
      %s313 = scalar_lea.vmem %s3, %s312
      %p315 = scmp.eq.s32.totalorder %s21, 0
      // Predicated region
      $region33: #{_lambda_.10} parent=31 // pred_check
        %p316 = pneg %p315
      $region34: #{_lambda_.10} parent=31 // pred_check_branch
        %318 = sbr.rel (%p316) target = $region36
      $region35: #{_lambda_.10} parent=31 // pred_region
        %vm319 = vcmask 7168
        %320 = vst.msk [vmem:[#allocation2] sm:$0xff] %vm319, -inf
        %321 = vst.msk [vmem:[#allocation2 + $0x8] sm:$0xff] %vm319, -inf
        %322 = vst.msk [vmem:[#allocation2 + $0x10] sm:$0xff] %vm319, -inf
        %323 = vst.msk [vmem:[#allocation2 + $0x18] sm:$0xff] %vm319, -inf
        %324 = vst.msk [vmem:[#allocation2 + $0x20] sm:$0xff] %vm319, -inf
        %325 = vst.msk [vmem:[#allocation2 + $0x28] sm:$0xff] %vm319, -inf
        %326 = vst.msk [vmem:[#allocation2 + $0x30] sm:$0xff] %vm319, -inf
        %327 = vst.msk [vmem:[#allocation2 + $0x38] sm:$0xff] %vm319, -inf
        %328 = vst.msk [vmem:[#allocation3] sm:$0xff] %vm319, 0.0
        %329 = vst.msk [vmem:[#allocation3 + $0x8] sm:$0xff] %vm319, 0.0
        %330 = vst.msk [vmem:[#allocation3 + $0x10] sm:$0xff] %vm319, 0.0
        %331 = vst.msk [vmem:[#allocation3 + $0x18] sm:$0xff] %vm319, 0.0
        %332 = vst.msk [vmem:[#allocation3 + $0x20] sm:$0xff] %vm319, 0.0
        %333 = vst.msk [vmem:[#allocation3 + $0x28] sm:$0xff] %vm319, 0.0
        %334 = vst.msk [vmem:[#allocation3 + $0x30] sm:$0xff] %vm319, 0.0
        %335 = vst.msk [vmem:[#allocation3 + $0x38] sm:$0xff] %vm319, 0.0
        %vm336 = vcmask 261120
        %337 = vst.msk [vmem:[#allocation4] sm:$0xff] %vm336, 0.0
        %338 = vst.msk [vmem:[#allocation4 + $0x8] sm:$0xff] %vm336, 0.0
        %339 = vst.msk [vmem:[#allocation4 + $0x10] sm:$0xff] %vm336, 0.0
        %340 = vst.msk [vmem:[#allocation4 + $0x18] sm:$0xff] %vm336, 0.0
        %341 = vst.msk [vmem:[#allocation4 + $0x20] sm:$0xff] %vm336, 0.0
        %342 = vst.msk [vmem:[#allocation4 + $0x28] sm:$0xff] %vm336, 0.0
        %343 = vst.msk [vmem:[#allocation4 + $0x30] sm:$0xff] %vm336, 0.0
        %344 = vst.msk [vmem:[#allocation4 + $0x38] sm:$0xff] %vm336, 0.0
      $region36: #{_lambda_.10} parent=31 // pred_fallthru
        _
      %v345 = vld [vmem:[%s276] sm:$0xf]
      %v346 = vld [vmem:[%s276 + $0x4] sm:$0xf]
      %v347 = vld [vmem:[%s276 + $0x8] sm:$0xf]
      %v348 = vld [vmem:[%s276 + $0xc] sm:$0xf]
      %v349 = vld [vmem:[%s276 + $0x10] sm:$0xf]
      %v350 = vld [vmem:[%s276 + $0x14] sm:$0xf]
      %v351 = vld [vmem:[%s276 + $0x18] sm:$0xf]
      %v352 = vld [vmem:[%s276 + $0x1c] sm:$0xf]
      %v353 = vld [vmem:[%s289] sm:$0xf]
      %v354 = vld [vmem:[%s289 + $0x4] sm:$0xf]
      %v355 = vld [vmem:[%s289 + $0x8] sm:$0xf]
      %v356 = vld [vmem:[%s289 + $0xc] sm:$0xf]
      %v357 = vld [vmem:[%s303] sm:$0xf]
      %v358 = vld [vmem:[%s303 + $0x4] sm:$0xf]
      %v359 = vld [vmem:[%s303 + $0x8] sm:$0xf]
      %v360 = vld [vmem:[%s303 + $0xc] sm:$0xf]
      %v369 = vunpack.c.l.b16 %v345
      %v370 = vunpack.c.l.b16 %v346
      %v371 = vunpack.c.l.b16 %v347
      %v372 = vunpack.c.l.b16 %v348
      %v373 = vunpack.c.l.b16 %v349
      %v374 = vunpack.c.l.b16 %v350
      %v375 = vunpack.c.l.b16 %v351
      %v376 = vunpack.c.l.b16 %v352
      %v377 = vpack.c.b16 %v370, %v369
      %v378 = vpack.c.b16 %v372, %v371
      %v379 = vpack.c.b16 %v374, %v373
      %v380 = vpack.c.b16 %v376, %v375
      %v385 = vunpack.c.l.b16 %v353
      %v386 = vunpack.c.l.b16 %v354
      %v387 = vunpack.c.l.b16 %v355
      %v388 = vunpack.c.l.b16 %v356
      %v389 = vpack.c.b16 %v386, %v385
      %v390 = vpack.c.b16 %v388, %v387
      %vm391 = vcmask 261120
      %v393 = vsel %vm391, %v377, 0
      %v396 = vsel %vm391, %v378, 0
      %v399 = vsel %vm391, %v379, 0
      %v402 = vsel %vm391, %v380, 0
      %v405 = vsel %vm391, %v389, 0
      %v408 = vsel %vm391, %v390, 0
      %410 = vmatprep.subr.bf16.mxu0 0
      %411 = vmatpush1.bf16.xpose.msra.mxu0 0
      %412 = vmatprep.subr.bf16.mxu0 0
      %413 = vmatpush1.bf16.xpose.msra.mxu0 0
      %414 = vmatprep.subr.bf16.mxu0 0
      %415 = vmatpush1.bf16.xpose.msra.mxu0 0
      %416 = vmatprep.subr.bf16.mxu0 0
      %417 = vmatpush1.bf16.xpose.msra.mxu0 0
      %418 = vmatprep.subr.bf16.mxu0 0
      %419 = vmatpush1.bf16.xpose.msra.mxu0 0
      %420 = vmatprep.subr.bf16.mxu0 0
      %421 = vmatpush1.bf16.xpose.msra.mxu0 0
      %422 = vmatprep.subr.bf16.mxu0 0
      %423 = vmatpush1.bf16.xpose.msra.mxu0 %v408
      %424 = vmatprep.subr.bf16.mxu0 0
      %425 = vmatpush1.bf16.xpose.msra.mxu0 %v405
      %426 = vmatprep.subr.bf16.mxu0 0
      %427 = vmatpush2.bf16.xpose.msra.mxu0 0
      %428 = vmatprep.subr.bf16.mxu0 0
      %429 = vmatpush2.bf16.xpose.msra.mxu0 0
      %430 = vmatprep.subr.bf16.mxu0 0
      %431 = vmatpush2.bf16.xpose.msra.mxu0 0
      %432 = vmatprep.subr.bf16.mxu0 0
      %433 = vmatpush2.bf16.xpose.msra.mxu0 0
      %434 = vmatprep.subr.bf16.mxu0 0
      %435 = vmatpush2.bf16.xpose.msra.mxu0 0
      %436 = vmatprep.subr.bf16.mxu0 0
      %437 = vmatpush2.bf16.xpose.msra.mxu0 0
      %438 = vmatprep.subr.bf16.mxu0 0
      %439 = vmatpush2.bf16.xpose.msra.mxu0 0
      %440 = vmatprep.subr.bf16.mxu0 0
      %441 = vmatpush2.bf16.xpose.msra.mxu0 0
      %442 = vmatprep.mubr.bf16.mxu0 0
      %443 = vmatmul.mubr.bf16.gmra.mxu0 %v393
      %v444 = vpop.f32.mrf.mxu0
      %v445 = vadd.f32 0.0, %v444
      %v446 = vpop.f32.mrf.mxu0
      %v447 = vpop.f32.mrf.mxu0
      %v448 = vadd.f32 0.0, %v447
      %v449 = vpop.f32.mrf.mxu0
      %450 = vmatprep.mubr.bf16.mxu0 0
      %451 = vmatmul.mubr.bf16.gmra.mxu0 %v396
      %v452 = vpop.f32.mrf.mxu0
      %v453 = vadd.f32 0.0, %v452
      %v454 = vpop.f32.mrf.mxu0
      %v455 = vpop.f32.mrf.mxu0
      %v456 = vadd.f32 0.0, %v455
      %v457 = vpop.f32.mrf.mxu0
      %458 = vmatprep.mubr.bf16.mxu0 0
      %459 = vmatmul.mubr.bf16.gmra.mxu0 %v399
      %v460 = vpop.f32.mrf.mxu0
      %v461 = vadd.f32 0.0, %v460
      %v462 = vpop.f32.mrf.mxu0
      %v463 = vpop.f32.mrf.mxu0
      %v464 = vadd.f32 0.0, %v463
      %v465 = vpop.f32.mrf.mxu0
      %466 = vmatprep.mubr.bf16.mxu0 0
      %467 = vmatmul.mubr.bf16.gmra.mxu0 %v402
      %v468 = vpop.f32.mrf.mxu0
      %v469 = vadd.f32 0.0, %v468
      %v470 = vpop.f32.mrf.mxu0
      %v471 = vpop.f32.mrf.mxu0
      %v472 = vadd.f32 0.0, %v471
      %v473 = vpop.f32.mrf.mxu0
      %474 = vdwg.mxu0
      %v475 = vmul.f32 %v445, 0.17677669
      %v476 = vmul.f32 %v448, 0.17677669
      %v477 = vmul.f32 %v453, 0.17677669
      %v478 = vmul.f32 %v456, 0.17677669
      %v479 = vmul.f32 %v461, 0.17677669
      %v480 = vmul.f32 %v464, 0.17677669
      %v481 = vmul.f32 %v469, 0.17677669
      %v482 = vmul.f32 %v472, 0.17677669
      %v483 = vlaneseq
      %v484 = vshrl.u32 %v483, 7
      %v485 = vadd.s32 %v484, 8
      %v486 = vadd.s32 %v484, 16
      %v487 = vadd.s32 %v484, 24
      %v488 = vadd.s32 %v484, 32
      %v489 = vadd.s32 %v484, 40
      %v490 = vadd.s32 %v484, 48
      %v491 = vadd.s32 %v484, 56
      %v492 = vlaneseq
      %v493 = vand.u32 %v492, 127
      %s494 = smul.u32 %s21, 32
      %v495 = vstv %s494
      %v496 = vadd.s32 %v493, %v495
      %vm497 = vcmp.le.s32.totalorder %v496, %v484
      %vm498 = vcmp.le.s32.totalorder %v496, %v485
      %vm499 = vcmp.le.s32.totalorder %v496, %v486
      %vm500 = vcmp.le.s32.totalorder %v496, %v487
      %vm501 = vcmp.le.s32.totalorder %v496, %v488
      %vm502 = vcmp.le.s32.totalorder %v496, %v489
      %vm503 = vcmp.le.s32.totalorder %v496, %v490
      %vm504 = vcmp.le.s32.totalorder %v496, %v491
      %v505 = vsel %vm497, %v475, -1e+30
      %v506 = vsel %vm498, %v476, -1e+30
      %v507 = vsel %vm499, %v477, -1e+30
      %v508 = vsel %vm500, %v478, -1e+30
      %v509 = vsel %vm501, %v479, -1e+30
      %v510 = vsel %vm502, %v480, -1e+30
      %v511 = vsel %vm503, %v481, -1e+30
      %v512 = vsel %vm504, %v482, -1e+30
      %v513 = vld [vmem:[#allocation2] sm:$0xff]
      %v514 = vld [vmem:[#allocation2 + $0x8] sm:$0xff]
      %v515 = vld [vmem:[#allocation2 + $0x10] sm:$0xff]
      %v516 = vld [vmem:[#allocation2 + $0x18] sm:$0xff]
      %v517 = vld [vmem:[#allocation2 + $0x20] sm:$0xff]
      %v518 = vld [vmem:[#allocation2 + $0x28] sm:$0xff]
      %v519 = vld [vmem:[#allocation2 + $0x30] sm:$0xff]
      %v520 = vld [vmem:[#allocation2 + $0x38] sm:$0xff]
      %v521 = vsel %vm391, %v505, -inf
      %522 = vmax.xlane.f32.xlu0 %v521
      %v523 = vpop.xlane.xlu0 %522
      %v524 = vsel %vm391, %v506, -inf
      %525 = vmax.xlane.f32.xlu0 %v524
      %v526 = vpop.xlane.xlu0 %525
      %v527 = vsel %vm391, %v507, -inf
      %528 = vmax.xlane.f32.xlu0 %v527
      %v529 = vpop.xlane.xlu0 %528
      %v530 = vsel %vm391, %v508, -inf
      %531 = vmax.xlane.f32.xlu0 %v530
      %v532 = vpop.xlane.xlu0 %531
      %v533 = vsel %vm391, %v509, -inf
      %534 = vmax.xlane.f32.xlu0 %v533
      %v535 = vpop.xlane.xlu0 %534
      %v536 = vsel %vm391, %v510, -inf
      %537 = vmax.xlane.f32.xlu0 %v536
      %v538 = vpop.xlane.xlu0 %537
      %v539 = vsel %vm391, %v511, -inf
      %540 = vmax.xlane.f32.xlu0 %v539
      %v541 = vpop.xlane.xlu0 %540
      %v542 = vsel %vm391, %v512, -inf
      %543 = vmax.xlane.f32.xlu0 %v542
      %v544 = vpop.xlane.xlu0 %543
      %v545 = vmax.f32 %v513, %v523
      %v546 = vmax.f32 %v514, %v526
      %v547 = vmax.f32 %v515, %v529
      %v548 = vmax.f32 %v516, %v532
      %v549 = vmax.f32 %v517, %v535
      %v550 = vmax.f32 %v518, %v538
      %v551 = vmax.f32 %v519, %v541
      %v552 = vmax.f32 %v520, %v544
      %v553 = vsub.f32 %v513, %v545
      %v554 = vsub.f32 %v514, %v546
      %v555 = vsub.f32 %v515, %v547
      %v556 = vsub.f32 %v516, %v548
      %v557 = vsub.f32 %v517, %v549
      %v558 = vsub.f32 %v518, %v550
      %v559 = vsub.f32 %v519, %v551
      %v560 = vsub.f32 %v520, %v552
      %v561 = vmul.f32 %v553, 1.442695
      %v562 = vpow.pop %v561
      %v563 = vmul.f32 %v554, 1.442695
      %v564 = vpow.pop %v563
      %v565 = vmul.f32 %v555, 1.442695
      %v566 = vpow.pop %v565
      %v567 = vmul.f32 %v556, 1.442695
      %v568 = vpow.pop %v567
      %v569 = vmul.f32 %v557, 1.442695
      %v570 = vpow.pop %v569
      %v571 = vmul.f32 %v558, 1.442695
      %v572 = vpow.pop %v571
      %v573 = vmul.f32 %v559, 1.442695
      %v574 = vpow.pop %v573
      %v575 = vmul.f32 %v560, 1.442695
      %v576 = vpow.pop %v575
      %578 = vset.pattern.permute.xlu0 0
      %579 = vperm.xlu0 %578, %v545
      %v580 = vpop.permute.xlu0 %579
      %583 = vset.pattern.permute.xlu0 0
      %584 = vperm.xlu0 %583, %v546
      %v585 = vpop.permute.xlu0 %584
      %588 = vset.pattern.permute.xlu0 0
      %589 = vperm.xlu0 %588, %v547
      %v590 = vpop.permute.xlu0 %589
      %593 = vset.pattern.permute.xlu0 0
      %594 = vperm.xlu0 %593, %v548
      %v595 = vpop.permute.xlu0 %594
      %598 = vset.pattern.permute.xlu0 0
      %599 = vperm.xlu0 %598, %v549
      %v600 = vpop.permute.xlu0 %599
      %603 = vset.pattern.permute.xlu0 0
      %604 = vperm.xlu0 %603, %v550
      %v605 = vpop.permute.xlu0 %604
      %608 = vset.pattern.permute.xlu0 0
      %609 = vperm.xlu0 %608, %v551
      %v610 = vpop.permute.xlu0 %609
      %613 = vset.pattern.permute.xlu0 0
      %614 = vperm.xlu0 %613, %v552
      %v615 = vpop.permute.xlu0 %614
      %v617 = vsub.f32 %v505, %v580
      %v618 = vsub.f32 %v506, %v585
      %v619 = vsub.f32 %v507, %v590
      %v620 = vsub.f32 %v508, %v595
      %v621 = vsub.f32 %v509, %v600
      %v622 = vsub.f32 %v510, %v605
      %v623 = vsub.f32 %v511, %v610
      %v624 = vsub.f32 %v512, %v615
      %v625 = vmul.f32 %v617, 1.442695
      %v626 = vpow.pop %v625
      %v627 = vmul.f32 %v618, 1.442695
      %v628 = vpow.pop %v627
      %v629 = vmul.f32 %v619, 1.442695
      %v630 = vpow.pop %v629
      %v631 = vmul.f32 %v620, 1.442695
      %v632 = vpow.pop %v631
      %v633 = vmul.f32 %v621, 1.442695
      %v634 = vpow.pop %v633
      %v635 = vmul.f32 %v622, 1.442695
      %v636 = vpow.pop %v635
      %v637 = vmul.f32 %v623, 1.442695
      %v638 = vpow.pop %v637
      %v639 = vmul.f32 %v624, 1.442695
      %v640 = vpow.pop %v639
      %v641 = vld [vmem:[#allocation3] sm:$0xff]
      %v642 = vld [vmem:[#allocation3 + $0x8] sm:$0xff]
      %v643 = vld [vmem:[#allocation3 + $0x10] sm:$0xff]
      %v644 = vld [vmem:[#allocation3 + $0x18] sm:$0xff]
      %v645 = vld [vmem:[#allocation3 + $0x20] sm:$0xff]
      %v646 = vld [vmem:[#allocation3 + $0x28] sm:$0xff]
      %v647 = vld [vmem:[#allocation3 + $0x30] sm:$0xff]
      %v648 = vld [vmem:[#allocation3 + $0x38] sm:$0xff]
      %v649 = vmul.f32 %v562, %v641
      %v650 = vmul.f32 %v564, %v642
      %v651 = vmul.f32 %v566, %v643
      %v652 = vmul.f32 %v568, %v644
      %v653 = vmul.f32 %v570, %v645
      %v654 = vmul.f32 %v572, %v646
      %v655 = vmul.f32 %v574, %v647
      %v656 = vmul.f32 %v576, %v648
      %v657 = vsel %vm391, %v626, 0.0
      %658 = vadd.xlane.f32.xlu0 %v657
      %v659 = vpop.xlane.xlu0 %658
      %v660 = vsel %vm391, %v628, 0.0
      %661 = vadd.xlane.f32.xlu0 %v660
      %v662 = vpop.xlane.xlu0 %661
      %v663 = vsel %vm391, %v630, 0.0
      %664 = vadd.xlane.f32.xlu0 %v663
      %v665 = vpop.xlane.xlu0 %664
      %v666 = vsel %vm391, %v632, 0.0
      %667 = vadd.xlane.f32.xlu0 %v666
      %v668 = vpop.xlane.xlu0 %667
      %v669 = vsel %vm391, %v634, 0.0
      %670 = vadd.xlane.f32.xlu0 %v669
      %v671 = vpop.xlane.xlu0 %670
      %v672 = vsel %vm391, %v636, 0.0
      %673 = vadd.xlane.f32.xlu0 %v672
      %v674 = vpop.xlane.xlu0 %673
      %v675 = vsel %vm391, %v638, 0.0
      %676 = vadd.xlane.f32.xlu0 %v675
      %v677 = vpop.xlane.xlu0 %676
      %v678 = vsel %vm391, %v640, 0.0
      %679 = vadd.xlane.f32.xlu0 %v678
      %v680 = vpop.xlane.xlu0 %679
      %v681 = vadd.f32 %v649, %v659
      %v682 = vadd.f32 %v650, %v662
      %v683 = vadd.f32 %v651, %v665
      %v684 = vadd.f32 %v652, %v668
      %v685 = vadd.f32 %v653, %v671
      %v686 = vadd.f32 %v654, %v674
      %v687 = vadd.f32 %v655, %v677
      %v688 = vadd.f32 %v656, %v680
      %vm689 = vcmask 7168
      %690 = vst.msk [vmem:[#allocation3] sm:$0xff] %vm689, %v681
      %691 = vst.msk [vmem:[#allocation3 + $0x8] sm:$0xff] %vm689, %v682
      %692 = vst.msk [vmem:[#allocation3 + $0x10] sm:$0xff] %vm689, %v683
      %693 = vst.msk [vmem:[#allocation3 + $0x18] sm:$0xff] %vm689, %v684
      %694 = vst.msk [vmem:[#allocation3 + $0x20] sm:$0xff] %vm689, %v685
      %695 = vst.msk [vmem:[#allocation3 + $0x28] sm:$0xff] %vm689, %v686
      %696 = vst.msk [vmem:[#allocation3 + $0x30] sm:$0xff] %vm689, %v687
      %697 = vst.msk [vmem:[#allocation3 + $0x38] sm:$0xff] %vm689, %v688
      %v698 = vld [vmem:[#allocation4] sm:$0xff]
      %v699 = vld [vmem:[#allocation4 + $0x8] sm:$0xff]
      %v700 = vld [vmem:[#allocation4 + $0x10] sm:$0xff]
      %v701 = vld [vmem:[#allocation4 + $0x18] sm:$0xff]
      %v702 = vld [vmem:[#allocation4 + $0x20] sm:$0xff]
      %v703 = vld [vmem:[#allocation4 + $0x28] sm:$0xff]
      %v704 = vld [vmem:[#allocation4 + $0x30] sm:$0xff]
      %v705 = vld [vmem:[#allocation4 + $0x38] sm:$0xff]
      %707 = vset.pattern.permute.xlu0 0
      %708 = vperm.xlu0 %707, %v562
      %v709 = vpop.permute.xlu0 %708
      %712 = vset.pattern.permute.xlu0 0
      %713 = vperm.xlu0 %712, %v564
      %v714 = vpop.permute.xlu0 %713
      %717 = vset.pattern.permute.xlu0 0
      %718 = vperm.xlu0 %717, %v566
      %v719 = vpop.permute.xlu0 %718
      %722 = vset.pattern.permute.xlu0 0
      %723 = vperm.xlu0 %722, %v568
      %v724 = vpop.permute.xlu0 %723
      %727 = vset.pattern.permute.xlu0 0
      %728 = vperm.xlu0 %727, %v570
      %v729 = vpop.permute.xlu0 %728
      %732 = vset.pattern.permute.xlu0 0
      %733 = vperm.xlu0 %732, %v572
      %v734 = vpop.permute.xlu0 %733
      %737 = vset.pattern.permute.xlu0 0
      %738 = vperm.xlu0 %737, %v574
      %v739 = vpop.permute.xlu0 %738
      %742 = vset.pattern.permute.xlu0 0
      %743 = vperm.xlu0 %742, %v576
      %v744 = vpop.permute.xlu0 %743
      %v746 = vmul.f32 %v709, %v698
      %v747 = vmul.f32 %v714, %v699
      %v748 = vmul.f32 %v719, %v700
      %v749 = vmul.f32 %v724, %v701
      %v750 = vmul.f32 %v729, %v702
      %v751 = vmul.f32 %v734, %v703
      %v752 = vmul.f32 %v739, %v704
      %v753 = vmul.f32 %v744, %v705
      %v754 = vpack.c.bf16 %v628, %v626
      %v755 = vpack.c.bf16 %v632, %v630
      %v756 = vpack.c.bf16 %v636, %v634
      %v757 = vpack.c.bf16 %v640, %v638
      %v762 = vunpack.c.l.b16 %v357
      %v763 = vunpack.c.l.b16 %v358
      %v764 = vunpack.c.l.b16 %v359
      %v765 = vunpack.c.l.b16 %v360
      %v766 = vpack.c.b16 %v763, %v762
      %v767 = vpack.c.b16 %v765, %v764
      %v771 = vsel %vm391, %v754, 0
      %v774 = vsel %vm391, %v755, 0
      %v777 = vsel %vm391, %v756, 0
      %v780 = vsel %vm391, %v757, 0
      %782 = vmatprep.subr.bf16.mxu0 0
      %783 = vmatpush1.bf16.msra.mxu0 0
      %784 = vmatprep.subr.bf16.mxu0 0
      %785 = vmatpush1.bf16.msra.mxu0 0
      %786 = vmatprep.subr.bf16.mxu0 0
      %787 = vmatpush1.bf16.msra.mxu0 0
      %788 = vmatprep.subr.bf16.mxu0 0
      %789 = vmatpush1.bf16.msra.mxu0 0
      %790 = vmatprep.subr.bf16.mxu0 0
      %791 = vmatpush1.bf16.msra.mxu0 0
      %792 = vmatprep.subr.bf16.mxu0 0
      %793 = vmatpush1.bf16.msra.mxu0 0
      %794 = vmatprep.subr.bf16.mxu0 0
      %795 = vmatpush1.bf16.msra.mxu0 %v767
      %796 = vmatprep.subr.bf16.mxu0 0
      %797 = vmatpush1.bf16.msra.mxu0 %v766
      %798 = vmatprep.subr.bf16.mxu0 0
      %799 = vmatpush2.bf16.msra.mxu0 0
      %800 = vmatprep.subr.bf16.mxu0 0
      %801 = vmatpush2.bf16.msra.mxu0 0
      %802 = vmatprep.subr.bf16.mxu0 0
      %803 = vmatpush2.bf16.msra.mxu0 0
      %804 = vmatprep.subr.bf16.mxu0 0
      %805 = vmatpush2.bf16.msra.mxu0 0
      %806 = vmatprep.subr.bf16.mxu0 0
      %807 = vmatpush2.bf16.msra.mxu0 0
      %808 = vmatprep.subr.bf16.mxu0 0
      %809 = vmatpush2.bf16.msra.mxu0 0
      %810 = vmatprep.subr.bf16.mxu0 0
      %811 = vmatpush2.bf16.msra.mxu0 0
      %812 = vmatprep.subr.bf16.mxu0 0
      %813 = vmatpush2.bf16.msra.mxu0 0
      %814 = vmatprep.mubr.bf16.mxu0 0
      %815 = vmatmul.mubr.bf16.gmra.mxu0 %v771
      %v816 = vpop.f32.mrf.mxu0
      %v817 = vadd.f32 0.0, %v816
      %v818 = vpop.f32.mrf.mxu0
      %v819 = vpop.f32.mrf.mxu0
      %v820 = vadd.f32 0.0, %v819
      %v821 = vpop.f32.mrf.mxu0
      %822 = vmatprep.mubr.bf16.mxu0 0
      %823 = vmatmul.mubr.bf16.gmra.mxu0 %v774
      %v824 = vpop.f32.mrf.mxu0
      %v825 = vadd.f32 0.0, %v824
      %v826 = vpop.f32.mrf.mxu0
      %v827 = vpop.f32.mrf.mxu0
      %v828 = vadd.f32 0.0, %v827
      %v829 = vpop.f32.mrf.mxu0
      %830 = vmatprep.mubr.bf16.mxu0 0
      %831 = vmatmul.mubr.bf16.gmra.mxu0 %v777
      %v832 = vpop.f32.mrf.mxu0
      %v833 = vadd.f32 0.0, %v832
      %v834 = vpop.f32.mrf.mxu0
      %v835 = vpop.f32.mrf.mxu0
      %v836 = vadd.f32 0.0, %v835
      %v837 = vpop.f32.mrf.mxu0
      %838 = vmatprep.mubr.bf16.mxu0 0
      %839 = vmatmul.mubr.bf16.gmra.mxu0 %v780
      %v840 = vpop.f32.mrf.mxu0
      %v841 = vadd.f32 0.0, %v840
      %v842 = vpop.f32.mrf.mxu0
      %v843 = vpop.f32.mrf.mxu0
      %v844 = vadd.f32 0.0, %v843
      %v845 = vpop.f32.mrf.mxu0
      %846 = vdwg.mxu0
      %v847 = vadd.f32 %v746, %v817
      %v848 = vadd.f32 %v747, %v820
      %v849 = vadd.f32 %v748, %v825
      %v850 = vadd.f32 %v749, %v828
      %v851 = vadd.f32 %v750, %v833
      %v852 = vadd.f32 %v751, %v836
      %v853 = vadd.f32 %v752, %v841
      %v854 = vadd.f32 %v753, %v844
      %855 = vst.msk [vmem:[#allocation4] sm:$0xff] %vm391, %v847
      %856 = vst.msk [vmem:[#allocation4 + $0x8] sm:$0xff] %vm391, %v848
      %857 = vst.msk [vmem:[#allocation4 + $0x10] sm:$0xff] %vm391, %v849
      %858 = vst.msk [vmem:[#allocation4 + $0x18] sm:$0xff] %vm391, %v850
      %859 = vst.msk [vmem:[#allocation4 + $0x20] sm:$0xff] %vm391, %v851
      %860 = vst.msk [vmem:[#allocation4 + $0x28] sm:$0xff] %vm391, %v852
      %861 = vst.msk [vmem:[#allocation4 + $0x30] sm:$0xff] %vm391, %v853
      %862 = vst.msk [vmem:[#allocation4 + $0x38] sm:$0xff] %vm391, %v854
      %863 = vst.msk [vmem:[#allocation2] sm:$0xff] %vm689, %v545
      %864 = vst.msk [vmem:[#allocation2 + $0x8] sm:$0xff] %vm689, %v546
      %865 = vst.msk [vmem:[#allocation2 + $0x10] sm:$0xff] %vm689, %v547
      %866 = vst.msk [vmem:[#allocation2 + $0x18] sm:$0xff] %vm689, %v548
      %867 = vst.msk [vmem:[#allocation2 + $0x20] sm:$0xff] %vm689, %v549
      %868 = vst.msk [vmem:[#allocation2 + $0x28] sm:$0xff] %vm689, %v550
      %869 = vst.msk [vmem:[#allocation2 + $0x30] sm:$0xff] %vm689, %v551
      %870 = vst.msk [vmem:[#allocation2 + $0x38] sm:$0xff] %vm689, %v552
      %p871 = scmp.eq.s32.totalorder %s21, 1
      // Predicated region
      $region37: #{_lambda_.10} parent=31 // pred_check
        %p872 = pneg %p871
      $region38: #{_lambda_.10} parent=31 // pred_check_branch
        %874 = sbr.rel (%p872) target = $region40
      $region39: #{_lambda_.10} parent=31 // pred_region
        %v875 = vld [vmem:[#allocation3] sm:$0xff]
        %v876 = vld [vmem:[#allocation3 + $0x8] sm:$0xff]
        %v877 = vld [vmem:[#allocation3 + $0x10] sm:$0xff]
        %v878 = vld [vmem:[#allocation3 + $0x18] sm:$0xff]
        %v879 = vld [vmem:[#allocation3 + $0x20] sm:$0xff]
        %v880 = vld [vmem:[#allocation3 + $0x28] sm:$0xff]
        %v881 = vld [vmem:[#allocation3 + $0x30] sm:$0xff]
        %v882 = vld [vmem:[#allocation3 + $0x38] sm:$0xff]
        %v883 = vrcp.pop %v875
        %v884 = vrcp.pop %v876
        %v885 = vrcp.pop %v877
        %v886 = vrcp.pop %v878
        %v887 = vrcp.pop %v879
        %v888 = vrcp.pop %v880
        %v889 = vrcp.pop %v881
        %v890 = vrcp.pop %v882
        %v891 = vld [vmem:[#allocation4] sm:$0xff]
        %v892 = vld [vmem:[#allocation4 + $0x8] sm:$0xff]
        %v893 = vld [vmem:[#allocation4 + $0x10] sm:$0xff]
        %v894 = vld [vmem:[#allocation4 + $0x18] sm:$0xff]
        %v895 = vld [vmem:[#allocation4 + $0x20] sm:$0xff]
        %v896 = vld [vmem:[#allocation4 + $0x28] sm:$0xff]
        %v897 = vld [vmem:[#allocation4 + $0x30] sm:$0xff]
        %v898 = vld [vmem:[#allocation4 + $0x38] sm:$0xff]
        %900 = vset.pattern.permute.xlu0 0
        %901 = vperm.xlu0 %900, %v883
        %v902 = vpop.permute.xlu0 %901
        %905 = vset.pattern.permute.xlu0 0
        %906 = vperm.xlu0 %905, %v884
        %v907 = vpop.permute.xlu0 %906
        %910 = vset.pattern.permute.xlu0 0
        %911 = vperm.xlu0 %910, %v885
        %v912 = vpop.permute.xlu0 %911
        %915 = vset.pattern.permute.xlu0 0
        %916 = vperm.xlu0 %915, %v886
        %v917 = vpop.permute.xlu0 %916
        %920 = vset.pattern.permute.xlu0 0
        %921 = vperm.xlu0 %920, %v887
        %v922 = vpop.permute.xlu0 %921
        %925 = vset.pattern.permute.xlu0 0
        %926 = vperm.xlu0 %925, %v888
        %v927 = vpop.permute.xlu0 %926
        %930 = vset.pattern.permute.xlu0 0
        %931 = vperm.xlu0 %930, %v889
        %v932 = vpop.permute.xlu0 %931
        %935 = vset.pattern.permute.xlu0 0
        %936 = vperm.xlu0 %935, %v890
        %v937 = vpop.permute.xlu0 %936
        %v939 = vmul.f32 %v891, %v902
        %v940 = vmul.f32 %v892, %v907
        %v941 = vmul.f32 %v893, %v912
        %v942 = vmul.f32 %v894, %v917
        %v943 = vmul.f32 %v895, %v922
        %v944 = vmul.f32 %v896, %v927
        %v945 = vmul.f32 %v897, %v932
        %v946 = vmul.f32 %v898, %v937
        %v947 = vpack.c.bf16 %v940, %v939
        %v948 = vpack.c.bf16 %v942, %v941
        %v949 = vpack.c.bf16 %v944, %v943
        %v950 = vpack.c.bf16 %v946, %v945
        %v955 = vunpack.c.l.b16 %v947
        %v956 = vunpack.c.h.b16 %v947
        %v957 = vunpack.c.l.b16 %v948
        %v958 = vunpack.c.h.b16 %v948
        %v959 = vunpack.c.l.b16 %v949
        %v960 = vunpack.c.h.b16 %v949
        %v961 = vunpack.c.l.b16 %v950
        %v962 = vunpack.c.h.b16 %v950
        %v963 = vpack.c.b16 %v955, %v955
        %v964 = vpack.c.b16 %v956, %v956
        %v965 = vpack.c.b16 %v957, %v957
        %v966 = vpack.c.b16 %v958, %v958
        %v967 = vpack.c.b16 %v959, %v959
        %v968 = vpack.c.b16 %v960, %v960
        %v969 = vpack.c.b16 %v961, %v961
        %v970 = vpack.c.b16 %v962, %v962
        %vm979 = vcmask 257024
        %980 = vst.msk [vmem:[%s313] sm:$0xf] %vm979, %v963
        %981 = vst.msk [vmem:[%s313 + $0x4] sm:$0xf] %vm979, %v964
        %982 = vst.msk [vmem:[%s313 + $0x8] sm:$0xf] %vm979, %v965
        %983 = vst.msk [vmem:[%s313 + $0xc] sm:$0xf] %vm979, %v966
        %984 = vst.msk [vmem:[%s313 + $0x10] sm:$0xf] %vm979, %v967
        %985 = vst.msk [vmem:[%s313 + $0x14] sm:$0xf] %vm979, %v968
        %986 = vst.msk [vmem:[%s313 + $0x18] sm:$0xf] %vm979, %v969
        %987 = vst.msk [vmem:[%s313 + $0x1c] sm:$0xf] %vm979, %v970
      $region40: #{_lambda_.10} parent=31 // pred_fallthru
        _
      %p988 = scmp.lt.s32.totalorder %s19, 1
      %s989 = scalar_select %p988, %s19, 1
      %p990 = scmp.lt.s32.totalorder %s20, 3
      %s991 = scalar_select %p990, %s20, 3
      %s992 = smul.addr %s991, 8
      %s993 = smul.addr %s989, 32
      %s994 = sadd.s32 %s992, %s993
      %s995 = smul.addr %s994, 4
      %s996 = scalar_lea.vmem %s3, %s995
      // Predicated region
      $region41: #{_lambda_.10} parent=31 // pred_check
        %p997 = pneg %p141
      $region42: #{_lambda_.10} parent=31 // pred_check_branch
        %999 = sbr.rel (%p997) target = $region44
      $region43: #{_lambda_.10} parent=31 // pred_region
        _
      $region44: #{_lambda_.10} parent=31 // pred_fallthru
        _
    $region32: #{_lambda_.10} parent=5 // pred_fallthru
      _
    %p1000 = scmp.le.s32.totalorder 2, %s9
    // Predicated region
    $region45: #{_lambda_.10} parent=5 // pred_check
      %p1001 = pneg %p1000
    $region46: #{_lambda_.10} parent=5 // pred_check_branch
      %1003 = sbr.rel (%p1001) target = $region48
    $region47: #{_lambda_.10} parent=5 // pred_region
      %s1004 = ssub.s32 %s9, 2
      // Predicated region
      $region49: #{_lambda_.10} parent=47 // pred_check
        %p1005 = pneg %p147
      $region50: #{_lambda_.10} parent=47 // pred_check_branch
        %1007 = sbr.rel (%p1005) target = $region52
      $region51: #{_lambda_.10} parent=47 // pred_region
        %p1008 = scmp.lt.s32.totalorder %s22, 1
        %s1009 = scalar_select %p1008, %s22, 1
        %p1010 = scmp.lt.s32.totalorder %s23, 3
        %s1011 = scalar_select %p1010, %s23, 3
        %s1012 = smul.addr %s1011, 8
        %s1013 = smul.addr %s1009, 32
        %s1014 = sadd.s32 %s1012, %s1013
        %s1015 = smul.addr %s1014, 4
        %s1016 = scalar_lea.vmem %s3, %s1015
      $region52: #{_lambda_.10} parent=47 // pred_fallthru
        _
    $region48: #{_lambda_.10} parent=5 // pred_fallthru
      _
  $region6: #{_lambda_.10} parent=0 // loop_footer
    %s13 = sadd.s32 1, %s9
  $region7: #{_lambda_.10} parent=0 // loop_footer_branch
    %8 = sbr.rel target = $region3
  $region8: #{_lambda_.10} parent=0 // loop_exit
    _

// kernel: _lambda_.11
$region0: #{_lambda_.11}
  #allocation0 [shape = 'u32[]', space=smem, size = 0x4, offset = 0x4, fixed_abs, tag = 'smem constant byte address 0x4 - core index']
  #allocation1 [shape = 'u32[144,128]{1,0:T(1,128)}', space=vmem, size = 0x12000, scoped, tag = 'internal scratch']
  %s0 = inlined_call_operand.vmem [shape: bf16[128,128], index: 0, kind: input, shape index: {}]
  %s1 = inlined_call_operand.vmem [shape: bf16[128,128], index: 1, kind: input, shape index: {}]
  %s2 = inlined_call_operand.vmem [shape: f32[1,128], index: 2, kind: input, shape index: {}]
  %s3 = inlined_call_operand.vmem [shape: f32[128,128], index: 3, kind: input, shape index: {}]
  %s4 = inlined_call_operand.vmem [shape: f32[128,128], index: 4, kind: output, shape index: {}]
  %s5 = sld [smem:[#allocation0]]
  $region49: #{_lambda_.11} parent=0
    _
  %s7 = ssub.s32 1, %s5
  %s8 = scalar_select 0, %s7, %s5
  loop: start=0, step=1, limit=4
  $region2: #{_lambda_.11} parent=0 // loop_pre_header
    _
  $region3: #{_lambda_.11} parent=0 // loop_header
    %s10 = sphi 0, %s14
    %p11 = scmp.ge.s32.totalorder %s10, 4
    %s20 = sphi 0, %s22
    %s23 = sphi 0, %s20
    %s24 = sphi 0, %s23
    %s40 = sphi 0, %s24
    %s44 = sphi 0, %s44
    %s46 = sphi 0, %s44
    %s47 = sphi 0, %s46
    %s61 = sphi 0, %s47
    %s65 = sphi 0, %s65
    %s67 = sphi 0, %s65
    %s68 = sphi 0, %s67
    %s82 = sphi 0, %s68
    %s88 = sphi 0, %s90
    %s91 = sphi 0, %s88
    %s92 = sphi 0, %s91
    %s108 = sphi 0, %s92
    %s114 = sphi 0, %s116
    %s117 = sphi 0, %s114
    %s118 = sphi 0, %s117
    %s134 = sphi 0, %s118
  $region4: #{_lambda_.11} parent=0 // loop_header_branch
    %13 = sbr.rel (%p11) target = $region8
  $region5: #{_lambda_.11} parent=0 // loop_body
    %s15 = ssub.s32 %s10, 1
    %s16 = ssub.s32 %s10, 2
    %s17 = sadd.s32 %s10, 1
    %s18 = ssub.s32 %s10, %s17
    %p19 = scmp.eq.s32.totalorder %s18, 0
    %s21 = sadd.s32 %s20, 1
    %s22 = scalar_select %p19, %s20, %s21
    %p25 = pneg %p19
    %p26 = scmp.eq.s32.totalorder %s10, 1
    %p27 = por %p25, %p26
    %p28 = scmp.ne.s32.totalorder %s20, %s23
    %p29 = scmp.eq.s32.totalorder %s10, 0
    %p30 = por %p28, %p29
    %p31 = scmp.ne.s32.totalorder %s20, %s23
    %p32 = scmp.eq.s32.totalorder %s15, 1
    %p33 = por %p31, %p32
    %p34 = scmp.ne.s32.totalorder %s23, %s24
    %p35 = scmp.eq.s32.totalorder %s15, 0
    %p36 = por %p34, %p35
    %p37 = scmp.ne.s32.totalorder %s23, %s24
    %p38 = scmp.eq.s32.totalorder %s16, 1
    %p39 = por %p37, %p38
    %p41 = scmp.ne.s32.totalorder %s24, %s40
    %p42 = scmp.eq.s32.totalorder %s16, 0
    %p43 = por %p41, %p42
    %s45 = sadd.s32 %s44, 1
    %p48 = scmp.eq.s32.totalorder %s10, 1
    %p49 = scmp.ne.s32.totalorder %s44, %s46
    %p50 = scmp.eq.s32.totalorder %s10, 0
    %p51 = por %p49, %p50
    %p52 = scmp.ne.s32.totalorder %s44, %s46
    %p53 = scmp.eq.s32.totalorder %s15, 1
    %p54 = por %p52, %p53
    %p55 = scmp.ne.s32.totalorder %s46, %s47
    %p56 = scmp.eq.s32.totalorder %s15, 0
    %p57 = por %p55, %p56
    %p58 = scmp.ne.s32.totalorder %s46, %s47
    %p59 = scmp.eq.s32.totalorder %s16, 1
    %p60 = por %p58, %p59
    %p62 = scmp.ne.s32.totalorder %s47, %s61
    %p63 = scmp.eq.s32.totalorder %s16, 0
    %p64 = por %p62, %p63
    %s66 = sadd.s32 %s65, 1
    %p69 = scmp.eq.s32.totalorder %s10, 1
    %p70 = scmp.ne.s32.totalorder %s65, %s67
    %p71 = scmp.eq.s32.totalorder %s10, 0
    %p72 = por %p70, %p71
    %p73 = scmp.ne.s32.totalorder %s65, %s67
    %p74 = scmp.eq.s32.totalorder %s15, 1
    %p75 = por %p73, %p74
    %p76 = scmp.ne.s32.totalorder %s67, %s68
    %p77 = scmp.eq.s32.totalorder %s15, 0
    %p78 = por %p76, %p77
    %p79 = scmp.ne.s32.totalorder %s67, %s68
    %p80 = scmp.eq.s32.totalorder %s16, 1
    %p81 = por %p79, %p80
    %p83 = scmp.ne.s32.totalorder %s68, %s82
    %p84 = scmp.eq.s32.totalorder %s16, 0
    %p85 = por %p83, %p84
    %s86 = ssub.s32 %s10, %s17
    %p87 = scmp.eq.s32.totalorder %s86, 0
    %s89 = sadd.s32 %s88, 1
    %s90 = scalar_select %p87, %s88, %s89
    %p93 = pneg %p87
    %p94 = scmp.eq.s32.totalorder %s10, 1
    %p95 = por %p93, %p94
    %p96 = scmp.ne.s32.totalorder %s88, %s91
    %p97 = scmp.eq.s32.totalorder %s10, 0
    %p98 = por %p96, %p97
    %p99 = scmp.ne.s32.totalorder %s88, %s91
    %p100 = scmp.eq.s32.totalorder %s15, 1
    %p101 = por %p99, %p100
    %p102 = scmp.ne.s32.totalorder %s91, %s92
    %p103 = scmp.eq.s32.totalorder %s15, 0
    %p104 = por %p102, %p103
    %p105 = scmp.ne.s32.totalorder %s91, %s92
    %p106 = scmp.eq.s32.totalorder %s16, 1
    %p107 = por %p105, %p106
    %p109 = scmp.ne.s32.totalorder %s92, %s108
    %p110 = scmp.eq.s32.totalorder %s16, 0
    %p111 = por %p109, %p110
    %s112 = ssub.s32 %s10, %s17
    %p113 = scmp.eq.s32.totalorder %s112, 0
    %s115 = sadd.s32 %s114, 1
    %s116 = scalar_select %p113, %s114, %s115
    %p119 = pneg %p113
    %p120 = scmp.eq.s32.totalorder %s10, 1
    %p121 = por %p119, %p120
    %p122 = scmp.ne.s32.totalorder %s114, %s117
    %p123 = scmp.eq.s32.totalorder %s10, 0
    %p124 = por %p122, %p123
    %p125 = scmp.ne.s32.totalorder %s114, %s117
    %p126 = scmp.eq.s32.totalorder %s15, 1
    %p127 = por %p125, %p126
    %p128 = scmp.ne.s32.totalorder %s117, %s118
    %p129 = scmp.eq.s32.totalorder %s15, 0
    %p130 = por %p128, %p129
    %p131 = scmp.ne.s32.totalorder %s117, %s118
    %p132 = scmp.eq.s32.totalorder %s16, 1
    %p133 = por %p131, %p132
    %p135 = scmp.ne.s32.totalorder %s118, %s134
    %p136 = scmp.eq.s32.totalorder %s16, 0
    %p137 = por %p135, %p136
    %p138 = scmp.le.s32.totalorder 1, %s10
    %p139 = scmp.lt.s32.totalorder %s10, 3
    %p140 = pnand %p138, %p139
    %p141 = pneg %p140
    // Predicated region
    $region9: #{_lambda_.11} parent=5 // pred_check
      _
    $region10: #{_lambda_.11} parent=5 // pred_check_branch
      %143 = sbr.rel (%p140) target = $region12
    $region11: #{_lambda_.11} parent=5 // pred_region
      %s144 = ssub.s32 %s10, 1
      // Predicated region
      $region13: #{_lambda_.11} parent=11 // pred_check
        %p145 = pneg %p57
      $region14: #{_lambda_.11} parent=11 // pred_check_branch
        %147 = sbr.rel (%p145) target = $region16
      $region15: #{_lambda_.11} parent=11 // pred_region
        _
      $region16: #{_lambda_.11} parent=11 // pred_fallthru
        _
      // Predicated region
      $region17: #{_lambda_.11} parent=11 // pred_check
        %p148 = pneg %p78
      $region18: #{_lambda_.11} parent=11 // pred_check_branch
        %150 = sbr.rel (%p148) target = $region20
      $region19: #{_lambda_.11} parent=11 // pred_region
        _
      $region20: #{_lambda_.11} parent=11 // pred_fallthru
        _
    $region12: #{_lambda_.11} parent=5 // pred_fallthru
      _
    %p151 = scmp.lt.s32.totalorder %s10, 2
    // Predicated region
    $region21: #{_lambda_.11} parent=5 // pred_check
      %p152 = pneg %p151
    $region22: #{_lambda_.11} parent=5 // pred_check_branch
      %154 = sbr.rel (%p152) target = $region24
    $region23: #{_lambda_.11} parent=5 // pred_region
      // Predicated region
      $region25: #{_lambda_.11} parent=23 // pred_check
        %p155 = pneg %p30
      $region26: #{_lambda_.11} parent=23 // pred_check_branch
        %157 = sbr.rel (%p155) target = $region28
      $region27: #{_lambda_.11} parent=23 // pred_region
        %s158 = smul.u32 8, %s10
        %p159 = scmp.lt.s32.totalorder %s158, 15
        %s160 = scalar_select %p159, %s158, 15
        %s161 = smul.addr %s160, 4
        %s162 = scalar_lea.vmem %s0, %s161
        %s163 = smul.u32 8, %s10
      $region28: #{_lambda_.11} parent=23 // pred_fallthru
        _
      // Predicated region
      $region29: #{_lambda_.11} parent=23 // pred_check
        %p164 = pneg %p98
      $region30: #{_lambda_.11} parent=23 // pred_check_branch
        %166 = sbr.rel (%p164) target = $region32
      $region31: #{_lambda_.11} parent=23 // pred_region
        %s167 = smul.u32 8, %s10
        %p168 = scmp.lt.s32.totalorder %s167, 15
        %s169 = scalar_select %p168, %s167, 15
        %s170 = smul.addr %s169, 8
        %s171 = scalar_lea.vmem %s3, %s170
        %s172 = smul.u32 8, %s10
      $region32: #{_lambda_.11} parent=23 // pred_fallthru
        _
    $region24: #{_lambda_.11} parent=5 // pred_fallthru
      _
    %p173 = scmp.le.s32.totalorder 1, %s10
    %p174 = scmp.lt.s32.totalorder %s10, 3
    %p175 = pnand %p173, %p174
    %p176 = pneg %p175
    // Predicated region
    $region33: #{_lambda_.11} parent=5 // pred_check
      _
    $region34: #{_lambda_.11} parent=5 // pred_check_branch
      %178 = sbr.rel (%p175) target = $region36
    $region35: #{_lambda_.11} parent=5 // pred_region
      %s179 = ssub.s32 %s10, 1
      %s180 = smul.u32 8, %s15
      %p181 = scmp.lt.s32.totalorder %s180, 15
      %s182 = scalar_select %p181, %s180, 15
      %s183 = smul.addr %s182, 4
      %s184 = scalar_lea.vmem %s0, %s183
      %p185 = pneg %p36
      %p186 = pneg %p33
      %p187 = pneg %p57
      %p188 = pneg %p54
      %p189 = pneg %p78
      %p190 = pneg %p75
      %s191 = smul.u32 8, %s15
      %p192 = scmp.lt.s32.totalorder %s191, 15
      %s193 = scalar_select %p192, %s191, 15
      %s194 = smul.addr %s193, 8
      %s195 = scalar_lea.vmem %s3, %s194
      %p196 = pneg %p104
      %p197 = pneg %p101
      %p198 = pneg %p130
      %p199 = pneg %p127
      %s200 = smul.u32 8, %s15
      %p201 = scmp.lt.s32.totalorder %s200, 15
      %s202 = scalar_select %p201, %s200, 15
      %s203 = smul.addr %s202, 8
      %s204 = scalar_lea.vmem %s4, %s203
      %s205 = smul.u32 8, %s15
      %p206 = scmp.lt.s32.totalorder %s205, 15
      %s207 = scalar_select %p206, %s205, 15
      %s208 = smul.addr %s207, 4
      %s209 = scalar_lea.vmem %s0, %s208
      %s210 = smul.u32 8, %s15
      %s211 = smul.u32 8, %s15
      %p212 = scmp.lt.s32.totalorder %s211, 15
      %s213 = scalar_select %p212, %s211, 15
      %s214 = smul.addr %s213, 8
      %s215 = scalar_lea.vmem %s3, %s214
      %s216 = smul.u32 8, %s15
      %s217 = smul.u32 8, %s15
      %p218 = scmp.lt.s32.totalorder %s217, 15
      %s219 = scalar_select %p218, %s217, 15
      %s220 = smul.addr %s219, 8
      %s221 = scalar_lea.vmem %s4, %s220
      %s222 = smul.u32 8, %s15
      %v224 = vld [vmem:[%s209] sm:$0xf]
      %v225 = vld [vmem:[%s209 + $0x4] sm:$0xf]
      %v226 = vld [vmem:[%s209 + $0x8] sm:$0xf]
      %v227 = vld [vmem:[%s209 + $0xc] sm:$0xf]
      %v228 = vld [vmem:[%s209 + $0x10] sm:$0xf]
      %v229 = vld [vmem:[%s209 + $0x14] sm:$0xf]
      %v230 = vld [vmem:[%s209 + $0x18] sm:$0xf]
      %v231 = vld [vmem:[%s209 + $0x1c] sm:$0xf]
      %v232 = vld [vmem:[%s1] sm:$0xf]
      %v233 = vld [vmem:[%s1 + $0x4] sm:$0xf]
      %v234 = vld [vmem:[%s1 + $0x8] sm:$0xf]
      %v235 = vld [vmem:[%s1 + $0xc] sm:$0xf]
      %v236 = vld [vmem:[%s1 + $0x10] sm:$0xf]
      %v237 = vld [vmem:[%s1 + $0x14] sm:$0xf]
      %v238 = vld [vmem:[%s1 + $0x18] sm:$0xf]
      %v239 = vld [vmem:[%s1 + $0x1c] sm:$0xf]
      %v240 = vld [vmem:[%s1 + $0x20] sm:$0xf]
      %v241 = vld [vmem:[%s1 + $0x24] sm:$0xf]
      %v242 = vld [vmem:[%s1 + $0x28] sm:$0xf]
      %v243 = vld [vmem:[%s1 + $0x2c] sm:$0xf]
      %v244 = vld [vmem:[%s1 + $0x30] sm:$0xf]
      %v245 = vld [vmem:[%s1 + $0x34] sm:$0xf]
      %v246 = vld [vmem:[%s1 + $0x38] sm:$0xf]
      %v247 = vld [vmem:[%s1 + $0x3c] sm:$0xf]
      %v248 = vld [vmem:[%s2] sm:$0x1]
      %v250 = vlaneseq
      %v251 = vshrl.u32 %v250, 7
      %v252 = vsub.s32 0, %v251
      %v253 = vrot.slane %v248, %v252
      %v263 = vunpack.c.l.b16 %v224
      %v264 = vunpack.c.l.b16 %v225
      %v265 = vunpack.c.l.b16 %v226
      %v266 = vunpack.c.l.b16 %v227
      %v267 = vunpack.c.l.b16 %v228
      %v268 = vunpack.c.l.b16 %v229
      %v269 = vunpack.c.l.b16 %v230
      %v270 = vunpack.c.l.b16 %v231
      %v271 = vpack.c.b16 %v264, %v263
      %v272 = vpack.c.b16 %v266, %v265
      %v273 = vpack.c.b16 %v268, %v267
      %v274 = vpack.c.b16 %v270, %v269
      %v295 = vunpack.c.l.b16 %v232
      %v296 = vunpack.c.l.b16 %v233
      %v297 = vunpack.c.l.b16 %v234
      %v298 = vunpack.c.l.b16 %v235
      %v299 = vunpack.c.l.b16 %v236
      %v300 = vunpack.c.l.b16 %v237
      %v301 = vunpack.c.l.b16 %v238
      %v302 = vunpack.c.l.b16 %v239
      %v303 = vunpack.c.l.b16 %v240
      %v304 = vunpack.c.l.b16 %v241
      %v305 = vunpack.c.l.b16 %v242
      %v306 = vunpack.c.l.b16 %v243
      %v307 = vunpack.c.l.b16 %v244
      %v308 = vunpack.c.l.b16 %v245
      %v309 = vunpack.c.l.b16 %v246
      %v310 = vunpack.c.l.b16 %v247
      %v311 = vpack.c.b16 %v296, %v295
      %v312 = vpack.c.b16 %v298, %v297
      %v313 = vpack.c.b16 %v300, %v299
      %v314 = vpack.c.b16 %v302, %v301
      %v315 = vpack.c.b16 %v304, %v303
      %v316 = vpack.c.b16 %v306, %v305
      %v317 = vpack.c.b16 %v308, %v307
      %v318 = vpack.c.b16 %v310, %v309
      %327 = vmatprep.subr.bf16.mxu0 0
      %328 = vmatpush1.bf16.msra.mxu0 %v318
      %329 = vmatprep.subr.bf16.mxu0 0
      %330 = vmatpush1.bf16.msra.mxu0 %v317
      %331 = vmatprep.subr.bf16.mxu0 0
      %332 = vmatpush1.bf16.msra.mxu0 %v316
      %333 = vmatprep.subr.bf16.mxu0 0
      %334 = vmatpush1.bf16.msra.mxu0 %v315
      %335 = vmatprep.subr.bf16.mxu0 0
      %336 = vmatpush1.bf16.msra.mxu0 %v314
      %337 = vmatprep.subr.bf16.mxu0 0
      %338 = vmatpush1.bf16.msra.mxu0 %v313
      %339 = vmatprep.subr.bf16.mxu0 0
      %340 = vmatpush1.bf16.msra.mxu0 %v312
      %341 = vmatprep.subr.bf16.mxu0 0
      %342 = vmatpush1.bf16.msra.mxu0 %v311
      %343 = vmatprep.subr.bf16.mxu0 0
      %344 = vmatpush2.bf16.msra.mxu0 0
      %345 = vmatprep.subr.bf16.mxu0 0
      %346 = vmatpush2.bf16.msra.mxu0 0
      %347 = vmatprep.subr.bf16.mxu0 0
      %348 = vmatpush2.bf16.msra.mxu0 0
      %349 = vmatprep.subr.bf16.mxu0 0
      %350 = vmatpush2.bf16.msra.mxu0 0
      %351 = vmatprep.subr.bf16.mxu0 0
      %352 = vmatpush2.bf16.msra.mxu0 0
      %353 = vmatprep.subr.bf16.mxu0 0
      %354 = vmatpush2.bf16.msra.mxu0 0
      %355 = vmatprep.subr.bf16.mxu0 0
      %356 = vmatpush2.bf16.msra.mxu0 0
      %357 = vmatprep.subr.bf16.mxu0 0
      %358 = vmatpush2.bf16.msra.mxu0 0
      %359 = vmatprep.mubr.bf16.mxu0 0
      %360 = vmatmul.mubr.bf16.gmra.mxu0 %v271
      %v361 = vpop.f32.mrf.mxu0
      %v362 = vadd.f32 %v253, %v361
      %v363 = vpop.f32.mrf.mxu0
      %v364 = vpop.f32.mrf.mxu0
      %v365 = vadd.f32 %v253, %v364
      %v366 = vpop.f32.mrf.mxu0
      %367 = vmatprep.mubr.bf16.mxu0 0
      %368 = vmatmul.mubr.bf16.gmra.mxu0 %v272
      %v369 = vpop.f32.mrf.mxu0
      %v370 = vadd.f32 %v253, %v369
      %v371 = vpop.f32.mrf.mxu0
      %v372 = vpop.f32.mrf.mxu0
      %v373 = vadd.f32 %v253, %v372
      %v374 = vpop.f32.mrf.mxu0
      %375 = vmatprep.mubr.bf16.mxu0 0
      %376 = vmatmul.mubr.bf16.gmra.mxu0 %v273
      %v377 = vpop.f32.mrf.mxu0
      %v378 = vadd.f32 %v253, %v377
      %v379 = vpop.f32.mrf.mxu0
      %v380 = vpop.f32.mrf.mxu0
      %v381 = vadd.f32 %v253, %v380
      %v382 = vpop.f32.mrf.mxu0
      %383 = vmatprep.mubr.bf16.mxu0 0
      %384 = vmatmul.mubr.bf16.gmra.mxu0 %v274
      %v385 = vpop.f32.mrf.mxu0
      %v386 = vadd.f32 %v253, %v385
      %v387 = vpop.f32.mrf.mxu0
      %v388 = vpop.f32.mrf.mxu0
      %v389 = vadd.f32 %v253, %v388
      %v390 = vpop.f32.mrf.mxu0
      %391 = vdwg.mxu0
      %v392 = vld [vmem:[%s215] sm:$0xff]
      %v393 = vld [vmem:[%s215 + $0x8] sm:$0xff]
      %v394 = vld [vmem:[%s215 + $0x10] sm:$0xff]
      %v395 = vld [vmem:[%s215 + $0x18] sm:$0xff]
      %v396 = vld [vmem:[%s215 + $0x20] sm:$0xff]
      %v397 = vld [vmem:[%s215 + $0x28] sm:$0xff]
      %v398 = vld [vmem:[%s215 + $0x30] sm:$0xff]
      %v399 = vld [vmem:[%s215 + $0x38] sm:$0xff]
      %v400 = vadd.f32 %v362, %v392
      %v401 = vadd.f32 %v365, %v393
      %v402 = vadd.f32 %v370, %v394
      %v403 = vadd.f32 %v373, %v395
      %v404 = vadd.f32 %v378, %v396
      %v405 = vadd.f32 %v381, %v397
      %v406 = vadd.f32 %v386, %v398
      %v407 = vadd.f32 %v389, %v399
      %408 = vst [vmem:[%s221] sm:$0xff] %v400
      %409 = vst [vmem:[%s221 + $0x8] sm:$0xff] %v401
      %410 = vst [vmem:[%s221 + $0x10] sm:$0xff] %v402
      %411 = vst [vmem:[%s221 + $0x18] sm:$0xff] %v403
      %412 = vst [vmem:[%s221 + $0x20] sm:$0xff] %v404
      %413 = vst [vmem:[%s221 + $0x28] sm:$0xff] %v405
      %414 = vst [vmem:[%s221 + $0x30] sm:$0xff] %v406
      %415 = vst [vmem:[%s221 + $0x38] sm:$0xff] %v407
      %s416 = smul.u32 8, %s15
      %p417 = scmp.lt.s32.totalorder %s416, 15
      %s418 = scalar_select %p417, %s416, 15
      %s419 = smul.addr %s418, 8
      %s420 = scalar_lea.vmem %s4, %s419
      // Predicated region
      $region37: #{_lambda_.11} parent=35 // pred_check
        %p421 = pneg %p127
      $region38: #{_lambda_.11} parent=35 // pred_check_branch
        %423 = sbr.rel (%p421) target = $region40
      $region39: #{_lambda_.11} parent=35 // pred_region
        %s424 = smul.u32 8, %s15
      $region40: #{_lambda_.11} parent=35 // pred_fallthru
        _
    $region36: #{_lambda_.11} parent=5 // pred_fallthru
      _
    %p425 = scmp.le.s32.totalorder 2, %s10
    // Predicated region
    $region41: #{_lambda_.11} parent=5 // pred_check
      %p426 = pneg %p425
    $region42: #{_lambda_.11} parent=5 // pred_check_branch
      %428 = sbr.rel (%p426) target = $region44
    $region43: #{_lambda_.11} parent=5 // pred_region
      %s429 = ssub.s32 %s10, 2
      // Predicated region
      $region45: #{_lambda_.11} parent=43 // pred_check
        %p430 = pneg %p133
      $region46: #{_lambda_.11} parent=43 // pred_check_branch
        %432 = sbr.rel (%p430) target = $region48
      $region47: #{_lambda_.11} parent=43 // pred_region
        %s433 = smul.u32 8, %s16
        %p434 = scmp.lt.s32.totalorder %s433, 15
        %s435 = scalar_select %p434, %s433, 15
        %s436 = smul.addr %s435, 8
        %s437 = scalar_lea.vmem %s4, %s436
      $region48: #{_lambda_.11} parent=43 // pred_fallthru
        _
    $region44: #{_lambda_.11} parent=5 // pred_fallthru
      _
  $region6: #{_lambda_.11} parent=0 // loop_footer
    %s14 = sadd.s32 1, %s10
  $region7: #{_lambda_.11} parent=0 // loop_footer_branch
    %9 = sbr.rel target = $region3
  $region8: #{_lambda_.11} parent=0 // loop_exit
    _

// kernel: _lambda_.17
$region0: #{_lambda_.17}
  #allocation0 [shape = 'u32[]', space=smem, size = 0x4, offset = 0x4, fixed_abs, tag = 'smem constant byte address 0x4 - core index']
  #allocation1 [shape = 'u32[144,128]{1,0:T(1,128)}', space=vmem, size = 0x12000, scoped, tag = 'internal scratch']
  %s0 = inlined_call_operand.vmem [shape: f32[128,128], index: 0, kind: input, shape index: {}]
  %s1 = inlined_call_operand.vmem [shape: f32[1,128], index: 1, kind: input, shape index: {}]
  %s2 = inlined_call_operand.vmem [shape: f32[1,128], index: 2, kind: input, shape index: {}]
  %s3 = inlined_call_operand.vmem [shape: bf16[128,384], index: 3, kind: input, shape index: {}]
  %s4 = inlined_call_operand.hbm [shape: f32[128,384], index: 4, kind: output, shape index: {}]
  %s5 = sld [smem:[#allocation0]]
  $region90: #{_lambda_.17} parent=0
    _
  %s7 = ssub.s32 1, %s5
  %s8 = scalar_select 0, %s7, %s5
  $region1: #{_lambda_.17} parent=0
    #allocation2 [shape = 'u8[65536]{0}', space=vmem, size = 0x10000, scoped, tag = 'input window, operand 3']
    #allocation3 [shape = 'u8[65536]{0}', space=vmem, size = 0x10000, scoped, tag = 'output window, operand 0']
    #allocation4 [shape = 's32[2]{0}', space=sflag, size = 0x8, scoped, tag = 'scoped memory for _lambda_.17']
    %9 = vsyncpa [#allocation4], 0
    %s10 = scalar_lea.sflag [#allocation4], 1
    %11 = vsyncpa %s10, 0
    loop: start=0, step=1, limit=8
    $region2: #{_lambda_.17} parent=1 // loop_pre_header
      _
    $region3: #{_lambda_.17} parent=1 // loop_header
      %s13 = sphi 0, %s17
      %p14 = scmp.ge.s32.totalorder %s13, 8
      %s20 = sphi 0, %s32
      %s21 = sphi 0, %s28
      %s22 = sphi 0, %s20
      %s23 = sphi 0, %s21
      %s24 = sphi 0, %s22
      %s25 = sphi 0, %s23
      %s35 = sphi 0, %s37
      %s38 = sphi 0, %s35
      %s39 = sphi 0, %s38
      %s55 = sphi 0, %s39
      %s59 = sphi 0, %s59
      %s61 = sphi 0, %s59
      %s62 = sphi 0, %s61
      %s76 = sphi 0, %s62
      %s80 = sphi 0, %s80
      %s82 = sphi 0, %s80
      %s83 = sphi 0, %s82
      %s97 = sphi 0, %s83
      %s103 = sphi 0, %s105
      %s106 = sphi 0, %s103
      %s107 = sphi 0, %s106
      %s123 = sphi 0, %s107
      %s131 = sphi 0, %s133
      %s134 = sphi 0, %s131
      %s135 = sphi 0, %s134
      %s151 = sphi 0, %s135
    $region4: #{_lambda_.17} parent=1 // loop_header_branch
      %16 = sbr.rel (%p14) target = $region8
    $region5: #{_lambda_.17} parent=1 // loop_body
      %s18 = ssub.s32 %s13, 1
      %s19 = ssub.s32 %s13, 2
      %s26 = sadd.s32 1, %s21
      %p27 = scmp.ge.s32.totalorder %s26, 3
      %s28 = scalar_select %p27, 0, %s26
      %s29 = sadd.s32 1, %s20
      %s30 = scalar_select %p27, %s29, %s20
      %p31 = scmp.ge.s32.totalorder %s30, 2
      %s32 = scalar_select %p31, 0, %s30
      %s33 = ssub.s32 %s20, %s32
      %p34 = scmp.eq.s32.totalorder %s33, 0
      %s36 = sadd.s32 %s35, 1
      %s37 = scalar_select %p34, %s35, %s36
      %p40 = pneg %p34
      %p41 = scmp.eq.s32.totalorder %s13, 5
      %p42 = por %p40, %p41
      %p43 = scmp.ne.s32.totalorder %s35, %s38
      %p44 = scmp.eq.s32.totalorder %s13, 0
      %p45 = por %p43, %p44
      %p46 = scmp.ne.s32.totalorder %s35, %s38
      %p47 = scmp.eq.s32.totalorder %s18, 5
      %p48 = por %p46, %p47
      %p49 = scmp.ne.s32.totalorder %s38, %s39
      %p50 = scmp.eq.s32.totalorder %s18, 0
      %p51 = por %p49, %p50
      %p52 = scmp.ne.s32.totalorder %s38, %s39
      %p53 = scmp.eq.s32.totalorder %s19, 5
      %p54 = por %p52, %p53
      %p56 = scmp.ne.s32.totalorder %s39, %s55
      %p57 = scmp.eq.s32.totalorder %s19, 0
      %p58 = por %p56, %p57
      %s60 = sadd.s32 %s59, 1
      %p63 = scmp.eq.s32.totalorder %s13, 5
      %p64 = scmp.ne.s32.totalorder %s59, %s61
      %p65 = scmp.eq.s32.totalorder %s13, 0
      %p66 = por %p64, %p65
      %p67 = scmp.ne.s32.totalorder %s59, %s61
      %p68 = scmp.eq.s32.totalorder %s18, 5
      %p69 = por %p67, %p68
      %p70 = scmp.ne.s32.totalorder %s61, %s62
      %p71 = scmp.eq.s32.totalorder %s18, 0
      %p72 = por %p70, %p71
      %p73 = scmp.ne.s32.totalorder %s61, %s62
      %p74 = scmp.eq.s32.totalorder %s19, 5
      %p75 = por %p73, %p74
      %p77 = scmp.ne.s32.totalorder %s62, %s76
      %p78 = scmp.eq.s32.totalorder %s19, 0
      %p79 = por %p77, %p78
      %s81 = sadd.s32 %s80, 1
      %p84 = scmp.eq.s32.totalorder %s13, 5
      %p85 = scmp.ne.s32.totalorder %s80, %s82
      %p86 = scmp.eq.s32.totalorder %s13, 0
      %p87 = por %p85, %p86
      %p88 = scmp.ne.s32.totalorder %s80, %s82
      %p89 = scmp.eq.s32.totalorder %s18, 5
      %p90 = por %p88, %p89
      %p91 = scmp.ne.s32.totalorder %s82, %s83
      %p92 = scmp.eq.s32.totalorder %s18, 0
      %p93 = por %p91, %p92
      %p94 = scmp.ne.s32.totalorder %s82, %s83
      %p95 = scmp.eq.s32.totalorder %s19, 5
      %p96 = por %p94, %p95
      %p98 = scmp.ne.s32.totalorder %s83, %s97
      %p99 = scmp.eq.s32.totalorder %s19, 0
      %p100 = por %p98, %p99
      %s101 = ssub.s32 %s21, %s28
      %p102 = scmp.eq.s32.totalorder %s101, 0
      %s104 = sadd.s32 %s103, 1
      %s105 = scalar_select %p102, %s103, %s104
      %p108 = pneg %p102
      %p109 = scmp.eq.s32.totalorder %s13, 5
      %p110 = por %p108, %p109
      %p111 = scmp.ne.s32.totalorder %s103, %s106
      %p112 = scmp.eq.s32.totalorder %s13, 0
      %p113 = por %p111, %p112
      %p114 = scmp.ne.s32.totalorder %s103, %s106
      %p115 = scmp.eq.s32.totalorder %s18, 5
      %p116 = por %p114, %p115
      %p117 = scmp.ne.s32.totalorder %s106, %s107
      %p118 = scmp.eq.s32.totalorder %s18, 0
      %p119 = por %p117, %p118
      %p120 = scmp.ne.s32.totalorder %s106, %s107
      %p121 = scmp.eq.s32.totalorder %s19, 5
      %p122 = por %p120, %p121
      %p124 = scmp.ne.s32.totalorder %s107, %s123
      %p125 = scmp.eq.s32.totalorder %s19, 0
      %p126 = por %p124, %p125
      %s127 = ssub.s32 %s20, %s32
      %s128 = ssub.s32 %s21, %s28
      %s129 = sor.u32 %s127, %s128
      %p130 = scmp.eq.s32.totalorder %s129, 0
      %s132 = sadd.s32 %s131, 1
      %s133 = scalar_select %p130, %s131, %s132
      %p136 = pneg %p130
      %p137 = scmp.eq.s32.totalorder %s13, 5
      %p138 = por %p136, %p137
      %p139 = scmp.ne.s32.totalorder %s131, %s134
      %p140 = scmp.eq.s32.totalorder %s13, 0
      %p141 = por %p139, %p140
      %p142 = scmp.ne.s32.totalorder %s131, %s134
      %p143 = scmp.eq.s32.totalorder %s18, 5
      %p144 = por %p142, %p143
      %p145 = scmp.ne.s32.totalorder %s134, %s135
      %p146 = scmp.eq.s32.totalorder %s18, 0
      %p147 = por %p145, %p146
      %p148 = scmp.ne.s32.totalorder %s134, %s135
      %p149 = scmp.eq.s32.totalorder %s19, 5
      %p150 = por %p148, %p149
      %p152 = scmp.ne.s32.totalorder %s135, %s151
      %p153 = scmp.eq.s32.totalorder %s19, 0
      %p154 = por %p152, %p153
      %p155 = scmp.le.s32.totalorder 1, %s13
      %p156 = scmp.lt.s32.totalorder %s13, 7
      %p157 = pnand %p155, %p156
      %p158 = pneg %p157
      // Predicated region
      $region9: #{_lambda_.17} parent=5 // pred_check
        _
      $region10: #{_lambda_.17} parent=5 // pred_check_branch
        %160 = sbr.rel (%p157) target = $region12
      $region11: #{_lambda_.17} parent=5 // pred_region
        %s161 = ssub.s32 %s13, 1
        // Predicated region
        $region13: #{_lambda_.17} parent=11 // pred_check
          %p162 = pneg %p72
        $region14: #{_lambda_.17} parent=11 // pred_check_branch
          %164 = sbr.rel (%p162) target = $region16
        $region15: #{_lambda_.17} parent=11 // pred_region
          _
        $region16: #{_lambda_.17} parent=11 // pred_fallthru
          _
        // Predicated region
        $region17: #{_lambda_.17} parent=11 // pred_check
          %p165 = pneg %p93
        $region18: #{_lambda_.17} parent=11 // pred_check_branch
          %167 = sbr.rel (%p165) target = $region20
        $region19: #{_lambda_.17} parent=11 // pred_region
          _
        $region20: #{_lambda_.17} parent=11 // pred_fallthru
          _
      $region12: #{_lambda_.17} parent=5 // pred_fallthru
        _
      %p168 = scmp.lt.s32.totalorder %s13, 6
      // Predicated region
      $region21: #{_lambda_.17} parent=5 // pred_check
        %p169 = pneg %p168
      $region22: #{_lambda_.17} parent=5 // pred_check_branch
        %171 = sbr.rel (%p169) target = $region24
      $region23: #{_lambda_.17} parent=5 // pred_region
        // Predicated region
        $region25: #{_lambda_.17} parent=23 // pred_check
          %p172 = pneg %p45
        $region26: #{_lambda_.17} parent=23 // pred_check_branch
          %174 = sbr.rel (%p172) target = $region28
        $region27: #{_lambda_.17} parent=23 // pred_region
          %s175 = smul.u32 8, %s20
          %p176 = scmp.lt.s32.totalorder %s175, 15
          %s177 = scalar_select %p176, %s175, 15
          %s178 = smul.addr %s177, 8
          %s179 = scalar_lea.vmem %s0, %s178
          %s180 = smul.u32 8, %s20
        $region28: #{_lambda_.17} parent=23 // pred_fallthru
          _
        // Predicated region
        $region29: #{_lambda_.17} parent=23 // pred_check
          %p181 = pneg %p113
        $region30: #{_lambda_.17} parent=23 // pred_check_branch
          %183 = sbr.rel (%p181) target = $region32
        $region31: #{_lambda_.17} parent=23 // pred_region
          %s184 = sand.u32 %s103, 1
          %s185 = sand.u32 %s103, 1
          %s186 = smul.addr %s185, 64
          %s187 = scalar_lea.vmem [#allocation2], %s186
          %s188 = smul.addr %s21, 4
          %s189 = scalar_lea.vmem %s3, %s188
          // Predicated region
          $region33: #{_lambda_.17} parent=31 // pred_check
            _
          $region34: #{_lambda_.17} parent=31 // pred_check_branch
            %191 = sbr.rel (0) target = $region36
          $region35: #{_lambda_.17} parent=31 // pred_region
            // Predicated region
            $region37: #{_lambda_.17} parent=35 // pred_check
              _
            $region38: #{_lambda_.17} parent=35 // pred_check_branch
              %193 = sbr.rel target = $region40
            $region39: #{_lambda_.17} parent=35 // pred_region
              // Predicated region
              $region52: #{_lambda_.17} parent=39 // pred_check
                _
              $region53: #{_lambda_.17} parent=39 // pred_check_branch
                %239 = sbr.rel (0) target = $region55
              $region54: #{_lambda_.17} parent=39 // pred_region
                loop: start=0, step=1, limit=1
                $region56: #{_lambda_.17} parent=54 // loop_pre_header
                  _
                $region57: #{_lambda_.17} parent=54 // loop_header
                  %s241 = sphi 0, %s245
                  %p242 = scmp.ge.s32.totalorder %s241, 1
                  %s246 = sphi %s189, %s189
                  %s247 = sphi %s187, %s187
                $region58: #{_lambda_.17} parent=54 // loop_header_branch
                  %244 = sbr.rel (%p242) target = $region62
                $region59: #{_lambda_.17} parent=54 // loop_body
                  _
                $region60: #{_lambda_.17} parent=54 // loop_footer
                  %s245 = sadd.s32 1, %s241
                $region61: #{_lambda_.17} parent=54 // loop_footer_branch
                  %240 = sbr.rel target = $region57
                $region62: #{_lambda_.17} parent=54 // loop_exit
                  _
                %s249 = ssub.s32 16, 1
                loop: start=0, step=1, limit=1
                $region63: #{_lambda_.17} parent=54 // loop_pre_header
                  _
                $region64: #{_lambda_.17} parent=54 // loop_header
                  %s251 = sphi 0, %s255
                  %p252 = scmp.ge.s32.totalorder %s251, 1
                  %s256 = sphi %s189, %s189
                  %s257 = sphi %s187, %s187
                $region65: #{_lambda_.17} parent=54 // loop_header_branch
                  %254 = sbr.rel (%p252) target = $region69
                $region66: #{_lambda_.17} parent=54 // loop_body
                  %v258 = vld [vmem:[%s256] sm:%s249]
                  %259 = vst [vmem:[%s257] sm:%s249] %v258
                  %v260 = vld [vmem:[%s256 + $0xc] sm:%s249]
                  %261 = vst [vmem:[%s257 + $0x4] sm:%s249] %v260
                  %v262 = vld [vmem:[%s256 + $0x18] sm:%s249]
                  %263 = vst [vmem:[%s257 + $0x8] sm:%s249] %v262
                  %v264 = vld [vmem:[%s256 + $0x24] sm:%s249]
                  %265 = vst [vmem:[%s257 + $0xc] sm:%s249] %v264
                  %v266 = vld [vmem:[%s256 + $0x30] sm:%s249]
                  %267 = vst [vmem:[%s257 + $0x10] sm:%s249] %v266
                  %v268 = vld [vmem:[%s256 + $0x3c] sm:%s249]
                  %269 = vst [vmem:[%s257 + $0x14] sm:%s249] %v268
                  %v270 = vld [vmem:[%s256 + $0x48] sm:%s249]
                  %271 = vst [vmem:[%s257 + $0x18] sm:%s249] %v270
                  %v272 = vld [vmem:[%s256 + $0x54] sm:%s249]
                  %273 = vst [vmem:[%s257 + $0x1c] sm:%s249] %v272
                  %v274 = vld [vmem:[%s256 + $0x60] sm:%s249]
                  %275 = vst [vmem:[%s257 + $0x20] sm:%s249] %v274
                  %v276 = vld [vmem:[%s256 + $0x6c] sm:%s249]
                  %277 = vst [vmem:[%s257 + $0x24] sm:%s249] %v276
                  %v278 = vld [vmem:[%s256 + $0x78] sm:%s249]
                  %279 = vst [vmem:[%s257 + $0x28] sm:%s249] %v278
                  %v280 = vld [vmem:[%s256 + $0x84] sm:%s249]
                  %281 = vst [vmem:[%s257 + $0x2c] sm:%s249] %v280
                  %v282 = vld [vmem:[%s256 + $0x90] sm:%s249]
                  %283 = vst [vmem:[%s257 + $0x30] sm:%s249] %v282
                  %v284 = vld [vmem:[%s256 + $0x9c] sm:%s249]
                  %285 = vst [vmem:[%s257 + $0x34] sm:%s249] %v284
                  %v286 = vld [vmem:[%s256 + $0xa8] sm:%s249]
                  %287 = vst [vmem:[%s257 + $0x38] sm:%s249] %v286
                  %v288 = vld [vmem:[%s256 + $0xb4] sm:%s249]
                  %289 = vst [vmem:[%s257 + $0x3c] sm:%s249] %v288
                $region67: #{_lambda_.17} parent=54 // loop_footer
                  %s255 = sadd.s32 1, %s251
                $region68: #{_lambda_.17} parent=54 // loop_footer_branch
                  %250 = sbr.rel target = $region64
                $region69: #{_lambda_.17} parent=54 // loop_exit
                  _
              $region55: #{_lambda_.17} parent=39 // pred_fallthru
                _
            $region40: #{_lambda_.17} parent=35 // pred_fallthru
              _
            // Predicated region
            $region41: #{_lambda_.17} parent=35 // pred_check
              _
            $region42: #{_lambda_.17} parent=35 // pred_check_branch
              %195 = sbr.rel (0) target = $region44
            $region43: #{_lambda_.17} parent=35 // pred_region
              %s197 = ssub.s32 16, 1
              loop: start=0, step=1, limit=1
              $region45: #{_lambda_.17} parent=43 // loop_pre_header
                _
              $region46: #{_lambda_.17} parent=43 // loop_header
                %s199 = sphi 0, %s203
                %p200 = scmp.ge.s32.totalorder %s199, 1
                %s204 = sphi %s189, %s189
                %s205 = sphi %s187, %s187
              $region47: #{_lambda_.17} parent=43 // loop_header_branch
                %202 = sbr.rel (%p200) target = $region51
              $region48: #{_lambda_.17} parent=43 // loop_body
                %v206 = vld [vmem:[%s204] sm:%s197]
                %207 = vst [vmem:[%s205] sm:%s197] %v206
                %v208 = vld [vmem:[%s204 + $0xc] sm:%s197]
                %209 = vst [vmem:[%s205 + $0x4] sm:%s197] %v208
                %v210 = vld [vmem:[%s204 + $0x18] sm:%s197]
                %211 = vst [vmem:[%s205 + $0x8] sm:%s197] %v210
                %v212 = vld [vmem:[%s204 + $0x24] sm:%s197]
                %213 = vst [vmem:[%s205 + $0xc] sm:%s197] %v212
                %v214 = vld [vmem:[%s204 + $0x30] sm:%s197]
                %215 = vst [vmem:[%s205 + $0x10] sm:%s197] %v214
                %v216 = vld [vmem:[%s204 + $0x3c] sm:%s197]
                %217 = vst [vmem:[%s205 + $0x14] sm:%s197] %v216
                %v218 = vld [vmem:[%s204 + $0x48] sm:%s197]
                %219 = vst [vmem:[%s205 + $0x18] sm:%s197] %v218
                %v220 = vld [vmem:[%s204 + $0x54] sm:%s197]
                %221 = vst [vmem:[%s205 + $0x1c] sm:%s197] %v220
                %v222 = vld [vmem:[%s204 + $0x60] sm:%s197]
                %223 = vst [vmem:[%s205 + $0x20] sm:%s197] %v222
                %v224 = vld [vmem:[%s204 + $0x6c] sm:%s197]
                %225 = vst [vmem:[%s205 + $0x24] sm:%s197] %v224
                %v226 = vld [vmem:[%s204 + $0x78] sm:%s197]
                %227 = vst [vmem:[%s205 + $0x28] sm:%s197] %v226
                %v228 = vld [vmem:[%s204 + $0x84] sm:%s197]
                %229 = vst [vmem:[%s205 + $0x2c] sm:%s197] %v228
                %v230 = vld [vmem:[%s204 + $0x90] sm:%s197]
                %231 = vst [vmem:[%s205 + $0x30] sm:%s197] %v230
                %v232 = vld [vmem:[%s204 + $0x9c] sm:%s197]
                %233 = vst [vmem:[%s205 + $0x34] sm:%s197] %v232
                %v234 = vld [vmem:[%s204 + $0xa8] sm:%s197]
                %235 = vst [vmem:[%s205 + $0x38] sm:%s197] %v234
                %v236 = vld [vmem:[%s204 + $0xb4] sm:%s197]
                %237 = vst [vmem:[%s205 + $0x3c] sm:%s197] %v236
              $region49: #{_lambda_.17} parent=43 // loop_footer
                %s203 = sadd.s32 1, %s199
              $region50: #{_lambda_.17} parent=43 // loop_footer_branch
                %198 = sbr.rel target = $region46
              $region51: #{_lambda_.17} parent=43 // loop_exit
                _
            $region44: #{_lambda_.17} parent=35 // pred_fallthru
              _
          $region36: #{_lambda_.17} parent=31 // pred_fallthru
            _
          %290 = vnop
        $region32: #{_lambda_.17} parent=23 // pred_fallthru
          _
      $region24: #{_lambda_.17} parent=5 // pred_fallthru
        _
      %p291 = scmp.le.s32.totalorder 1, %s13
      %p292 = scmp.lt.s32.totalorder %s13, 7
      %p293 = pnand %p291, %p292
      %p294 = pneg %p293
      // Predicated region
      $region70: #{_lambda_.17} parent=5 // pred_check
        _
      $region71: #{_lambda_.17} parent=5 // pred_check_branch
        %296 = sbr.rel (%p293) target = $region73
      $region72: #{_lambda_.17} parent=5 // pred_region
        %s297 = ssub.s32 %s13, 1
        %s298 = sand.u32 %s106, 1
        %s299 = sand.u32 %s106, 1
        %s300 = smul.addr %s299, 64
        %s301 = scalar_lea.vmem [#allocation2], %s300
        // Predicated region
        $region74: #{_lambda_.17} parent=72 // pred_check
          %p302 = pneg %p119
        $region75: #{_lambda_.17} parent=72 // pred_check_branch
          %304 = sbr.rel (%p302) target = $region77
        $region76: #{_lambda_.17} parent=72 // pred_region
          _
        $region77: #{_lambda_.17} parent=72 // pred_fallthru
          _
        %s305 = smul.u32 8, %s22
        %p306 = scmp.lt.s32.totalorder %s305, 15
        %s307 = scalar_select %p306, %s305, 15
        %s308 = smul.addr %s307, 8
        %s309 = scalar_lea.vmem %s0, %s308
        %p310 = pneg %p51
        %p311 = pneg %p48
        %p312 = pneg %p72
        %p313 = pneg %p69
        %p314 = pneg %p93
        %p315 = pneg %p90
        %s316 = sand.u32 %s106, 1
        %s317 = sand.u32 %s106, 1
        %s318 = smul.addr %s317, 64
        %s319 = scalar_lea.vmem [#allocation2], %s318
        %p320 = pneg %p119
        %p321 = pneg %p116
        %p322 = pneg %p147
        %p323 = pneg %p144
        %s324 = sand.u32 %s134, 1
        %s325 = scalar_lea.sflag [#allocation4], %s324
        %s326 = sand.u32 %s134, 1
        %s327 = smul.addr %s326, 64
        %s328 = scalar_lea.vmem [#allocation3], %s327
        %s329 = smul.u32 8, %s22
        %p330 = scmp.lt.s32.totalorder %s329, 15
        %s331 = scalar_select %p330, %s329, 15
        %s332 = smul.addr %s331, 8
        %s333 = scalar_lea.vmem %s0, %s332
        %s334 = smul.u32 8, %s22
        %s335 = smul.u32 8, %s22
        %v337 = vld [vmem:[%s333] sm:$0xff]
        %v338 = vld [vmem:[%s333 + $0x8] sm:$0xff]
        %v339 = vld [vmem:[%s333 + $0x10] sm:$0xff]
        %v340 = vld [vmem:[%s333 + $0x18] sm:$0xff]
        %v341 = vld [vmem:[%s333 + $0x20] sm:$0xff]
        %v342 = vld [vmem:[%s333 + $0x28] sm:$0xff]
        %v343 = vld [vmem:[%s333 + $0x30] sm:$0xff]
        %v344 = vld [vmem:[%s333 + $0x38] sm:$0xff]
        %v345 = vld [vmem:[%s1] sm:$0x1]
        %v346 = vld [vmem:[%s2] sm:$0x1]
        %347 = vadd.xlane.f32.xlu0 %v337
        %v348 = vpop.xlane.xlu0 %347
        %349 = vadd.xlane.f32.xlu0 %v338
        %v350 = vpop.xlane.xlu0 %349
        %351 = vadd.xlane.f32.xlu0 %v339
        %v352 = vpop.xlane.xlu0 %351
        %353 = vadd.xlane.f32.xlu0 %v340
        %v354 = vpop.xlane.xlu0 %353
        %355 = vadd.xlane.f32.xlu0 %v341
        %v356 = vpop.xlane.xlu0 %355
        %357 = vadd.xlane.f32.xlu0 %v342
        %v358 = vpop.xlane.xlu0 %357
        %359 = vadd.xlane.f32.xlu0 %v343
        %v360 = vpop.xlane.xlu0 %359
        %361 = vadd.xlane.f32.xlu0 %v344
        %v362 = vpop.xlane.xlu0 %361
        %v363 = vrcp.pop 128.0
        %v364 = vmul.f32 %v348, %v363
        %v365 = vmul.f32 %v350, %v363
        %v366 = vmul.f32 %v352, %v363
        %v367 = vmul.f32 %v354, %v363
        %v368 = vmul.f32 %v356, %v363
        %v369 = vmul.f32 %v358, %v363
        %v370 = vmul.f32 %v360, %v363
        %v371 = vmul.f32 %v362, %v363
        %v372 = vsub.f32 %v337, %v364
        %v373 = vsub.f32 %v338, %v365
        %v374 = vsub.f32 %v339, %v366
        %v375 = vsub.f32 %v340, %v367
        %v376 = vsub.f32 %v341, %v368
        %v377 = vsub.f32 %v342, %v369
        %v378 = vsub.f32 %v343, %v370
        %v379 = vsub.f32 %v344, %v371
        %v380 = vmul.f32 %v372, %v372
        %v381 = vmul.f32 %v373, %v373
        %v382 = vmul.f32 %v374, %v374
        %v383 = vmul.f32 %v375, %v375
        %v384 = vmul.f32 %v376, %v376
        %v385 = vmul.f32 %v377, %v377
        %v386 = vmul.f32 %v378, %v378
        %v387 = vmul.f32 %v379, %v379
        %388 = vadd.xlane.f32.xlu0 %v380
        %v389 = vpop.xlane.xlu0 %388
        %390 = vadd.xlane.f32.xlu0 %v381
        %v391 = vpop.xlane.xlu0 %390
        %392 = vadd.xlane.f32.xlu0 %v382
        %v393 = vpop.xlane.xlu0 %392
        %394 = vadd.xlane.f32.xlu0 %v383
        %v395 = vpop.xlane.xlu0 %394
        %396 = vadd.xlane.f32.xlu0 %v384
        %v397 = vpop.xlane.xlu0 %396
        %398 = vadd.xlane.f32.xlu0 %v385
        %v399 = vpop.xlane.xlu0 %398
        %400 = vadd.xlane.f32.xlu0 %v386
        %v401 = vpop.xlane.xlu0 %400
        %402 = vadd.xlane.f32.xlu0 %v387
        %v403 = vpop.xlane.xlu0 %402
        %v404 = vmul.f32 %v389, %v363
        %v405 = vmul.f32 %v391, %v363
        %v406 = vmul.f32 %v393, %v363
        %v407 = vmul.f32 %v395, %v363
        %v408 = vmul.f32 %v397, %v363
        %v409 = vmul.f32 %v399, %v363
        %v410 = vmul.f32 %v401, %v363
        %v411 = vmul.f32 %v403, %v363
        %v412 = vadd.f32 %v404, 1e-05
        %v413 = vadd.f32 %v405, 1e-05
        %v414 = vadd.f32 %v406, 1e-05
        %v415 = vadd.f32 %v407, 1e-05
        %v416 = vadd.f32 %v408, 1e-05
        %v417 = vadd.f32 %v409, 1e-05
        %v418 = vadd.f32 %v410, 1e-05
        %v419 = vadd.f32 %v411, 1e-05
        %v420 = vrsqrt.pop %v412
        %v421 = vrsqrt.pop %v413
        %v422 = vrsqrt.pop %v414
        %v423 = vrsqrt.pop %v415
        %v424 = vrsqrt.pop %v416
        %v425 = vrsqrt.pop %v417
        %v426 = vrsqrt.pop %v418
        %v427 = vrsqrt.pop %v419
        %v428 = vmul.f32 %v372, %v420
        %v429 = vmul.f32 %v373, %v421
        %v430 = vmul.f32 %v374, %v422
        %v431 = vmul.f32 %v375, %v423
        %v432 = vmul.f32 %v376, %v424
        %v433 = vmul.f32 %v377, %v425
        %v434 = vmul.f32 %v378, %v426
        %v435 = vmul.f32 %v379, %v427
        %v437 = vlaneseq
        %v438 = vshrl.u32 %v437, 7
        %v439 = vsub.s32 0, %v438
        %v440 = vrot.slane %v345, %v439
        %v442 = vmul.f32 %v428, %v440
        %v443 = vmul.f32 %v429, %v440
        %v444 = vmul.f32 %v430, %v440
        %v445 = vmul.f32 %v431, %v440
        %v446 = vmul.f32 %v432, %v440
        %v447 = vmul.f32 %v433, %v440
        %v448 = vmul.f32 %v434, %v440
        %v449 = vmul.f32 %v435, %v440
        %v451 = vlaneseq
        %v452 = vshrl.u32 %v451, 7
        %v453 = vsub.s32 0, %v452
        %v454 = vrot.slane %v346, %v453
        %v456 = vadd.f32 %v442, %v454
        %v457 = vadd.f32 %v443, %v454
        %v458 = vadd.f32 %v444, %v454
        %v459 = vadd.f32 %v445, %v454
        %v460 = vadd.f32 %v446, %v454
        %v461 = vadd.f32 %v447, %v454
        %v462 = vadd.f32 %v448, %v454
        %v463 = vadd.f32 %v449, %v454
        %v464 = vpack.c.bf16 %v457, %v456
        %v465 = vpack.c.bf16 %v459, %v458
        %v466 = vpack.c.bf16 %v461, %v460
        %v467 = vpack.c.bf16 %v463, %v462
        %v468 = vld [vmem:[%s301] sm:$0xf]
        %v469 = vld [vmem:[%s301 + $0x4] sm:$0xf]
        %v470 = vld [vmem:[%s301 + $0x8] sm:$0xf]
        %v471 = vld [vmem:[%s301 + $0xc] sm:$0xf]
        %v472 = vld [vmem:[%s301 + $0x10] sm:$0xf]
        %v473 = vld [vmem:[%s301 + $0x14] sm:$0xf]
        %v474 = vld [vmem:[%s301 + $0x18] sm:$0xf]
        %v475 = vld [vmem:[%s301 + $0x1c] sm:$0xf]
        %v476 = vld [vmem:[%s301 + $0x20] sm:$0xf]
        %v477 = vld [vmem:[%s301 + $0x24] sm:$0xf]
        %v478 = vld [vmem:[%s301 + $0x28] sm:$0xf]
        %v479 = vld [vmem:[%s301 + $0x2c] sm:$0xf]
        %v480 = vld [vmem:[%s301 + $0x30] sm:$0xf]
        %v481 = vld [vmem:[%s301 + $0x34] sm:$0xf]
        %v482 = vld [vmem:[%s301 + $0x38] sm:$0xf]
        %v483 = vld [vmem:[%s301 + $0x3c] sm:$0xf]
        %v500 = vunpack.c.l.b16 %v468
        %v501 = vunpack.c.l.b16 %v469
        %v502 = vunpack.c.l.b16 %v470
        %v503 = vunpack.c.l.b16 %v471
        %v504 = vunpack.c.l.b16 %v472
        %v505 = vunpack.c.l.b16 %v473
        %v506 = vunpack.c.l.b16 %v474
        %v507 = vunpack.c.l.b16 %v475
        %v508 = vunpack.c.l.b16 %v476
        %v509 = vunpack.c.l.b16 %v477
        %v510 = vunpack.c.l.b16 %v478
        %v511 = vunpack.c.l.b16 %v479
        %v512 = vunpack.c.l.b16 %v480
        %v513 = vunpack.c.l.b16 %v481
        %v514 = vunpack.c.l.b16 %v482
        %v515 = vunpack.c.l.b16 %v483
        %v516 = vpack.c.b16 %v501, %v500
        %v517 = vpack.c.b16 %v503, %v502
        %v518 = vpack.c.b16 %v505, %v504
        %v519 = vpack.c.b16 %v507, %v506
        %v520 = vpack.c.b16 %v509, %v508
        %v521 = vpack.c.b16 %v511, %v510
        %v522 = vpack.c.b16 %v513, %v512
        %v523 = vpack.c.b16 %v515, %v514
        %532 = vmatprep.subr.bf16.mxu0 0
        %533 = vmatpush1.bf16.msra.mxu0 %v523
        %534 = vmatprep.subr.bf16.mxu0 0
        %535 = vmatpush1.bf16.msra.mxu0 %v522
        %536 = vmatprep.subr.bf16.mxu0 0
        %537 = vmatpush1.bf16.msra.mxu0 %v521
        %538 = vmatprep.subr.bf16.mxu0 0
        %539 = vmatpush1.bf16.msra.mxu0 %v520
        %540 = vmatprep.subr.bf16.mxu0 0
        %541 = vmatpush1.bf16.msra.mxu0 %v519
        %542 = vmatprep.subr.bf16.mxu0 0
        %543 = vmatpush1.bf16.msra.mxu0 %v518
        %544 = vmatprep.subr.bf16.mxu0 0
        %545 = vmatpush1.bf16.msra.mxu0 %v517
        %546 = vmatprep.subr.bf16.mxu0 0
        %547 = vmatpush1.bf16.msra.mxu0 %v516
        %548 = vmatprep.subr.bf16.mxu0 0
        %549 = vmatpush2.bf16.msra.mxu0 0
        %550 = vmatprep.subr.bf16.mxu0 0
        %551 = vmatpush2.bf16.msra.mxu0 0
        %552 = vmatprep.subr.bf16.mxu0 0
        %553 = vmatpush2.bf16.msra.mxu0 0
        %554 = vmatprep.subr.bf16.mxu0 0
        %555 = vmatpush2.bf16.msra.mxu0 0
        %556 = vmatprep.subr.bf16.mxu0 0
        %557 = vmatpush2.bf16.msra.mxu0 0
        %558 = vmatprep.subr.bf16.mxu0 0
        %559 = vmatpush2.bf16.msra.mxu0 0
        %560 = vmatprep.subr.bf16.mxu0 0
        %561 = vmatpush2.bf16.msra.mxu0 0
        %562 = vmatprep.subr.bf16.mxu0 0
        %563 = vmatpush2.bf16.msra.mxu0 0
        %564 = vmatprep.mubr.bf16.mxu0 0
        %565 = vmatmul.mubr.bf16.gmra.mxu0 %v464
        %v566 = vpop.f32.mrf.mxu0
        %v567 = vadd.f32 0.0, %v566
        %v568 = vpop.f32.mrf.mxu0
        %v569 = vpop.f32.mrf.mxu0
        %v570 = vadd.f32 0.0, %v569
        %v571 = vpop.f32.mrf.mxu0
        %572 = vmatprep.mubr.bf16.mxu0 0
        %573 = vmatmul.mubr.bf16.gmra.mxu0 %v465
        %v574 = vpop.f32.mrf.mxu0
        %v575 = vadd.f32 0.0, %v574
        %v576 = vpop.f32.mrf.mxu0
        %v577 = vpop.f32.mrf.mxu0
        %v578 = vadd.f32 0.0, %v577
        %v579 = vpop.f32.mrf.mxu0
        %580 = vmatprep.mubr.bf16.mxu0 0
        %581 = vmatmul.mubr.bf16.gmra.mxu0 %v466
        %v582 = vpop.f32.mrf.mxu0
        %v583 = vadd.f32 0.0, %v582
        %v584 = vpop.f32.mrf.mxu0
        %v585 = vpop.f32.mrf.mxu0
        %v586 = vadd.f32 0.0, %v585
        %v587 = vpop.f32.mrf.mxu0
        %588 = vmatprep.mubr.bf16.mxu0 0
        %589 = vmatmul.mubr.bf16.gmra.mxu0 %v467
        %v590 = vpop.f32.mrf.mxu0
        %v591 = vadd.f32 0.0, %v590
        %v592 = vpop.f32.mrf.mxu0
        %v593 = vpop.f32.mrf.mxu0
        %v594 = vadd.f32 0.0, %v593
        %v595 = vpop.f32.mrf.mxu0
        %596 = vdwg.mxu0
        %597 = vst [vmem:[%s328] sm:$0xff] %v567
        %598 = vst [vmem:[%s328 + $0x8] sm:$0xff] %v570
        %599 = vst [vmem:[%s328 + $0x10] sm:$0xff] %v575
        %600 = vst [vmem:[%s328 + $0x18] sm:$0xff] %v578
        %601 = vst [vmem:[%s328 + $0x20] sm:$0xff] %v583
        %602 = vst [vmem:[%s328 + $0x28] sm:$0xff] %v586
        %603 = vst [vmem:[%s328 + $0x30] sm:$0xff] %v591
        %604 = vst [vmem:[%s328 + $0x38] sm:$0xff] %v594
        %s605 = sand.u32 %s134, 1
        %s606 = scalar_lea.sflag [#allocation4], %s605
        %s607 = sand.u32 %s134, 1
        %s608 = smul.addr %s607, 64
        %s609 = scalar_lea.vmem [#allocation3], %s608
        // Predicated region
        $region78: #{_lambda_.17} parent=72 // pred_check
          %p610 = pneg %p144
        $region79: #{_lambda_.17} parent=72 // pred_check_branch
          %612 = sbr.rel (%p610) target = $region81
        $region80: #{_lambda_.17} parent=72 // pred_region
          %s613 = smul.u32 8, %s22
          %s615 = ssub.s32 1024, 1024
          %616 = vsyncadd %s606, %s615
          %s617 = smul.addr %s613, 3
          %s618 = sadd.s32 %s23, %s617
          %s619 = smul.addr %s618, 128
          %s620 = scalar_lea.hbm %s4, %s619
          %s621 = sshll.u32 %s609, 4
          %s622 = int_to_ptr.vmem [resolvable:$true] %s621
          %627 = dma.vmem_to_hbm [thread:$0]  %s622, 1024, %s620, %s606, 128, 384, 8
        $region81: #{_lambda_.17} parent=72 // pred_fallthru
          _
      $region73: #{_lambda_.17} parent=5 // pred_fallthru
        _
      %p628 = scmp.le.s32.totalorder 2, %s13
      // Predicated region
      $region82: #{_lambda_.17} parent=5 // pred_check
        %p629 = pneg %p628
      $region83: #{_lambda_.17} parent=5 // pred_check_branch
        %631 = sbr.rel (%p629) target = $region85
      $region84: #{_lambda_.17} parent=5 // pred_region
        %s632 = ssub.s32 %s13, 2
        // Predicated region
        $region86: #{_lambda_.17} parent=84 // pred_check
          %p633 = pneg %p150
        $region87: #{_lambda_.17} parent=84 // pred_check_branch
          %635 = sbr.rel (%p633) target = $region89
        $region88: #{_lambda_.17} parent=84 // pred_region
          %s636 = sand.u32 %s135, 1
          %s637 = scalar_lea.sflag [#allocation4], %s636
          %s638 = sand.u32 %s135, 1
          %s639 = smul.addr %s638, 64
          %s640 = scalar_lea.vmem [#allocation3], %s639
          %641 = dma.done %s637, 1024
        $region89: #{_lambda_.17} parent=84 // pred_fallthru
          _
      $region85: #{_lambda_.17} parent=5 // pred_fallthru
        _
    $region6: #{_lambda_.17} parent=1 // loop_footer
      %s17 = sadd.s32 1, %s13
    $region7: #{_lambda_.17} parent=1 // loop_footer_branch
      %12 = sbr.rel target = $region3
    $region8: #{_lambda_.17} parent=1 // loop_exit
      _
    %642 = vsyncpa [#allocation4], 1
    %s643 = scalar_lea.sflag [#allocation4], 1
    %644 = vsyncpa %s643, 1

// kernel: _lambda_.12
$region0: #{_lambda_.12}
  #allocation0 [shape = 'u32[]', space=smem, size = 0x4, offset = 0x4, fixed_abs, tag = 'smem constant byte address 0x4 - core index']
  #allocation1 [shape = 'u32[144,128]{1,0:T(1,128)}', space=vmem, size = 0x12000, scoped, tag = 'internal scratch']
  #allocation2 [shape = 'bf16[64,128]{1,0:T(8,128)(2,1)}', space=vmem, size = 0x4000, scoped, tag = 'scratch operand']
  #allocation3 [shape = 'f32[64,128]{1,0:T(8,128)}', space=vmem, size = 0x8000, scoped, tag = 'scratch operand']
  %s0 = inlined_call_operand.vmem [shape: f32[128,128], index: 0, kind: input, shape index: {}]
  %s1 = inlined_call_operand.vmem [shape: f32[1,128], index: 1, kind: input, shape index: {}]
  %s2 = inlined_call_operand.vmem [shape: f32[1,128], index: 2, kind: input, shape index: {}]
  %s3 = inlined_call_operand.vmem [shape: bf16[128,512], index: 3, kind: input, shape index: {}]
  %s4 = inlined_call_operand.vmem [shape: f32[1,512], index: 4, kind: input, shape index: {}]
  %s5 = inlined_call_operand.vmem [shape: bf16[512,128], index: 5, kind: input, shape index: {}]
  %s6 = inlined_call_operand.vmem [shape: f32[1,128], index: 6, kind: input, shape index: {}]
  %s7 = inlined_call_operand.vmem [shape: f32[128,128], index: 7, kind: output, shape index: {}]
  %s8 = sld [smem:[#allocation0]]
  $region107: #{_lambda_.12} parent=0
    _
  %s10 = ssub.s32 1, %s8
  %s11 = scalar_select 0, %s10, %s8
  $region1: #{_lambda_.12} parent=0
    #allocation4 [shape = 'u8[131072]{0}', space=vmem, size = 0x20000, scoped, tag = 'input window, operand 3']
    loop: start=0, step=1, limit=6
    $region2: #{_lambda_.12} parent=1 // loop_pre_header
      _
    $region3: #{_lambda_.12} parent=1 // loop_header
      %s13 = sphi 0, %s17
      %p14 = scmp.ge.s32.totalorder %s13, 6
      %s20 = sphi 0, %s32
      %s21 = sphi 0, %s28
      %s22 = sphi 0, %s20
      %s23 = sphi 0, %s21
      %s24 = sphi 0, %s22
      %s25 = sphi 0, %s23
      %s35 = sphi 0, %s37
      %s38 = sphi 0, %s35
      %s39 = sphi 0, %s38
      %s55 = sphi 0, %s39
      %s59 = sphi 0, %s59
      %s61 = sphi 0, %s59
      %s62 = sphi 0, %s61
      %s76 = sphi 0, %s62
      %s80 = sphi 0, %s80
      %s82 = sphi 0, %s80
      %s83 = sphi 0, %s82
      %s97 = sphi 0, %s83
      %s103 = sphi 0, %s105
      %s106 = sphi 0, %s103
      %s107 = sphi 0, %s106
      %s123 = sphi 0, %s107
      %s129 = sphi 0, %s131
      %s132 = sphi 0, %s129
      %s133 = sphi 0, %s132
      %s149 = sphi 0, %s133
      %s155 = sphi 0, %s157
      %s158 = sphi 0, %s155
      %s159 = sphi 0, %s158
      %s175 = sphi 0, %s159
      %s179 = sphi 0, %s179
      %s181 = sphi 0, %s179
      %s182 = sphi 0, %s181
      %s196 = sphi 0, %s182
      %s202 = sphi 0, %s204
      %s205 = sphi 0, %s202
      %s206 = sphi 0, %s205
      %s222 = sphi 0, %s206
    $region4: #{_lambda_.12} parent=1 // loop_header_branch
      %16 = sbr.rel (%p14) target = $region8
    $region5: #{_lambda_.12} parent=1 // loop_body
      %s18 = ssub.s32 %s13, 1
      %s19 = ssub.s32 %s13, 2
      %s26 = sadd.s32 1, %s21
      %p27 = scmp.ge.s32.totalorder %s26, 2
      %s28 = scalar_select %p27, 0, %s26
      %s29 = sadd.s32 1, %s20
      %s30 = scalar_select %p27, %s29, %s20
      %p31 = scmp.ge.s32.totalorder %s30, 2
      %s32 = scalar_select %p31, 0, %s30
      %s33 = ssub.s32 %s20, %s32
      %p34 = scmp.eq.s32.totalorder %s33, 0
      %s36 = sadd.s32 %s35, 1
      %s37 = scalar_select %p34, %s35, %s36
      %p40 = pneg %p34
      %p41 = scmp.eq.s32.totalorder %s13, 3
      %p42 = por %p40, %p41
      %p43 = scmp.ne.s32.totalorder %s35, %s38
      %p44 = scmp.eq.s32.totalorder %s13, 0
      %p45 = por %p43, %p44
      %p46 = scmp.ne.s32.totalorder %s35, %s38
      %p47 = scmp.eq.s32.totalorder %s18, 3
      %p48 = por %p46, %p47
      %p49 = scmp.ne.s32.totalorder %s38, %s39
      %p50 = scmp.eq.s32.totalorder %s18, 0
      %p51 = por %p49, %p50
      %p52 = scmp.ne.s32.totalorder %s38, %s39
      %p53 = scmp.eq.s32.totalorder %s19, 3
      %p54 = por %p52, %p53
      %p56 = scmp.ne.s32.totalorder %s39, %s55
      %p57 = scmp.eq.s32.totalorder %s19, 0
      %p58 = por %p56, %p57
      %s60 = sadd.s32 %s59, 1
      %p63 = scmp.eq.s32.totalorder %s13, 3
      %p64 = scmp.ne.s32.totalorder %s59, %s61
      %p65 = scmp.eq.s32.totalorder %s13, 0
      %p66 = por %p64, %p65
      %p67 = scmp.ne.s32.totalorder %s59, %s61
      %p68 = scmp.eq.s32.totalorder %s18, 3
      %p69 = por %p67, %p68
      %p70 = scmp.ne.s32.totalorder %s61, %s62
      %p71 = scmp.eq.s32.totalorder %s18, 0
      %p72 = por %p70, %p71
      %p73 = scmp.ne.s32.totalorder %s61, %s62
      %p74 = scmp.eq.s32.totalorder %s19, 3
      %p75 = por %p73, %p74
      %p77 = scmp.ne.s32.totalorder %s62, %s76
      %p78 = scmp.eq.s32.totalorder %s19, 0
      %p79 = por %p77, %p78
      %s81 = sadd.s32 %s80, 1
      %p84 = scmp.eq.s32.totalorder %s13, 3
      %p85 = scmp.ne.s32.totalorder %s80, %s82
      %p86 = scmp.eq.s32.totalorder %s13, 0
      %p87 = por %p85, %p86
      %p88 = scmp.ne.s32.totalorder %s80, %s82
      %p89 = scmp.eq.s32.totalorder %s18, 3
      %p90 = por %p88, %p89
      %p91 = scmp.ne.s32.totalorder %s82, %s83
      %p92 = scmp.eq.s32.totalorder %s18, 0
      %p93 = por %p91, %p92
      %p94 = scmp.ne.s32.totalorder %s82, %s83
      %p95 = scmp.eq.s32.totalorder %s19, 3
      %p96 = por %p94, %p95
      %p98 = scmp.ne.s32.totalorder %s83, %s97
      %p99 = scmp.eq.s32.totalorder %s19, 0
      %p100 = por %p98, %p99
      %s101 = ssub.s32 %s21, %s28
      %p102 = scmp.eq.s32.totalorder %s101, 0
      %s104 = sadd.s32 %s103, 1
      %s105 = scalar_select %p102, %s103, %s104
      %p108 = pneg %p102
      %p109 = scmp.eq.s32.totalorder %s13, 3
      %p110 = por %p108, %p109
      %p111 = scmp.ne.s32.totalorder %s103, %s106
      %p112 = scmp.eq.s32.totalorder %s13, 0
      %p113 = por %p111, %p112
      %p114 = scmp.ne.s32.totalorder %s103, %s106
      %p115 = scmp.eq.s32.totalorder %s18, 3
      %p116 = por %p114, %p115
      %p117 = scmp.ne.s32.totalorder %s106, %s107
      %p118 = scmp.eq.s32.totalorder %s18, 0
      %p119 = por %p117, %p118
      %p120 = scmp.ne.s32.totalorder %s106, %s107
      %p121 = scmp.eq.s32.totalorder %s19, 3
      %p122 = por %p120, %p121
      %p124 = scmp.ne.s32.totalorder %s107, %s123
      %p125 = scmp.eq.s32.totalorder %s19, 0
      %p126 = por %p124, %p125
      %s127 = ssub.s32 %s21, %s28
      %p128 = scmp.eq.s32.totalorder %s127, 0
      %s130 = sadd.s32 %s129, 1
      %s131 = scalar_select %p128, %s129, %s130
      %p134 = pneg %p128
      %p135 = scmp.eq.s32.totalorder %s13, 3
      %p136 = por %p134, %p135
      %p137 = scmp.ne.s32.totalorder %s129, %s132
      %p138 = scmp.eq.s32.totalorder %s13, 0
      %p139 = por %p137, %p138
      %p140 = scmp.ne.s32.totalorder %s129, %s132
      %p141 = scmp.eq.s32.totalorder %s18, 3
      %p142 = por %p140, %p141
      %p143 = scmp.ne.s32.totalorder %s132, %s133
      %p144 = scmp.eq.s32.totalorder %s18, 0
      %p145 = por %p143, %p144
      %p146 = scmp.ne.s32.totalorder %s132, %s133
      %p147 = scmp.eq.s32.totalorder %s19, 3
      %p148 = por %p146, %p147
      %p150 = scmp.ne.s32.totalorder %s133, %s149
      %p151 = scmp.eq.s32.totalorder %s19, 0
      %p152 = por %p150, %p151
      %s153 = ssub.s32 %s21, %s28
      %p154 = scmp.eq.s32.totalorder %s153, 0
      %s156 = sadd.s32 %s155, 1
      %s157 = scalar_select %p154, %s155, %s156
      %p160 = pneg %p154
      %p161 = scmp.eq.s32.totalorder %s13, 3
      %p162 = por %p160, %p161
      %p163 = scmp.ne.s32.totalorder %s155, %s158
      %p164 = scmp.eq.s32.totalorder %s13, 0
      %p165 = por %p163, %p164
      %p166 = scmp.ne.s32.totalorder %s155, %s158
      %p167 = scmp.eq.s32.totalorder %s18, 3
      %p168 = por %p166, %p167
      %p169 = scmp.ne.s32.totalorder %s158, %s159
      %p170 = scmp.eq.s32.totalorder %s18, 0
      %p171 = por %p169, %p170
      %p172 = scmp.ne.s32.totalorder %s158, %s159
      %p173 = scmp.eq.s32.totalorder %s19, 3
      %p174 = por %p172, %p173
      %p176 = scmp.ne.s32.totalorder %s159, %s175
      %p177 = scmp.eq.s32.totalorder %s19, 0
      %p178 = por %p176, %p177
      %s180 = sadd.s32 %s179, 1
      %p183 = scmp.eq.s32.totalorder %s13, 3
      %p184 = scmp.ne.s32.totalorder %s179, %s181
      %p185 = scmp.eq.s32.totalorder %s13, 0
      %p186 = por %p184, %p185
      %p187 = scmp.ne.s32.totalorder %s179, %s181
      %p188 = scmp.eq.s32.totalorder %s18, 3
      %p189 = por %p187, %p188
      %p190 = scmp.ne.s32.totalorder %s181, %s182
      %p191 = scmp.eq.s32.totalorder %s18, 0
      %p192 = por %p190, %p191
      %p193 = scmp.ne.s32.totalorder %s181, %s182
      %p194 = scmp.eq.s32.totalorder %s19, 3
      %p195 = por %p193, %p194
      %p197 = scmp.ne.s32.totalorder %s182, %s196
      %p198 = scmp.eq.s32.totalorder %s19, 0
      %p199 = por %p197, %p198
      %s200 = ssub.s32 %s20, %s32
      %p201 = scmp.eq.s32.totalorder %s200, 0
      %s203 = sadd.s32 %s202, 1
      %s204 = scalar_select %p201, %s202, %s203
      %p207 = pneg %p201
      %p208 = scmp.eq.s32.totalorder %s13, 3
      %p209 = por %p207, %p208
      %p210 = scmp.ne.s32.totalorder %s202, %s205
      %p211 = scmp.eq.s32.totalorder %s13, 0
      %p212 = por %p210, %p211
      %p213 = scmp.ne.s32.totalorder %s202, %s205
      %p214 = scmp.eq.s32.totalorder %s18, 3
      %p215 = por %p213, %p214
      %p216 = scmp.ne.s32.totalorder %s205, %s206
      %p217 = scmp.eq.s32.totalorder %s18, 0
      %p218 = por %p216, %p217
      %p219 = scmp.ne.s32.totalorder %s205, %s206
      %p220 = scmp.eq.s32.totalorder %s19, 3
      %p221 = por %p219, %p220
      %p223 = scmp.ne.s32.totalorder %s206, %s222
      %p224 = scmp.eq.s32.totalorder %s19, 0
      %p225 = por %p223, %p224
      %p226 = scmp.le.s32.totalorder 1, %s13
      %p227 = scmp.lt.s32.totalorder %s13, 5
      %p228 = pnand %p226, %p227
      %p229 = pneg %p228
      // Predicated region
      $region9: #{_lambda_.12} parent=5 // pred_check
        _
      $region10: #{_lambda_.12} parent=5 // pred_check_branch
        %231 = sbr.rel (%p228) target = $region12
      $region11: #{_lambda_.12} parent=5 // pred_region
        %s232 = ssub.s32 %s13, 1
        // Predicated region
        $region13: #{_lambda_.12} parent=11 // pred_check
          %p233 = pneg %p72
        $region14: #{_lambda_.12} parent=11 // pred_check_branch
          %235 = sbr.rel (%p233) target = $region16
        $region15: #{_lambda_.12} parent=11 // pred_region
          _
        $region16: #{_lambda_.12} parent=11 // pred_fallthru
          _
        // Predicated region
        $region17: #{_lambda_.12} parent=11 // pred_check
          %p236 = pneg %p93
        $region18: #{_lambda_.12} parent=11 // pred_check_branch
          %238 = sbr.rel (%p236) target = $region20
        $region19: #{_lambda_.12} parent=11 // pred_region
          _
        $region20: #{_lambda_.12} parent=11 // pred_fallthru
          _
        // Predicated region
        $region21: #{_lambda_.12} parent=11 // pred_check
          %p239 = pneg %p192
        $region22: #{_lambda_.12} parent=11 // pred_check_branch
          %241 = sbr.rel (%p239) target = $region24
        $region23: #{_lambda_.12} parent=11 // pred_region
          _
        $region24: #{_lambda_.12} parent=11 // pred_fallthru
          _
      $region12: #{_lambda_.12} parent=5 // pred_fallthru
        _
      %p242 = scmp.lt.s32.totalorder %s13, 4
      // Predicated region
      $region25: #{_lambda_.12} parent=5 // pred_check
        %p243 = pneg %p242
      $region26: #{_lambda_.12} parent=5 // pred_check_branch
        %245 = sbr.rel (%p243) target = $region28
      $region27: #{_lambda_.12} parent=5 // pred_region
        // Predicated region
        $region29: #{_lambda_.12} parent=27 // pred_check
          %p246 = pneg %p45
        $region30: #{_lambda_.12} parent=27 // pred_check_branch
          %248 = sbr.rel (%p246) target = $region32
        $region31: #{_lambda_.12} parent=27 // pred_region
          %s249 = smul.u32 8, %s20
          %p250 = scmp.lt.s32.totalorder %s249, 15
          %s251 = scalar_select %p250, %s249, 15
          %s252 = smul.addr %s251, 8
          %s253 = scalar_lea.vmem %s0, %s252
          %s254 = smul.u32 8, %s20
        $region32: #{_lambda_.12} parent=27 // pred_fallthru
          _
        // Predicated region
        $region33: #{_lambda_.12} parent=27 // pred_check
          %p255 = pneg %p113
        $region34: #{_lambda_.12} parent=27 // pred_check_branch
          %257 = sbr.rel (%p255) target = $region36
        $region35: #{_lambda_.12} parent=27 // pred_region
          %s258 = sand.u32 %s103, 1
          %s259 = sand.u32 %s103, 1
          %s260 = smul.addr %s259, 128
          %s261 = scalar_lea.vmem [#allocation4], %s260
          %s262 = smul.u32 2, %s21
          %s263 = smul.addr %s262, 4
          %s264 = scalar_lea.vmem %s3, %s263
          // Predicated region
          $region37: #{_lambda_.12} parent=35 // pred_check
            _
          $region38: #{_lambda_.12} parent=35 // pred_check_branch
            %266 = sbr.rel (0) target = $region40
          $region39: #{_lambda_.12} parent=35 // pred_region
            // Predicated region
            $region41: #{_lambda_.12} parent=39 // pred_check
              _
            $region42: #{_lambda_.12} parent=39 // pred_check_branch
              %268 = sbr.rel (0) target = $region44
            $region43: #{_lambda_.12} parent=39 // pred_region
              // Predicated region
              $region56: #{_lambda_.12} parent=43 // pred_check
                _
              $region57: #{_lambda_.12} parent=43 // pred_check_branch
                %314 = sbr.rel (0) target = $region59
              $region58: #{_lambda_.12} parent=43 // pred_region
                loop: start=0, step=1, limit=1
                $region60: #{_lambda_.12} parent=58 // loop_pre_header
                  _
                $region61: #{_lambda_.12} parent=58 // loop_header
                  %s316 = sphi 0, %s320
                  %p317 = scmp.ge.s32.totalorder %s316, 1
                  %s321 = sphi %s264, %s264
                  %s322 = sphi %s261, %s261
                $region62: #{_lambda_.12} parent=58 // loop_header_branch
                  %319 = sbr.rel (%p317) target = $region66
                $region63: #{_lambda_.12} parent=58 // loop_body
                  %v323 = vld [vmem:[%s321] sm:$0xff]
                  %324 = vst [vmem:[%s322] sm:$0xff] %v323
                  %v325 = vld [vmem:[%s321 + $0x10] sm:$0xff]
                  %326 = vst [vmem:[%s322 + $0x8] sm:$0xff] %v325
                  %v327 = vld [vmem:[%s321 + $0x20] sm:$0xff]
                  %328 = vst [vmem:[%s322 + $0x10] sm:$0xff] %v327
                  %v329 = vld [vmem:[%s321 + $0x30] sm:$0xff]
                  %330 = vst [vmem:[%s322 + $0x18] sm:$0xff] %v329
                  %v331 = vld [vmem:[%s321 + $0x40] sm:$0xff]
                  %332 = vst [vmem:[%s322 + $0x20] sm:$0xff] %v331
                  %v333 = vld [vmem:[%s321 + $0x50] sm:$0xff]
                  %334 = vst [vmem:[%s322 + $0x28] sm:$0xff] %v333
                  %v335 = vld [vmem:[%s321 + $0x60] sm:$0xff]
                  %336 = vst [vmem:[%s322 + $0x30] sm:$0xff] %v335
                  %v337 = vld [vmem:[%s321 + $0x70] sm:$0xff]
                  %338 = vst [vmem:[%s322 + $0x38] sm:$0xff] %v337
                  %v339 = vld [vmem:[%s321 + $0x80] sm:$0xff]
                  %340 = vst [vmem:[%s322 + $0x40] sm:$0xff] %v339
                  %v341 = vld [vmem:[%s321 + $0x90] sm:$0xff]
                  %342 = vst [vmem:[%s322 + $0x48] sm:$0xff] %v341
                  %v343 = vld [vmem:[%s321 + $0xa0] sm:$0xff]
                  %344 = vst [vmem:[%s322 + $0x50] sm:$0xff] %v343
                  %v345 = vld [vmem:[%s321 + $0xb0] sm:$0xff]
                  %346 = vst [vmem:[%s322 + $0x58] sm:$0xff] %v345
                  %v347 = vld [vmem:[%s321 + $0xc0] sm:$0xff]
                  %348 = vst [vmem:[%s322 + $0x60] sm:$0xff] %v347
                  %v349 = vld [vmem:[%s321 + $0xd0] sm:$0xff]
                  %350 = vst [vmem:[%s322 + $0x68] sm:$0xff] %v349
                  %v351 = vld [vmem:[%s321 + $0xe0] sm:$0xff]
                  %352 = vst [vmem:[%s322 + $0x70] sm:$0xff] %v351
                  %v353 = vld [vmem:[%s321 + $0xf0] sm:$0xff]
                  %354 = vst [vmem:[%s322 + $0x78] sm:$0xff] %v353
                $region64: #{_lambda_.12} parent=58 // loop_footer
                  %s320 = sadd.s32 1, %s316
                $region65: #{_lambda_.12} parent=58 // loop_footer_branch
                  %315 = sbr.rel target = $region61
                $region66: #{_lambda_.12} parent=58 // loop_exit
                  _
              $region59: #{_lambda_.12} parent=43 // pred_fallthru
                _
              // Predicated region
              $region67: #{_lambda_.12} parent=43 // pred_check
                _
              $region68: #{_lambda_.12} parent=43 // pred_check_branch
                %356 = sbr.rel target = $region70
              $region69: #{_lambda_.12} parent=43 // pred_region
                _
              $region70: #{_lambda_.12} parent=43 // pred_fallthru
                _
            $region44: #{_lambda_.12} parent=39 // pred_fallthru
              _
            // Predicated region
            $region45: #{_lambda_.12} parent=39 // pred_check
              _
            $region46: #{_lambda_.12} parent=39 // pred_check_branch
              %270 = sbr.rel target = $region48
            $region47: #{_lambda_.12} parent=39 // pred_region
              %s272 = ssub.s32 256, 1
              loop: start=0, step=1, limit=1
              $region49: #{_lambda_.12} parent=47 // loop_pre_header
                _
              $region50: #{_lambda_.12} parent=47 // loop_header
                %s274 = sphi 0, %s278
                %p275 = scmp.ge.s32.totalorder %s274, 1
                %s279 = sphi %s264, %s264
                %s280 = sphi %s261, %s261
              $region51: #{_lambda_.12} parent=47 // loop_header_branch
                %277 = sbr.rel (%p275) target = $region55
              $region52: #{_lambda_.12} parent=47 // loop_body
                %v281 = vld [vmem:[%s279] sm:%s272]
                %282 = vst [vmem:[%s280] sm:%s272] %v281
                %v283 = vld [vmem:[%s279 + $0x10] sm:%s272]
                %284 = vst [vmem:[%s280 + $0x8] sm:%s272] %v283
                %v285 = vld [vmem:[%s279 + $0x20] sm:%s272]
                %286 = vst [vmem:[%s280 + $0x10] sm:%s272] %v285
                %v287 = vld [vmem:[%s279 + $0x30] sm:%s272]
                %288 = vst [vmem:[%s280 + $0x18] sm:%s272] %v287
                %v289 = vld [vmem:[%s279 + $0x40] sm:%s272]
                %290 = vst [vmem:[%s280 + $0x20] sm:%s272] %v289
                %v291 = vld [vmem:[%s279 + $0x50] sm:%s272]
                %292 = vst [vmem:[%s280 + $0x28] sm:%s272] %v291
                %v293 = vld [vmem:[%s279 + $0x60] sm:%s272]
                %294 = vst [vmem:[%s280 + $0x30] sm:%s272] %v293
                %v295 = vld [vmem:[%s279 + $0x70] sm:%s272]
                %296 = vst [vmem:[%s280 + $0x38] sm:%s272] %v295
                %v297 = vld [vmem:[%s279 + $0x80] sm:%s272]
                %298 = vst [vmem:[%s280 + $0x40] sm:%s272] %v297
                %v299 = vld [vmem:[%s279 + $0x90] sm:%s272]
                %300 = vst [vmem:[%s280 + $0x48] sm:%s272] %v299
                %v301 = vld [vmem:[%s279 + $0xa0] sm:%s272]
                %302 = vst [vmem:[%s280 + $0x50] sm:%s272] %v301
                %v303 = vld [vmem:[%s279 + $0xb0] sm:%s272]
                %304 = vst [vmem:[%s280 + $0x58] sm:%s272] %v303
                %v305 = vld [vmem:[%s279 + $0xc0] sm:%s272]
                %306 = vst [vmem:[%s280 + $0x60] sm:%s272] %v305
                %v307 = vld [vmem:[%s279 + $0xd0] sm:%s272]
                %308 = vst [vmem:[%s280 + $0x68] sm:%s272] %v307
                %v309 = vld [vmem:[%s279 + $0xe0] sm:%s272]
                %310 = vst [vmem:[%s280 + $0x70] sm:%s272] %v309
                %v311 = vld [vmem:[%s279 + $0xf0] sm:%s272]
                %312 = vst [vmem:[%s280 + $0x78] sm:%s272] %v311
              $region53: #{_lambda_.12} parent=47 // loop_footer
                %s278 = sadd.s32 1, %s274
              $region54: #{_lambda_.12} parent=47 // loop_footer_branch
                %273 = sbr.rel target = $region50
              $region55: #{_lambda_.12} parent=47 // loop_exit
                _
            $region48: #{_lambda_.12} parent=39 // pred_fallthru
              _
          $region40: #{_lambda_.12} parent=35 // pred_fallthru
            _
          %357 = vnop
        $region36: #{_lambda_.12} parent=27 // pred_fallthru
          _
        // Predicated region
        $region71: #{_lambda_.12} parent=27 // pred_check
          %p358 = pneg %p139
        $region72: #{_lambda_.12} parent=27 // pred_check_branch
          %360 = sbr.rel (%p358) target = $region74
        $region73: #{_lambda_.12} parent=27 // pred_region
          %s361 = smul.u32 2, %s21
          %p362 = scmp.lt.s32.totalorder %s361, 3
          %s363 = scalar_select %p362, %s361, 3
          %s364 = scalar_lea.vmem %s4, %s363
          %s365 = smul.u32 2, %s21
        $region74: #{_lambda_.12} parent=27 // pred_fallthru
          _
        // Predicated region
        $region75: #{_lambda_.12} parent=27 // pred_check
          %p366 = pneg %p165
        $region76: #{_lambda_.12} parent=27 // pred_check_branch
          %368 = sbr.rel (%p366) target = $region78
        $region77: #{_lambda_.12} parent=27 // pred_region
          %s369 = smul.u32 32, %s21
          %p370 = scmp.lt.s32.totalorder %s369, 63
          %s371 = scalar_select %p370, %s369, 63
          %s372 = smul.addr %s371, 4
          %s373 = scalar_lea.vmem %s5, %s372
          %s374 = smul.u32 32, %s21
        $region78: #{_lambda_.12} parent=27 // pred_fallthru
          _
      $region28: #{_lambda_.12} parent=5 // pred_fallthru
        _
      %p375 = scmp.le.s32.totalorder 1, %s13
      %p376 = scmp.lt.s32.totalorder %s13, 5
      %p377 = pnand %p375, %p376
      %p378 = pneg %p377
      // Predicated region
      $region79: #{_lambda_.12} parent=5 // pred_check
        _
      $region80: #{_lambda_.12} parent=5 // pred_check_branch
        %380 = sbr.rel (%p377) target = $region82
      $region81: #{_lambda_.12} parent=5 // pred_region
        %s381 = ssub.s32 %s13, 1
        %s382 = sand.u32 %s106, 1
        %s383 = sand.u32 %s106, 1
        %s384 = smul.addr %s383, 128
        %s385 = scalar_lea.vmem [#allocation4], %s384
        // Predicated region
        $region83: #{_lambda_.12} parent=81 // pred_check
          %p386 = pneg %p119
        $region84: #{_lambda_.12} parent=81 // pred_check_branch
          %388 = sbr.rel (%p386) target = $region86
        $region85: #{_lambda_.12} parent=81 // pred_region
          _
        $region86: #{_lambda_.12} parent=81 // pred_fallthru
          _
        %s389 = smul.u32 8, %s22
        %p390 = scmp.lt.s32.totalorder %s389, 15
        %s391 = scalar_select %p390, %s389, 15
        %s392 = smul.addr %s391, 8
        %s393 = scalar_lea.vmem %s0, %s392
        %p394 = pneg %p51
        %p395 = pneg %p48
        %p396 = pneg %p72
        %p397 = pneg %p69
        %p398 = pneg %p93
        %p399 = pneg %p90
        %s400 = sand.u32 %s106, 1
        %s401 = sand.u32 %s106, 1
        %s402 = smul.addr %s401, 128
        %s403 = scalar_lea.vmem [#allocation4], %s402
        %p404 = pneg %p119
        %p405 = pneg %p116
        %s406 = smul.u32 2, %s23
        %p407 = scmp.lt.s32.totalorder %s406, 3
        %s408 = scalar_select %p407, %s406, 3
        %s409 = scalar_lea.vmem %s4, %s408
        %p410 = pneg %p145
        %p411 = pneg %p142
        %s412 = smul.u32 32, %s23
        %p413 = scmp.lt.s32.totalorder %s412, 63
        %s414 = scalar_select %p413, %s412, 63
        %s415 = smul.addr %s414, 4
        %s416 = scalar_lea.vmem %s5, %s415
        %p417 = pneg %p171
        %p418 = pneg %p168
        %p419 = pneg %p192
        %p420 = pneg %p189
        %p421 = pneg %p218
        %p422 = pneg %p215
        %s423 = smul.u32 8, %s22
        %p424 = scmp.lt.s32.totalorder %s423, 15
        %s425 = scalar_select %p424, %s423, 15
        %s426 = smul.addr %s425, 8
        %s427 = scalar_lea.vmem %s7, %s426
        %s428 = smul.u32 8, %s22
        %p429 = scmp.lt.s32.totalorder %s428, 15
        %s430 = scalar_select %p429, %s428, 15
        %s431 = smul.addr %s430, 8
        %s432 = scalar_lea.vmem %s0, %s431
        %s433 = smul.u32 8, %s22
        %s434 = smul.u32 2, %s23
        %s435 = smul.u32 2, %s23
        %p436 = scmp.lt.s32.totalorder %s435, 3
        %s437 = scalar_select %p436, %s435, 3
        %s438 = scalar_lea.vmem %s4, %s437
        %s439 = smul.u32 2, %s23
        %s440 = smul.u32 32, %s23
        %p441 = scmp.lt.s32.totalorder %s440, 63
        %s442 = scalar_select %p441, %s440, 63
        %s443 = smul.addr %s442, 4
        %s444 = scalar_lea.vmem %s5, %s443
        %s445 = smul.u32 32, %s23
        %s446 = smul.u32 8, %s22
        %p447 = scmp.lt.s32.totalorder %s446, 15
        %s448 = scalar_select %p447, %s446, 15
        %s449 = smul.addr %s448, 8
        %s450 = scalar_lea.vmem %s7, %s449
        %s451 = smul.u32 8, %s22
        %p453 = scmp.eq.s32.totalorder %s23, 0
        // Predicated region
        $region87: #{_lambda_.12} parent=81 // pred_check
          %p454 = pneg %p453
        $region88: #{_lambda_.12} parent=81 // pred_check_branch
          %456 = sbr.rel (%p454) target = $region90
        $region89: #{_lambda_.12} parent=81 // pred_region
          %v457 = vld [vmem:[%s432] sm:$0xff]
          %v458 = vld [vmem:[%s432 + $0x8] sm:$0xff]
          %v459 = vld [vmem:[%s432 + $0x10] sm:$0xff]
          %v460 = vld [vmem:[%s432 + $0x18] sm:$0xff]
          %v461 = vld [vmem:[%s432 + $0x20] sm:$0xff]
          %v462 = vld [vmem:[%s432 + $0x28] sm:$0xff]
          %v463 = vld [vmem:[%s432 + $0x30] sm:$0xff]
          %v464 = vld [vmem:[%s432 + $0x38] sm:$0xff]
          %v465 = vld [vmem:[%s1] sm:$0x1]
          %v466 = vld [vmem:[%s2] sm:$0x1]
          %467 = vadd.xlane.f32.xlu0 %v457
          %v468 = vpop.xlane.xlu0 %467
          %469 = vadd.xlane.f32.xlu0 %v458
          %v470 = vpop.xlane.xlu0 %469
          %471 = vadd.xlane.f32.xlu0 %v459
          %v472 = vpop.xlane.xlu0 %471
          %473 = vadd.xlane.f32.xlu0 %v460
          %v474 = vpop.xlane.xlu0 %473
          %475 = vadd.xlane.f32.xlu0 %v461
          %v476 = vpop.xlane.xlu0 %475
          %477 = vadd.xlane.f32.xlu0 %v462
          %v478 = vpop.xlane.xlu0 %477
          %479 = vadd.xlane.f32.xlu0 %v463
          %v480 = vpop.xlane.xlu0 %479
          %481 = vadd.xlane.f32.xlu0 %v464
          %v482 = vpop.xlane.xlu0 %481
          %v483 = vrcp.pop 128.0
          %v484 = vmul.f32 %v468, %v483
          %v485 = vmul.f32 %v470, %v483
          %v486 = vmul.f32 %v472, %v483
          %v487 = vmul.f32 %v474, %v483
          %v488 = vmul.f32 %v476, %v483
          %v489 = vmul.f32 %v478, %v483
          %v490 = vmul.f32 %v480, %v483
          %v491 = vmul.f32 %v482, %v483
          %v492 = vsub.f32 %v457, %v484
          %v493 = vsub.f32 %v458, %v485
          %v494 = vsub.f32 %v459, %v486
          %v495 = vsub.f32 %v460, %v487
          %v496 = vsub.f32 %v461, %v488
          %v497 = vsub.f32 %v462, %v489
          %v498 = vsub.f32 %v463, %v490
          %v499 = vsub.f32 %v464, %v491
          %v500 = vmul.f32 %v492, %v492
          %v501 = vmul.f32 %v493, %v493
          %v502 = vmul.f32 %v494, %v494
          %v503 = vmul.f32 %v495, %v495
          %v504 = vmul.f32 %v496, %v496
          %v505 = vmul.f32 %v497, %v497
          %v506 = vmul.f32 %v498, %v498
          %v507 = vmul.f32 %v499, %v499
          %508 = vadd.xlane.f32.xlu0 %v500
          %v509 = vpop.xlane.xlu0 %508
          %510 = vadd.xlane.f32.xlu0 %v501
          %v511 = vpop.xlane.xlu0 %510
          %512 = vadd.xlane.f32.xlu0 %v502
          %v513 = vpop.xlane.xlu0 %512
          %514 = vadd.xlane.f32.xlu0 %v503
          %v515 = vpop.xlane.xlu0 %514
          %516 = vadd.xlane.f32.xlu0 %v504
          %v517 = vpop.xlane.xlu0 %516
          %518 = vadd.xlane.f32.xlu0 %v505
          %v519 = vpop.xlane.xlu0 %518
          %520 = vadd.xlane.f32.xlu0 %v506
          %v521 = vpop.xlane.xlu0 %520
          %522 = vadd.xlane.f32.xlu0 %v507
          %v523 = vpop.xlane.xlu0 %522
          %v524 = vmul.f32 %v509, %v483
          %v525 = vmul.f32 %v511, %v483
          %v526 = vmul.f32 %v513, %v483
          %v527 = vmul.f32 %v515, %v483
          %v528 = vmul.f32 %v517, %v483
          %v529 = vmul.f32 %v519, %v483
          %v530 = vmul.f32 %v521, %v483
          %v531 = vmul.f32 %v523, %v483
          %v532 = vadd.f32 %v524, 1e-05
          %v533 = vadd.f32 %v525, 1e-05
          %v534 = vadd.f32 %v526, 1e-05
          %v535 = vadd.f32 %v527, 1e-05
          %v536 = vadd.f32 %v528, 1e-05
          %v537 = vadd.f32 %v529, 1e-05
          %v538 = vadd.f32 %v530, 1e-05
          %v539 = vadd.f32 %v531, 1e-05
          %v540 = vrsqrt.pop %v532
          %v541 = vrsqrt.pop %v533
          %v542 = vrsqrt.pop %v534
          %v543 = vrsqrt.pop %v535
          %v544 = vrsqrt.pop %v536
          %v545 = vrsqrt.pop %v537
          %v546 = vrsqrt.pop %v538
          %v547 = vrsqrt.pop %v539
          %v548 = vmul.f32 %v492, %v540
          %v549 = vmul.f32 %v493, %v541
          %v550 = vmul.f32 %v494, %v542
          %v551 = vmul.f32 %v495, %v543
          %v552 = vmul.f32 %v496, %v544
          %v553 = vmul.f32 %v497, %v545
          %v554 = vmul.f32 %v498, %v546
          %v555 = vmul.f32 %v499, %v547
          %v557 = vlaneseq
          %v558 = vshrl.u32 %v557, 7
          %v559 = vsub.s32 0, %v558
          %v560 = vrot.slane %v465, %v559
          %v562 = vmul.f32 %v548, %v560
          %v563 = vmul.f32 %v549, %v560
          %v564 = vmul.f32 %v550, %v560
          %v565 = vmul.f32 %v551, %v560
          %v566 = vmul.f32 %v552, %v560
          %v567 = vmul.f32 %v553, %v560
          %v568 = vmul.f32 %v554, %v560
          %v569 = vmul.f32 %v555, %v560
          %v571 = vlaneseq
          %v572 = vshrl.u32 %v571, 7
          %v573 = vsub.s32 0, %v572
          %v574 = vrot.slane %v466, %v573
          %v576 = vadd.f32 %v562, %v574
          %v577 = vadd.f32 %v563, %v574
          %v578 = vadd.f32 %v564, %v574
          %v579 = vadd.f32 %v565, %v574
          %v580 = vadd.f32 %v566, %v574
          %v581 = vadd.f32 %v567, %v574
          %v582 = vadd.f32 %v568, %v574
          %v583 = vadd.f32 %v569, %v574
          %v584 = vpack.c.bf16 %v577, %v576
          %v585 = vpack.c.bf16 %v579, %v578
          %v586 = vpack.c.bf16 %v581, %v580
          %v587 = vpack.c.bf16 %v583, %v582
          %v592 = vunpack.c.l.b16 %v584
          %v593 = vunpack.c.h.b16 %v584
          %v594 = vunpack.c.l.b16 %v585
          %v595 = vunpack.c.h.b16 %v585
          %v596 = vunpack.c.l.b16 %v586
          %v597 = vunpack.c.h.b16 %v586
          %v598 = vunpack.c.l.b16 %v587
          %v599 = vunpack.c.h.b16 %v587
          %v600 = vpack.c.b16 %v592, %v592
          %v601 = vpack.c.b16 %v593, %v593
          %v602 = vpack.c.b16 %v594, %v594
          %v603 = vpack.c.b16 %v595, %v595
          %v604 = vpack.c.b16 %v596, %v596
          %v605 = vpack.c.b16 %v597, %v597
          %v606 = vpack.c.b16 %v598, %v598
          %v607 = vpack.c.b16 %v599, %v599
          %616 = vst [vmem:[#allocation2] sm:$0xf] %v600
          %617 = vst [vmem:[#allocation2 + $0x4] sm:$0xf] %v601
          %618 = vst [vmem:[#allocation2 + $0x8] sm:$0xf] %v602
          %619 = vst [vmem:[#allocation2 + $0xc] sm:$0xf] %v603
          %620 = vst [vmem:[#allocation2 + $0x10] sm:$0xf] %v604
          %621 = vst [vmem:[#allocation2 + $0x14] sm:$0xf] %v605
          %622 = vst [vmem:[#allocation2 + $0x18] sm:$0xf] %v606
          %623 = vst [vmem:[#allocation2 + $0x1c] sm:$0xf] %v607
          %624 = vst [vmem:[#allocation3] sm:$0xff] 0.0
          %625 = vst [vmem:[#allocation3 + $0x8] sm:$0xff] 0.0
          %626 = vst [vmem:[#allocation3 + $0x10] sm:$0xff] 0.0
          %627 = vst [vmem:[#allocation3 + $0x18] sm:$0xff] 0.0
          %628 = vst [vmem:[#allocation3 + $0x20] sm:$0xff] 0.0
          %629 = vst [vmem:[#allocation3 + $0x28] sm:$0xff] 0.0
          %630 = vst [vmem:[#allocation3 + $0x30] sm:$0xff] 0.0
          %631 = vst [vmem:[#allocation3 + $0x38] sm:$0xff] 0.0
        $region90: #{_lambda_.12} parent=81 // pred_fallthru
          _
        %v632 = vld [vmem:[#allocation2] sm:$0xf]
        %v633 = vld [vmem:[#allocation2 + $0x4] sm:$0xf]
        %v634 = vld [vmem:[#allocation2 + $0x8] sm:$0xf]
        %v635 = vld [vmem:[#allocation2 + $0xc] sm:$0xf]
        %v636 = vld [vmem:[#allocation2 + $0x10] sm:$0xf]
        %v637 = vld [vmem:[#allocation2 + $0x14] sm:$0xf]
        %v638 = vld [vmem:[#allocation2 + $0x18] sm:$0xf]
        %v639 = vld [vmem:[#allocation2 + $0x1c] sm:$0xf]
        %v640 = vld [vmem:[%s385] sm:$0xff]
        %v641 = vld [vmem:[%s385 + $0x8] sm:$0xff]
        %v642 = vld [vmem:[%s385 + $0x10] sm:$0xff]
        %v643 = vld [vmem:[%s385 + $0x18] sm:$0xff]
        %v644 = vld [vmem:[%s385 + $0x20] sm:$0xff]
        %v645 = vld [vmem:[%s385 + $0x28] sm:$0xff]
        %v646 = vld [vmem:[%s385 + $0x30] sm:$0xff]
        %v647 = vld [vmem:[%s385 + $0x38] sm:$0xff]
        %v648 = vld [vmem:[%s385 + $0x40] sm:$0xff]
        %v649 = vld [vmem:[%s385 + $0x48] sm:$0xff]
        %v650 = vld [vmem:[%s385 + $0x50] sm:$0xff]
        %v651 = vld [vmem:[%s385 + $0x58] sm:$0xff]
        %v652 = vld [vmem:[%s385 + $0x60] sm:$0xff]
        %v653 = vld [vmem:[%s385 + $0x68] sm:$0xff]
        %v654 = vld [vmem:[%s385 + $0x70] sm:$0xff]
        %v655 = vld [vmem:[%s385 + $0x78] sm:$0xff]
        %v656 = vld [vmem:[%s438] sm:$0x3]
        %v658 = vlaneseq
        %v659 = vshrl.u32 %v658, 7
        %v660 = vsub.s32 0, %v659
        %v661 = vrot.slane %v656, %v660
        %v662 = vlaneseq
        %v663 = vshrl.u32 %v662, 7
        %v664 = vsub.s32 1, %v663
        %v665 = vrot.slane %v656, %v664
        %v676 = vunpack.c.l.b16 %v632
        %v677 = vunpack.c.l.b16 %v633
        %v678 = vunpack.c.l.b16 %v634
        %v679 = vunpack.c.l.b16 %v635
        %v680 = vunpack.c.l.b16 %v636
        %v681 = vunpack.c.l.b16 %v637
        %v682 = vunpack.c.l.b16 %v638
        %v683 = vunpack.c.l.b16 %v639
        %v684 = vpack.c.b16 %v677, %v676
        %v685 = vpack.c.b16 %v679, %v678
        %v686 = vpack.c.b16 %v681, %v680
        %v687 = vpack.c.b16 %v683, %v682
        %v708 = vunpack.c.l.b16 %v640
        %v709 = vunpack.c.h.b16 %v640
        %v710 = vunpack.c.l.b16 %v641
        %v711 = vunpack.c.h.b16 %v641
        %v712 = vunpack.c.l.b16 %v642
        %v713 = vunpack.c.h.b16 %v642
        %v714 = vunpack.c.l.b16 %v643
        %v715 = vunpack.c.h.b16 %v643
        %v716 = vunpack.c.l.b16 %v644
        %v717 = vunpack.c.h.b16 %v644
        %v718 = vunpack.c.l.b16 %v645
        %v719 = vunpack.c.h.b16 %v645
        %v720 = vunpack.c.l.b16 %v646
        %v721 = vunpack.c.h.b16 %v646
        %v722 = vunpack.c.l.b16 %v647
        %v723 = vunpack.c.h.b16 %v647
        %v724 = vunpack.c.l.b16 %v648
        %v725 = vunpack.c.h.b16 %v648
        %v726 = vunpack.c.l.b16 %v649
        %v727 = vunpack.c.h.b16 %v649
        %v728 = vunpack.c.l.b16 %v650
        %v729 = vunpack.c.h.b16 %v650
        %v730 = vunpack.c.l.b16 %v651
        %v731 = vunpack.c.h.b16 %v651
        %v732 = vunpack.c.l.b16 %v652
        %v733 = vunpack.c.h.b16 %v652
        %v734 = vunpack.c.l.b16 %v653
        %v735 = vunpack.c.h.b16 %v653
        %v736 = vunpack.c.l.b16 %v654
        %v737 = vunpack.c.h.b16 %v654
        %v738 = vunpack.c.l.b16 %v655
        %v739 = vunpack.c.h.b16 %v655
        %v740 = vpack.c.b16 %v710, %v708
        %v741 = vpack.c.b16 %v711, %v709
        %v742 = vpack.c.b16 %v714, %v712
        %v743 = vpack.c.b16 %v715, %v713
        %v744 = vpack.c.b16 %v718, %v716
        %v745 = vpack.c.b16 %v719, %v717
        %v746 = vpack.c.b16 %v722, %v720
        %v747 = vpack.c.b16 %v723, %v721
        %v748 = vpack.c.b16 %v726, %v724
        %v749 = vpack.c.b16 %v727, %v725
        %v750 = vpack.c.b16 %v730, %v728
        %v751 = vpack.c.b16 %v731, %v729
        %v752 = vpack.c.b16 %v734, %v732
        %v753 = vpack.c.b16 %v735, %v733
        %v754 = vpack.c.b16 %v738, %v736
        %v755 = vpack.c.b16 %v739, %v737
        %772 = vmatprep.subr.bf16.mxu0 %v755
        %773 = vmatpush1.bf16.msra.mxu0 %v754
        %774 = vmatprep.subr.bf16.mxu0 %v753
        %775 = vmatpush1.bf16.msra.mxu0 %v752
        %776 = vmatprep.subr.bf16.mxu0 %v751
        %777 = vmatpush1.bf16.msra.mxu0 %v750
        %778 = vmatprep.subr.bf16.mxu0 %v749
        %779 = vmatpush1.bf16.msra.mxu0 %v748
        %780 = vmatprep.subr.bf16.mxu0 %v747
        %781 = vmatpush1.bf16.msra.mxu0 %v746
        %782 = vmatprep.subr.bf16.mxu0 %v745
        %783 = vmatpush1.bf16.msra.mxu0 %v744
        %784 = vmatprep.subr.bf16.mxu0 %v743
        %785 = vmatpush1.bf16.msra.mxu0 %v742
        %786 = vmatprep.subr.bf16.mxu0 %v741
        %787 = vmatpush1.bf16.msra.mxu0 %v740
        %788 = vmatprep.subr.bf16.mxu0 0
        %789 = vmatpush2.bf16.msra.mxu0 0
        %790 = vmatprep.subr.bf16.mxu0 0
        %791 = vmatpush2.bf16.msra.mxu0 0
        %792 = vmatprep.subr.bf16.mxu0 0
        %793 = vmatpush2.bf16.msra.mxu0 0
        %794 = vmatprep.subr.bf16.mxu0 0
        %795 = vmatpush2.bf16.msra.mxu0 0
        %796 = vmatprep.subr.bf16.mxu0 0
        %797 = vmatpush2.bf16.msra.mxu0 0
        %798 = vmatprep.subr.bf16.mxu0 0
        %799 = vmatpush2.bf16.msra.mxu0 0
        %800 = vmatprep.subr.bf16.mxu0 0
        %801 = vmatpush2.bf16.msra.mxu0 0
        %802 = vmatprep.subr.bf16.mxu0 0
        %803 = vmatpush2.bf16.msra.mxu0 0
        %804 = vmatprep.mubr.bf16.mxu0 0
        %805 = vmatmul.mubr.bf16.gmra.mxu0 %v684
        %v806 = vpop.f32.mrf.mxu0
        %v807 = vadd.f32 %v661, %v806
        %v808 = vpop.f32.mrf.mxu0
        %v809 = vadd.f32 %v665, %v808
        %v810 = vpop.f32.mrf.mxu0
        %v811 = vadd.f32 %v661, %v810
        %v812 = vpop.f32.mrf.mxu0
        %v813 = vadd.f32 %v665, %v812
        %814 = vmatprep.mubr.bf16.mxu0 0
        %815 = vmatmul.mubr.bf16.gmra.mxu0 %v685
        %v816 = vpop.f32.mrf.mxu0
        %v817 = vadd.f32 %v661, %v816
        %v818 = vpop.f32.mrf.mxu0
        %v819 = vadd.f32 %v665, %v818
        %v820 = vpop.f32.mrf.mxu0
        %v821 = vadd.f32 %v661, %v820
        %v822 = vpop.f32.mrf.mxu0
        %v823 = vadd.f32 %v665, %v822
        %824 = vmatprep.mubr.bf16.mxu0 0
        %825 = vmatmul.mubr.bf16.gmra.mxu0 %v686
        %v826 = vpop.f32.mrf.mxu0
        %v827 = vadd.f32 %v661, %v826
        %v828 = vpop.f32.mrf.mxu0
        %v829 = vadd.f32 %v665, %v828
        %v830 = vpop.f32.mrf.mxu0
        %v831 = vadd.f32 %v661, %v830
        %v832 = vpop.f32.mrf.mxu0
        %v833 = vadd.f32 %v665, %v832
        %834 = vmatprep.mubr.bf16.mxu0 0
        %835 = vmatmul.mubr.bf16.gmra.mxu0 %v687
        %v836 = vpop.f32.mrf.mxu0
        %v837 = vadd.f32 %v661, %v836
        %v838 = vpop.f32.mrf.mxu0
        %v839 = vadd.f32 %v665, %v838
        %v840 = vpop.f32.mrf.mxu0
        %v841 = vadd.f32 %v661, %v840
        %v842 = vpop.f32.mrf.mxu0
        %v843 = vadd.f32 %v665, %v842
        %844 = vdwg.mxu0
        %v845 = vmul.f32 %v807, 0.5
        %v846 = vmul.f32 %v809, 0.5
        %v847 = vmul.f32 %v811, 0.5
        %v848 = vmul.f32 %v813, 0.5
        %v849 = vmul.f32 %v817, 0.5
        %v850 = vmul.f32 %v819, 0.5
        %v851 = vmul.f32 %v821, 0.5
        %v852 = vmul.f32 %v823, 0.5
        %v853 = vmul.f32 %v827, 0.5
        %v854 = vmul.f32 %v829, 0.5
        %v855 = vmul.f32 %v831, 0.5
        %v856 = vmul.f32 %v833, 0.5
        %v857 = vmul.f32 %v837, 0.5
        %v858 = vmul.f32 %v839, 0.5
        %v859 = vmul.f32 %v841, 0.5
        %v860 = vmul.f32 %v843, 0.5
        %v861 = vmul.f32 %v807, 0.044715
        %v862 = vmul.f32 %v809, 0.044715
        %v863 = vmul.f32 %v811, 0.044715
        %v864 = vmul.f32 %v813, 0.044715
        %v865 = vmul.f32 %v817, 0.044715
        %v866 = vmul.f32 %v819, 0.044715
        %v867 = vmul.f32 %v821, 0.044715
        %v868 = vmul.f32 %v823, 0.044715
        %v869 = vmul.f32 %v827, 0.044715
        %v870 = vmul.f32 %v829, 0.044715
        %v871 = vmul.f32 %v831, 0.044715
        %v872 = vmul.f32 %v833, 0.044715
        %v873 = vmul.f32 %v837, 0.044715
        %v874 = vmul.f32 %v839, 0.044715
        %v875 = vmul.f32 %v841, 0.044715
        %v876 = vmul.f32 %v843, 0.044715
        %v877 = vmul.f32 %v861, %v807
        %v878 = vmul.f32 %v862, %v809
        %v879 = vmul.f32 %v863, %v811
        %v880 = vmul.f32 %v864, %v813
        %v881 = vmul.f32 %v865, %v817
        %v882 = vmul.f32 %v866, %v819
        %v883 = vmul.f32 %v867, %v821
        %v884 = vmul.f32 %v868, %v823
        %v885 = vmul.f32 %v869, %v827
        %v886 = vmul.f32 %v870, %v829
        %v887 = vmul.f32 %v871, %v831
        %v888 = vmul.f32 %v872, %v833
        %v889 = vmul.f32 %v873, %v837
        %v890 = vmul.f32 %v874, %v839
        %v891 = vmul.f32 %v875, %v841
        %v892 = vmul.f32 %v876, %v843
        %v893 = vmul.f32 %v877, %v807
        %v894 = vmul.f32 %v878, %v809
        %v895 = vmul.f32 %v879, %v811
        %v896 = vmul.f32 %v880, %v813
        %v897 = vmul.f32 %v881, %v817
        %v898 = vmul.f32 %v882, %v819
        %v899 = vmul.f32 %v883, %v821
        %v900 = vmul.f32 %v884, %v823
        %v901 = vmul.f32 %v885, %v827
        %v902 = vmul.f32 %v886, %v829
        %v903 = vmul.f32 %v887, %v831
        %v904 = vmul.f32 %v888, %v833
        %v905 = vmul.f32 %v889, %v837
        %v906 = vmul.f32 %v890, %v839
        %v907 = vmul.f32 %v891, %v841
        %v908 = vmul.f32 %v892, %v843
        %v909 = vadd.f32 %v807, %v893
        %v910 = vadd.f32 %v809, %v894
        %v911 = vadd.f32 %v811, %v895
        %v912 = vadd.f32 %v813, %v896
        %v913 = vadd.f32 %v817, %v897
        %v914 = vadd.f32 %v819, %v898
        %v915 = vadd.f32 %v821, %v899
        %v916 = vadd.f32 %v823, %v900
        %v917 = vadd.f32 %v827, %v901
        %v918 = vadd.f32 %v829, %v902
        %v919 = vadd.f32 %v831, %v903
        %v920 = vadd.f32 %v833, %v904
        %v921 = vadd.f32 %v837, %v905
        %v922 = vadd.f32 %v839, %v906
        %v923 = vadd.f32 %v841, %v907
        %v924 = vadd.f32 %v843, %v908
        %v925 = vmul.f32 %v909, 0.7978846
        %v926 = vmul.f32 %v910, 0.7978846
        %v927 = vmul.f32 %v911, 0.7978846
        %v928 = vmul.f32 %v912, 0.7978846
        %v929 = vmul.f32 %v913, 0.7978846
        %v930 = vmul.f32 %v914, 0.7978846
        %v931 = vmul.f32 %v915, 0.7978846
        %v932 = vmul.f32 %v916, 0.7978846
        %v933 = vmul.f32 %v917, 0.7978846
        %v934 = vmul.f32 %v918, 0.7978846
        %v935 = vmul.f32 %v919, 0.7978846
        %v936 = vmul.f32 %v920, 0.7978846
        %v937 = vmul.f32 %v921, 0.7978846
        %v938 = vmul.f32 %v922, 0.7978846
        %v939 = vmul.f32 %v923, 0.7978846
        %v940 = vmul.f32 %v924, 0.7978846
        %v941 = vtanh.pop %v925
        %v942 = vtanh.pop %v926
        %v943 = vtanh.pop %v927
        %v944 = vtanh.pop %v928
        %v945 = vtanh.pop %v929
        %v946 = vtanh.pop %v930
        %v947 = vtanh.pop %v931
        %v948 = vtanh.pop %v932
        %v949 = vtanh.pop %v933
        %v950 = vtanh.pop %v934
        %v951 = vtanh.pop %v935
        %v952 = vtanh.pop %v936
        %v953 = vtanh.pop %v937
        %v954 = vtanh.pop %v938
        %v955 = vtanh.pop %v939
        %v956 = vtanh.pop %v940
        %v957 = vadd.f32 %v941, 1.0
        %v958 = vadd.f32 %v942, 1.0
        %v959 = vadd.f32 %v943, 1.0
        %v960 = vadd.f32 %v944, 1.0
        %v961 = vadd.f32 %v945, 1.0
        %v962 = vadd.f32 %v946, 1.0
        %v963 = vadd.f32 %v947, 1.0
        %v964 = vadd.f32 %v948, 1.0
        %v965 = vadd.f32 %v949, 1.0
        %v966 = vadd.f32 %v950, 1.0
        %v967 = vadd.f32 %v951, 1.0
        %v968 = vadd.f32 %v952, 1.0
        %v969 = vadd.f32 %v953, 1.0
        %v970 = vadd.f32 %v954, 1.0
        %v971 = vadd.f32 %v955, 1.0
        %v972 = vadd.f32 %v956, 1.0
        %v973 = vmul.f32 %v845, %v957
        %v974 = vmul.f32 %v846, %v958
        %v975 = vmul.f32 %v847, %v959
        %v976 = vmul.f32 %v848, %v960
        %v977 = vmul.f32 %v849, %v961
        %v978 = vmul.f32 %v850, %v962
        %v979 = vmul.f32 %v851, %v963
        %v980 = vmul.f32 %v852, %v964
        %v981 = vmul.f32 %v853, %v965
        %v982 = vmul.f32 %v854, %v966
        %v983 = vmul.f32 %v855, %v967
        %v984 = vmul.f32 %v856, %v968
        %v985 = vmul.f32 %v857, %v969
        %v986 = vmul.f32 %v858, %v970
        %v987 = vmul.f32 %v859, %v971
        %v988 = vmul.f32 %v860, %v972
        %v989 = vld [vmem:[#allocation3] sm:$0xff]
        %v990 = vld [vmem:[#allocation3 + $0x8] sm:$0xff]
        %v991 = vld [vmem:[#allocation3 + $0x10] sm:$0xff]
        %v992 = vld [vmem:[#allocation3 + $0x18] sm:$0xff]
        %v993 = vld [vmem:[#allocation3 + $0x20] sm:$0xff]
        %v994 = vld [vmem:[#allocation3 + $0x28] sm:$0xff]
        %v995 = vld [vmem:[#allocation3 + $0x30] sm:$0xff]
        %v996 = vld [vmem:[#allocation3 + $0x38] sm:$0xff]
        %v997 = vpack.c.bf16 %v975, %v973
        %v998 = vpack.c.bf16 %v976, %v974
        %v999 = vpack.c.bf16 %v979, %v977
        %v1000 = vpack.c.bf16 %v980, %v978
        %v1001 = vpack.c.bf16 %v983, %v981
        %v1002 = vpack.c.bf16 %v984, %v982
        %v1003 = vpack.c.bf16 %v987, %v985
        %v1004 = vpack.c.bf16 %v988, %v986
        %v1005 = vld [vmem:[%s444] sm:$0xf]
        %v1006 = vld [vmem:[%s444 + $0x4] sm:$0xf]
        %v1007 = vld [vmem:[%s444 + $0x8] sm:$0xf]
        %v1008 = vld [vmem:[%s444 + $0xc] sm:$0xf]
        %v1009 = vld [vmem:[%s444 + $0x10] sm:$0xf]
        %v1010 = vld [vmem:[%s444 + $0x14] sm:$0xf]
        %v1011 = vld [vmem:[%s444 + $0x18] sm:$0xf]
        %v1012 = vld [vmem:[%s444 + $0x1c] sm:$0xf]
        %v1013 = vld [vmem:[%s444 + $0x20] sm:$0xf]
        %v1014 = vld [vmem:[%s444 + $0x24] sm:$0xf]
        %v1015 = vld [vmem:[%s444 + $0x28] sm:$0xf]
        %v1016 = vld [vmem:[%s444 + $0x2c] sm:$0xf]
        %v1017 = vld [vmem:[%s444 + $0x30] sm:$0xf]
        %v1018 = vld [vmem:[%s444 + $0x34] sm:$0xf]
        %v1019 = vld [vmem:[%s444 + $0x38] sm:$0xf]
        %v1020 = vld [vmem:[%s444 + $0x3c] sm:$0xf]
        %v1021 = vld [vmem:[%s444 + $0x40] sm:$0xf]
        %v1022 = vld [vmem:[%s444 + $0x44] sm:$0xf]
        %v1023 = vld [vmem:[%s444 + $0x48] sm:$0xf]
        %v1024 = vld [vmem:[%s444 + $0x4c] sm:$0xf]
        %v1025 = vld [vmem:[%s444 + $0x50] sm:$0xf]
        %v1026 = vld [vmem:[%s444 + $0x54] sm:$0xf]
        %v1027 = vld [vmem:[%s444 + $0x58] sm:$0xf]
        %v1028 = vld [vmem:[%s444 + $0x5c] sm:$0xf]
        %v1029 = vld [vmem:[%s444 + $0x60] sm:$0xf]
        %v1030 = vld [vmem:[%s444 + $0x64] sm:$0xf]
        %v1031 = vld [vmem:[%s444 + $0x68] sm:$0xf]
        %v1032 = vld [vmem:[%s444 + $0x6c] sm:$0xf]
        %v1033 = vld [vmem:[%s444 + $0x70] sm:$0xf]
        %v1034 = vld [vmem:[%s444 + $0x74] sm:$0xf]
        %v1035 = vld [vmem:[%s444 + $0x78] sm:$0xf]
        %v1036 = vld [vmem:[%s444 + $0x7c] sm:$0xf]
        %v1069 = vunpack.c.l.b16 %v1005
        %v1070 = vunpack.c.l.b16 %v1006
        %v1071 = vunpack.c.l.b16 %v1007
        %v1072 = vunpack.c.l.b16 %v1008
        %v1073 = vunpack.c.l.b16 %v1009
        %v1074 = vunpack.c.l.b16 %v1010
        %v1075 = vunpack.c.l.b16 %v1011
        %v1076 = vunpack.c.l.b16 %v1012
        %v1077 = vunpack.c.l.b16 %v1013
        %v1078 = vunpack.c.l.b16 %v1014
        %v1079 = vunpack.c.l.b16 %v1015
        %v1080 = vunpack.c.l.b16 %v1016
        %v1081 = vunpack.c.l.b16 %v1017
        %v1082 = vunpack.c.l.b16 %v1018
        %v1083 = vunpack.c.l.b16 %v1019
        %v1084 = vunpack.c.l.b16 %v1020
        %v1085 = vunpack.c.l.b16 %v1021
        %v1086 = vunpack.c.l.b16 %v1022
        %v1087 = vunpack.c.l.b16 %v1023
        %v1088 = vunpack.c.l.b16 %v1024
        %v1089 = vunpack.c.l.b16 %v1025
        %v1090 = vunpack.c.l.b16 %v1026
        %v1091 = vunpack.c.l.b16 %v1027
        %v1092 = vunpack.c.l.b16 %v1028
        %v1093 = vunpack.c.l.b16 %v1029
        %v1094 = vunpack.c.l.b16 %v1030
        %v1095 = vunpack.c.l.b16 %v1031
        %v1096 = vunpack.c.l.b16 %v1032
        %v1097 = vunpack.c.l.b16 %v1033
        %v1098 = vunpack.c.l.b16 %v1034
        %v1099 = vunpack.c.l.b16 %v1035
        %v1100 = vunpack.c.l.b16 %v1036
        %v1101 = vpack.c.b16 %v1070, %v1069
        %v1102 = vpack.c.b16 %v1072, %v1071
        %v1103 = vpack.c.b16 %v1074, %v1073
        %v1104 = vpack.c.b16 %v1076, %v1075
        %v1105 = vpack.c.b16 %v1078, %v1077
        %v1106 = vpack.c.b16 %v1080, %v1079
        %v1107 = vpack.c.b16 %v1082, %v1081
        %v1108 = vpack.c.b16 %v1084, %v1083
        %v1109 = vpack.c.b16 %v1086, %v1085
        %v1110 = vpack.c.b16 %v1088, %v1087
        %v1111 = vpack.c.b16 %v1090, %v1089
        %v1112 = vpack.c.b16 %v1092, %v1091
        %v1113 = vpack.c.b16 %v1094, %v1093
        %v1114 = vpack.c.b16 %v1096, %v1095
        %v1115 = vpack.c.b16 %v1098, %v1097
        %v1116 = vpack.c.b16 %v1100, %v1099
        %1133 = vmatprep.subr.bf16.mxu0 0
        %1134 = vmatpush1.bf16.msra.mxu0 %v1108
        %1135 = vmatprep.subr.bf16.mxu0 0
        %1136 = vmatpush1.bf16.msra.mxu0 %v1107
        %1137 = vmatprep.subr.bf16.mxu0 0
        %1138 = vmatpush1.bf16.msra.mxu0 %v1106
        %1139 = vmatprep.subr.bf16.mxu0 0
        %1140 = vmatpush1.bf16.msra.mxu0 %v1105
        %1141 = vmatprep.subr.bf16.mxu0 0
        %1142 = vmatpush1.bf16.msra.mxu0 %v1104
        %1143 = vmatprep.subr.bf16.mxu0 0
        %1144 = vmatpush1.bf16.msra.mxu0 %v1103
        %1145 = vmatprep.subr.bf16.mxu0 0
        %1146 = vmatpush1.bf16.msra.mxu0 %v1102
        %1147 = vmatprep.subr.bf16.mxu0 0
        %1148 = vmatpush1.bf16.msra.mxu0 %v1101
        %1149 = vmatprep.subr.bf16.mxu0 0
        %1150 = vmatpush2.bf16.msra.mxu0 %v1116
        %1151 = vmatprep.subr.bf16.mxu0 0
        %1152 = vmatpush2.bf16.msra.mxu0 %v1115
        %1153 = vmatprep.subr.bf16.mxu0 0
        %1154 = vmatpush2.bf16.msra.mxu0 %v1114
        %1155 = vmatprep.subr.bf16.mxu0 0
        %1156 = vmatpush2.bf16.msra.mxu0 %v1113
        %1157 = vmatprep.subr.bf16.mxu0 0
        %1158 = vmatpush2.bf16.msra.mxu0 %v1112
        %1159 = vmatprep.subr.bf16.mxu0 0
        %1160 = vmatpush2.bf16.msra.mxu0 %v1111
        %1161 = vmatprep.subr.bf16.mxu0 0
        %1162 = vmatpush2.bf16.msra.mxu0 %v1110
        %1163 = vmatprep.subr.bf16.mxu0 0
        %1164 = vmatpush2.bf16.msra.mxu0 %v1109
        %1165 = vmatprep.mubr.bf16.mxu0 %v998
        %1166 = vmatmul.mubr.bf16.gmra.mxu0 %v997
        %v1167 = vpop.f32.mrf.mxu0
        %v1168 = vadd.f32 0.0, %v1167
        %v1169 = vpop.f32.mrf.mxu0
        %v1170 = vpop.f32.mrf.mxu0
        %v1171 = vadd.f32 0.0, %v1170
        %v1172 = vpop.f32.mrf.mxu0
        %1173 = vmatprep.mubr.bf16.mxu0 %v1000
        %1174 = vmatmul.mubr.bf16.gmra.mxu0 %v999
        %v1175 = vpop.f32.mrf.mxu0
        %v1176 = vadd.f32 0.0, %v1175
        %v1177 = vpop.f32.mrf.mxu0
        %v1178 = vpop.f32.mrf.mxu0
        %v1179 = vadd.f32 0.0, %v1178
        %v1180 = vpop.f32.mrf.mxu0
        %1181 = vmatprep.mubr.bf16.mxu0 %v1002
        %1182 = vmatmul.mubr.bf16.gmra.mxu0 %v1001
        %v1183 = vpop.f32.mrf.mxu0
        %v1184 = vadd.f32 0.0, %v1183
        %v1185 = vpop.f32.mrf.mxu0
        %v1186 = vpop.f32.mrf.mxu0
        %v1187 = vadd.f32 0.0, %v1186
        %v1188 = vpop.f32.mrf.mxu0
        %1189 = vmatprep.mubr.bf16.mxu0 %v1004
        %1190 = vmatmul.mubr.bf16.gmra.mxu0 %v1003
        %v1191 = vpop.f32.mrf.mxu0
        %v1192 = vadd.f32 0.0, %v1191
        %v1193 = vpop.f32.mrf.mxu0
        %v1194 = vpop.f32.mrf.mxu0
        %v1195 = vadd.f32 0.0, %v1194
        %v1196 = vpop.f32.mrf.mxu0
        %1197 = vdwg.mxu0
        %v1198 = vadd.f32 %v989, %v1168
        %v1199 = vadd.f32 %v990, %v1171
        %v1200 = vadd.f32 %v991, %v1176
        %v1201 = vadd.f32 %v992, %v1179
        %v1202 = vadd.f32 %v993, %v1184
        %v1203 = vadd.f32 %v994, %v1187
        %v1204 = vadd.f32 %v995, %v1192
        %v1205 = vadd.f32 %v996, %v1195
        %1206 = vst [vmem:[#allocation3] sm:$0xff] %v1198
        %1207 = vst [vmem:[#allocation3 + $0x8] sm:$0xff] %v1199
        %1208 = vst [vmem:[#allocation3 + $0x10] sm:$0xff] %v1200
        %1209 = vst [vmem:[#allocation3 + $0x18] sm:$0xff] %v1201
        %1210 = vst [vmem:[#allocation3 + $0x20] sm:$0xff] %v1202
        %1211 = vst [vmem:[#allocation3 + $0x28] sm:$0xff] %v1203
        %1212 = vst [vmem:[#allocation3 + $0x30] sm:$0xff] %v1204
        %1213 = vst [vmem:[#allocation3 + $0x38] sm:$0xff] %v1205
        %p1214 = scmp.eq.s32.totalorder %s23, 1
        // Predicated region
        $region91: #{_lambda_.12} parent=81 // pred_check
          %p1215 = pneg %p1214
        $region92: #{_lambda_.12} parent=81 // pred_check_branch
          %1217 = sbr.rel (%p1215) target = $region94
        $region93: #{_lambda_.12} parent=81 // pred_region
          %v1218 = vld [vmem:[%s432] sm:$0xff]
          %v1219 = vld [vmem:[%s432 + $0x8] sm:$0xff]
          %v1220 = vld [vmem:[%s432 + $0x10] sm:$0xff]
          %v1221 = vld [vmem:[%s432 + $0x18] sm:$0xff]
          %v1222 = vld [vmem:[%s432 + $0x20] sm:$0xff]
          %v1223 = vld [vmem:[%s432 + $0x28] sm:$0xff]
          %v1224 = vld [vmem:[%s432 + $0x30] sm:$0xff]
          %v1225 = vld [vmem:[%s432 + $0x38] sm:$0xff]
          %v1226 = vld [vmem:[#allocation3] sm:$0xff]
          %v1227 = vld [vmem:[#allocation3 + $0x8] sm:$0xff]
          %v1228 = vld [vmem:[#allocation3 + $0x10] sm:$0xff]
          %v1229 = vld [vmem:[#allocation3 + $0x18] sm:$0xff]
          %v1230 = vld [vmem:[#allocation3 + $0x20] sm:$0xff]
          %v1231 = vld [vmem:[#allocation3 + $0x28] sm:$0xff]
          %v1232 = vld [vmem:[#allocation3 + $0x30] sm:$0xff]
          %v1233 = vld [vmem:[#allocation3 + $0x38] sm:$0xff]
          %v1234 = vadd.f32 %v1218, %v1226
          %v1235 = vadd.f32 %v1219, %v1227
          %v1236 = vadd.f32 %v1220, %v1228
          %v1237 = vadd.f32 %v1221, %v1229
          %v1238 = vadd.f32 %v1222, %v1230
          %v1239 = vadd.f32 %v1223, %v1231
          %v1240 = vadd.f32 %v1224, %v1232
          %v1241 = vadd.f32 %v1225, %v1233
          %v1242 = vld [vmem:[%s6] sm:$0x1]
          %v1244 = vlaneseq
          %v1245 = vshrl.u32 %v1244, 7
          %v1246 = vsub.s32 0, %v1245
          %v1247 = vrot.slane %v1242, %v1246
          %v1249 = vadd.f32 %v1234, %v1247
          %v1250 = vadd.f32 %v1235, %v1247
          %v1251 = vadd.f32 %v1236, %v1247
          %v1252 = vadd.f32 %v1237, %v1247
          %v1253 = vadd.f32 %v1238, %v1247
          %v1254 = vadd.f32 %v1239, %v1247
          %v1255 = vadd.f32 %v1240, %v1247
          %v1256 = vadd.f32 %v1241, %v1247
          %1257 = vst [vmem:[%s450] sm:$0xff] %v1249
          %1258 = vst [vmem:[%s450 + $0x8] sm:$0xff] %v1250
          %1259 = vst [vmem:[%s450 + $0x10] sm:$0xff] %v1251
          %1260 = vst [vmem:[%s450 + $0x18] sm:$0xff] %v1252
          %1261 = vst [vmem:[%s450 + $0x20] sm:$0xff] %v1253
          %1262 = vst [vmem:[%s450 + $0x28] sm:$0xff] %v1254
          %1263 = vst [vmem:[%s450 + $0x30] sm:$0xff] %v1255
          %1264 = vst [vmem:[%s450 + $0x38] sm:$0xff] %v1256
        $region94: #{_lambda_.12} parent=81 // pred_fallthru
          _
        %s1265 = smul.u32 8, %s22
        %p1266 = scmp.lt.s32.totalorder %s1265, 15
        %s1267 = scalar_select %p1266, %s1265, 15
        %s1268 = smul.addr %s1267, 8
        %s1269 = scalar_lea.vmem %s7, %s1268
        // Predicated region
        $region95: #{_lambda_.12} parent=81 // pred_check
          %p1270 = pneg %p215
        $region96: #{_lambda_.12} parent=81 // pred_check_branch
          %1272 = sbr.rel (%p1270) target = $region98
        $region97: #{_lambda_.12} parent=81 // pred_region
          %s1273 = smul.u32 8, %s22
        $region98: #{_lambda_.12} parent=81 // pred_fallthru
          _
      $region82: #{_lambda_.12} parent=5 // pred_fallthru
        _
      %p1274 = scmp.le.s32.totalorder 2, %s13
      // Predicated region
      $region99: #{_lambda_.12} parent=5 // pred_check
        %p1275 = pneg %p1274
      $region100: #{_lambda_.12} parent=5 // pred_check_branch
        %1277 = sbr.rel (%p1275) target = $region102
      $region101: #{_lambda_.12} parent=5 // pred_region
        %s1278 = ssub.s32 %s13, 2
        // Predicated region
        $region103: #{_lambda_.12} parent=101 // pred_check
          %p1279 = pneg %p221
        $region104: #{_lambda_.12} parent=101 // pred_check_branch
          %1281 = sbr.rel (%p1279) target = $region106
        $region105: #{_lambda_.12} parent=101 // pred_region
          %s1282 = smul.u32 8, %s24
          %p1283 = scmp.lt.s32.totalorder %s1282, 15
          %s1284 = scalar_select %p1283, %s1282, 15
          %s1285 = smul.addr %s1284, 8
          %s1286 = scalar_lea.vmem %s7, %s1285
        $region106: #{_lambda_.12} parent=101 // pred_fallthru
          _
      $region102: #{_lambda_.12} parent=5 // pred_fallthru
        _
    $region6: #{_lambda_.12} parent=1 // loop_footer
      %s17 = sadd.s32 1, %s13
    $region7: #{_lambda_.12} parent=1 // loop_footer_branch
      %12 = sbr.rel target = $region3
    $region8: #{_lambda_.12} parent=1 // loop_exit
      _

</llo_original>
